<compile_context>
chip_gen: v6e
topology: v6e:2x2x1
jax: 0.10.0
libtpu: 0.0.40
codegen_flags: <defaults>
</compile_context>

<pallas_src>
import functools

import jax
import jax.numpy as jnp
from jax import lax
from jax.experimental import pallas as pl
from jax.experimental.pallas import tpu as pltpu

EPS = 1e-5


def _cdiv(a, b):
    return (a + b - 1) // b


# ---------------------------------------------------------------------------
# In-kernel compute helpers (operate on loaded f32 arrays).
# ---------------------------------------------------------------------------

def _first_contraction(x, w1):
    """h = x @ W1bd. Grouped K goes to the MXU; tiny K stays on VPU FMAs."""
    k = w1.shape[0]
    if k <= 8:                                     # ungrouped fallback (rare)
        h = x[:, 0:1] * w1[0:1, :]
        for c in range(1, k):                      # unrolled at trace time
            h = h + x[:, c:c + 1] * w1[c:c + 1, :]
        return h
    return jnp.dot(x, w1, preferred_element_type=jnp.float32)


def _second_contraction(h, a1, c1, w2):
    """y = relu(BN1_folded(h)) @ W2bd (MXU)."""
    h = jnp.maximum(h * a1 + c1, 0.0)
    return jnp.dot(h, w2, preferred_element_type=jnp.float32)


# ---------------------------------------------------------------------------
# Kernel bodies (per-tile). Ragged last tile handled by static closure flags.
# ---------------------------------------------------------------------------

def _make_bn1_stats_kernel(mg, tile_g, ragged):
    def kernel(x_ref, w1_ref, sum_ref, m2_ref):
        x = x_ref[...].astype(jnp.float32)
        if ragged:
            nv = jnp.minimum(tile_g, mg - pl.program_id(0) * tile_g)
            mask = lax.broadcasted_iota(jnp.int32, (tile_g, 1), 0) < nv
            x = jnp.where(mask, x, 0.0)            # invalid rows -> h == 0 exactly
            inv_n = 1.0 / nv.astype(jnp.float32)
        else:
            inv_n = jnp.float32(1.0 / tile_g)
        h = _first_contraction(x, w1_ref[...].astype(jnp.float32))
        s = jnp.sum(h, axis=0, keepdims=True)      # (1, G*H)
        d = h - s * inv_n                          # mean-shifted second moment
        if ragged:
            d = jnp.where(mask, d, 0.0)
        sum_ref[...] = s[None]
        m2_ref[...] = jnp.sum(d * d, axis=0, keepdims=True)[None]
    return kernel


def _make_bn2_stats_kernel(mg, tile_g, ragged):
    def kernel(x_ref, w1_ref, a1_ref, c1_ref, w2_ref, sum_ref, m2_ref):
        x = x_ref[...].astype(jnp.float32)
        if ragged:
            nv = jnp.minimum(tile_g, mg - pl.program_id(0) * tile_g)
            mask = lax.broadcasted_iota(jnp.int32, (tile_g, 1), 0) < nv
            x = jnp.where(mask, x, 0.0)
            inv_n = 1.0 / nv.astype(jnp.float32)
        else:
            inv_n = jnp.float32(1.0 / tile_g)
        h = _first_contraction(x, w1_ref[...].astype(jnp.float32))
        y = _second_contraction(h, a1_ref[...], c1_ref[...], w2_ref[...])
        if ragged:
            y = jnp.where(mask, y, 0.0)            # drop the relu(c1)@W2 rows
        s = jnp.sum(y, axis=0, keepdims=True)      # (1, G*Cout)
        d = y - s * inv_n
        if ragged:
            d = jnp.where(mask, d, 0.0)
        sum_ref[...] = s[None]
        m2_ref[...] = jnp.sum(d * d, axis=0, keepdims=True)[None]
    return kernel


def _output_kernel(x_ref, w1_ref, a1_ref, c1_ref, w2_ref, a2_ref, c2_ref, o_ref):
    x = x_ref[...].astype(jnp.float32)
    h = _first_contraction(x, w1_ref[...].astype(jnp.float32))
    y = _second_contraction(h, a1_ref[...], c1_ref[...], w2_ref[...])
    o_ref[...] = (y * a2_ref[...] + c2_ref[...]).astype(o_ref.dtype)


# ---------------------------------------------------------------------------
# Wrapper-side helpers.
# ---------------------------------------------------------------------------

def _choose_group(m_rows, hidden):
    """Largest G in {32..1} dividing M (prefer >=8 super-rows; cap by hidden)."""
    cap = max(1, min(32, 2048 // max(hidden, 1)))
    for g in (32, 16, 8, 4, 2, 1):
        if g <= cap and m_rows % g == 0 and m_rows // g >= 8:
            return g
    for g in (32, 16, 8, 4, 2, 1):
        if g <= cap and m_rows % g == 0:
            return g
    return 1


def _vmem_estimate(tile_g, g, cin, hidden, cout):
    gcin, gh, gcout = g * cin, g * hidden, g * cout
    return (2 * tile_g * gcin * 4            # x, double-buffered
            + 2 * tile_g * gcout * 4         # output, double-buffered
            + 4 * tile_g * gh * 4            # h + compiler temporaries (generous)
            + 8 * (gcin * gh + gh * gcout + 2 * gh + 2 * gcout)   # weights x2
            + (2 << 20))                     # misc slack


def _choose_tiling(mg, g, cin, hidden, cout, target_rows):
    tg_target = max(8, (target_rows // g) // 8 * 8)
    if mg <= tg_target:
        if mg >= 16 and mg % 16 == 0:
            tile_g = mg // 2                 # two even tiles -> both v7x TCs busy
        else:
            tile_g = mg                      # block dim == full array dim is legal
    else:
        tile_g = tg_target
    budget = 44 << 20                        # keep well under v7x's 64 MiB VMEM
    while tile_g > 8 and _vmem_estimate(tile_g, g, cin, hidden, cout) > budget:
        tile_g = max(8, ((tile_g // 2) // 8) * 8)
    n_tiles = _cdiv(mg, tile_g)
    ragged = (mg % tile_g) != 0
    return tile_g, n_tiles, ragged, _vmem_estimate(tile_g, g, cin, hidden, cout)


def _finish_stats(psum, pm2, counts, g, chan, m_total):
    """Chan-combine per-(tile, group) moments into global (1, chan) mean/var."""
    n_tiles = psum.shape[0]
    sums = psum.reshape(n_tiles, g, chan)
    m2s = pm2.reshape(n_tiles, g, chan)
    cnt = counts.reshape(n_tiles, 1, 1)
    mean = jnp.sum(sums, axis=(0, 1)) / m_total                      # (chan,)
    mean_tg = sums / cnt
    m2 = jnp.sum(m2s, axis=(0, 1)) + jnp.sum(cnt * (mean_tg - mean) ** 2, axis=(0, 1))
    var = m2 / m_total                                               # biased (training BN)
    return mean[None, :], var[None, :]


@functools.partial(jax.jit, static_argnames=("target_rows_per_tile",))
def local_embedding_forward(x, params, *, target_rows_per_tile=32768):
    """x: (B, N, input_dim) -> (B, N, output_dim), training-mode BatchNorm."""
    B, N, Cin = x.shape
    w1, w2 = params["w1"], params["w2"]
    g1, beta1 = params["g1"], params["beta1"]
    H, Cout = w1.shape[1], w2.shape[1]
    M = B * N

    G = _choose_group(M, H)
    Mg = M // G
    GCin, GH, GCout = G * Cin, G * H, G * Cout
    tile_g, n_tiles, ragged, vmem_est = _choose_tiling(
        Mg, G, Cin, H, Cout, target_rows_per_tile)

    # Lane-dense super-row view of x: pure metadata reshape, no HBM copy.
    xg = x.reshape(Mg, GCin)

    # Block-diagonal weights (built once; conv biases b1/b2 cancel under BN).
    eye = jnp.eye(G, dtype=jnp.float32)
    w1bd = (eye[:, None, :, None] *
            w1.astype(jnp.float32)[None, :, None, :]).reshape(GCin, GH)
    w2bd = (eye[:, None, :, None] *
            w2.astype(jnp.float32)[None, :, None, :]).reshape(GH, GCout)

    x_spec = pl.BlockSpec((tile_g, GCin), lambda i: (i, 0))
    rep = lambda shape: pl.BlockSpec(shape, lambda i: (0,) * len(shape))
    part = lambda c: pl.BlockSpec((1, 1, c), lambda i: (i, 0, 0))
    part_shape = lambda c: jax.ShapeDtypeStruct((n_tiles, 1, c), jnp.float32)

    cparams = pltpu.CompilerParams(
        dimension_semantics=("parallel",),
        vmem_limit_bytes=int(min(max(vmem_est, 32 << 20), 48 << 20)),
    )

    counts = jnp.minimum(tile_g, Mg - jnp.arange(n_tiles) * tile_g).astype(jnp.float32)
    m_total = jnp.float32(M)

    # ---- pass 1: BN1 statistics of h = x @ W1 ----
    ps1, pm1 = pl.pallas_call(
        _make_bn1_stats_kernel(Mg, tile_g, ragged),
        out_shape=(part_shape(GH), part_shape(GH)),
        grid=(n_tiles,),
        in_specs=[x_spec, rep((GCin, GH))],
        out_specs=(part(GH), part(GH)),
        compiler_params=cparams,
    )(xg, w1bd)
    mean1, var1 = _finish_stats(ps1, pm1, counts, G, H, m_total)
    a1 = (g1 * lax.rsqrt(var1 + EPS)).astype(jnp.float32)        # (1, H)
    c1 = (beta1 - mean1 * a1).astype(jnp.float32)
    a1g, c1g = jnp.tile(a1, (1, G)), jnp.tile(c1, (1, G))        # (1, G*H)

    # ---- pass 2: BN2 statistics of y = relu(BN1(h)) @ W2 ----
    ps2, pm2 = pl.pallas_call(
        _make_bn2_stats_kernel(Mg, tile_g, ragged),
        out_shape=(part_shape(GCout), part_shape(GCout)),
        grid=(n_tiles,),
        in_specs=[x_spec, rep((GCin, GH)), rep((1, GH)), rep((1, GH)),
                  rep((GH, GCout))],
        out_specs=(part(GCout), part(GCout)),
        compiler_params=cparams,
    )(xg, w1bd, a1g, c1g, w2bd)
    mean2, var2 = _finish_stats(ps2, pm2, counts, G, Cout, m_total)
    a2 = lax.rsqrt(var2 + EPS)                                   # BN2: affine=False
    c2 = -mean2 * a2
    a2g, c2g = jnp.tile(a2, (1, G)), jnp.tile(c2, (1, G))        # (1, G*Cout)

    # ---- pass 3: recompute y per tile, write normalized lane-dense output ----
    mg_pad = n_tiles * tile_g          # pad only the small output buffer, not x
    out_g = pl.pallas_call(
        _output_kernel,
        out_shape=jax.ShapeDtypeStruct((mg_pad, GCout), jnp.float32),
        grid=(n_tiles,),
        in_specs=[x_spec, rep((GCin, GH)), rep((1, GH)), rep((1, GH)),
                  rep((GH, GCout)), rep((1, GCout)), rep((1, GCout))],
        out_specs=pl.BlockSpec((tile_g, GCout), lambda i: (i, 0)),
        compiler_params=cparams,
    )(xg, w1bd, a1g, c1g, w2bd, a2g, c2g)
    if mg_pad != Mg:
        out_g = out_g[:Mg]
    return out_g.reshape(B, N, Cout)   # bit-compatible with the (M, Cout) slab


# ------------------------- params & pure-JAX reference ----------------------

def init_params(key, input_dim, hidden_dim, output_dim):
    """Deterministic synthetic parameters (shapes match the PyTorch module)."""
    k1, k2, k3, k4, k5, k6 = jax.random.split(key, 6)
    w1 = jax.random.normal(k1, (input_dim, hidden_dim), jnp.float32) * 0.1
    b1 = jax.random.normal(k2, (1, hidden_dim), jnp.float32) * 0.1
    g1 = 1.0 + 0.1 * jax.random.normal(k3, (1, hidden_dim), jnp.float32)
    beta1 = 0.1 * jax.random.normal(k4, (1, hidden_dim), jnp.float32)
    w2 = jax.random.normal(k5, (hidden_dim, output_dim), jnp.float32) * 0.1
    b2 = jax.random.normal(k6, (1, output_dim), jnp.float32) * 0.1
    return dict(w1=w1, b1=b1, g1=g1, beta1=beta1, w2=w2, b2=b2)


def reference_forward(x, params):
    """Pure-JAX mirror of the PyTorch forward (WITH conv biases; BN cancels them)."""
    B, N, _ = x.shape
    x2d = x.reshape(B * N, -1)
    h = x2d @ params["w1"] + params["b1"]
    m1 = h.mean(0, keepdims=True)
    v1 = ((h - m1) ** 2).mean(0, keepdims=True)
    h = (h - m1) / jnp.sqrt(v1 + EPS) * params["g1"] + params["beta1"]
    h = jnp.maximum(h, 0.0)
    y = h @ params["w2"] + params["b2"]
    m2 = y.mean(0, keepdims=True)
    v2 = ((y - m2) ** 2).mean(0, keepdims=True)
    y = (y - m2) / jnp.sqrt(v2 + EPS)
    return y.reshape(B, N, -1)


if __name__ == "__main__":
    input_dim, hidden_dim, output_dim = 4, 32, 8
    key = jax.random.PRNGKey(0)
    kx, kp, kx2, kx3 = jax.random.split(key, 4)
    params = init_params(kp, input_dim, hidden_dim, output_dim)

    def check(xin, **kw):
        out = jax.block_until_ready(local_embedding_forward(xin, params, **kw))
        ref = reference_forward(xin, params)
        assert out.shape == ref.shape
        assert jnp.allclose(out, ref, atol=1e-3, rtol=1e-3), (
            f"mismatch vs reference: max abs err {jnp.max(jnp.abs(out - ref))}")
        return out

    # Main case: exercises the G=32 lane-dense MXU path (single clean tile).
    x = jax.random.normal(kx, (2, 128, input_dim), jnp.float32)
    check(x)
    # Multi-tile + ragged final tile: in-kernel masking + Chan stats combine.
    check(jax.random.normal(kx2, (3, 80, input_dim), jnp.float32),
          target_rows_per_tile=64)
    # Tiny shape from the original example (G=4 grouping path).
    check(jax.random.normal(kx3, (2, 16, input_dim), jnp.float32))

    print("KERNEL_OK")
</pallas_src>

<mosaic_0001>
module attributes {stable_mosaic.version = 11 : i64} {
  func.func @kernel(%arg0: i32, %arg1: memref<8x128xf32, #tpu.memory_space<vmem>>, %arg2: memref<128x1024xf32, #tpu.memory_space<vmem>>, %arg3: memref<1x1x1024xf32, #tpu.memory_space<vmem>>, %arg4: memref<1x1x1024xf32, #tpu.memory_space<vmem>>) attributes {dimension_semantics = [#tpu.dimension_semantics<parallel>], iteration_bounds = array<i64: 1>, scalar_prefetch = 0 : i64, scratch_operands = 0 : i64, tpu.core_type = #tpu.core_type<tc>, window_params = [{transform_indices = @transform_0, window_bounds = array<i64: 8, 128>}, {pipeline_mode = #tpu.pipeline_mode<synchronous>, transform_indices = @transform_1, window_bounds = array<i64: 128, 1024>}, {transform_indices = @transform_2, window_bounds = array<i64: 1, 1, 1024>}, {transform_indices = @transform_3, window_bounds = array<i64: 1, 1, 1024>}]} {
    %c0 = arith.constant 0 : index
    %c0_0 = arith.constant 0 : index
    %0 = vector.load %arg1[%c0, %c0_0] : memref<8x128xf32, #tpu.memory_space<vmem>>, vector<8x128xf32>
    %c0_1 = arith.constant 0 : index
    %c0_2 = arith.constant 0 : index
    %1 = vector.load %arg2[%c0_1, %c0_2] : memref<128x1024xf32, #tpu.memory_space<vmem>>, vector<128x1024xf32>
    %cst = arith.constant dense<0.000000e+00> : vector<8x1024xf32>
    %2 = tpu.matmul %0, %1, %cst {dimension_numbers = #tpu.dot_dimension_numbers<[1], [0], [0], [1], [0, 0, 1, 1], [], []>} : vector<8x128xf32>, vector<128x1024xf32>, vector<8x1024xf32> -> vector<8x1024xf32>
    %cst_3 = arith.constant dense<0.000000e+00> : vector<1024xf32>
    %3 = vector.multi_reduction <add>, %2, %cst_3 [0] : vector<8x1024xf32> to vector<1024xf32>
    %4 = vector.shape_cast %3 : vector<1024xf32> to vector<1x1024xf32>
    %cst_4 = arith.constant 1.250000e-01 : f32
    %5 = vector.broadcast %cst_4 : f32 to vector<1x1024xf32>
    %6 = arith.mulf %4, %5 : vector<1x1024xf32>
    %7 = vector.broadcast %6 : vector<1x1024xf32> to vector<8x1024xf32>
    %8 = arith.subf %2, %7 : vector<8x1024xf32>
    %9 = vector.shape_cast %4 : vector<1x1024xf32> to vector<1x1x1024xf32>
    %c0_5 = arith.constant 0 : index
    %c0_6 = arith.constant 0 : index
    %c0_7 = arith.constant 0 : index
    %10 = vector.load %arg3[%c0_5, %c0_6, %c0_7] : memref<1x1x1024xf32, #tpu.memory_space<vmem>>, vector<1x1x1024xf32>
    tpu.vector_store %arg3[%c0_5, %c0_6, %c0_7], %9 {strides = array<i32>} : memref<1x1x1024xf32, #tpu.memory_space<vmem>>, vector<1x1x1024xf32>,
    %11 = arith.mulf %8, %8 : vector<8x1024xf32>
    %cst_8 = arith.constant dense<0.000000e+00> : vector<1024xf32>
    %12 = vector.multi_reduction <add>, %11, %cst_8 [0] : vector<8x1024xf32> to vector<1024xf32>
    %13 = vector.shape_cast %12 : vector<1024xf32> to vector<1x1024xf32>
    %14 = vector.shape_cast %13 : vector<1x1024xf32> to vector<1x1x1024xf32>
    %c0_9 = arith.constant 0 : index
    %c0_10 = arith.constant 0 : index
    %c0_11 = arith.constant 0 : index
    %15 = vector.load %arg4[%c0_9, %c0_10, %c0_11] : memref<1x1x1024xf32, #tpu.memory_space<vmem>>, vector<1x1x1024xf32>
    tpu.vector_store %arg4[%c0_9, %c0_10, %c0_11], %14 {strides = array<i32>} : memref<1x1x1024xf32, #tpu.memory_space<vmem>>, vector<1x1x1024xf32>,
    return
  }
  func.func @transform_0(%arg0: i32) -> (i32, i32) {
    %c0_i32 = arith.constant 0 : i32
    %c0_i32_0 = arith.constant 0 : i32
    return %arg0, %c0_i32 : i32, i32
  }
  func.func @transform_1(%arg0: i32) -> (i32, i32) {
    %c0_i32 = arith.constant 0 : i32
    %c0_i32_0 = arith.constant 0 : i32
    %c0_i32_1 = arith.constant 0 : i32
    return %c0_i32, %c0_i32_0 : i32, i32
  }
  func.func @transform_2(%arg0: i32) -> (i32, i32, i32) {
    %c0_i32 = arith.constant 0 : i32
    %c0_i32_0 = arith.constant 0 : i32
    %c0_i32_1 = arith.constant 0 : i32
    return %arg0, %c0_i32, %c0_i32_0 : i32, i32, i32
  }
  func.func @transform_3(%arg0: i32) -> (i32, i32, i32) {
    %c0_i32 = arith.constant 0 : i32
    %c0_i32_0 = arith.constant 0 : i32
    %c0_i32_1 = arith.constant 0 : i32
    return %arg0, %c0_i32, %c0_i32_0 : i32, i32, i32
  }
}

module attributes {stable_mosaic.version = 11 : i64} {
  func.func @kernel(%arg0: i32, %arg1: memref<8x128xf32, #tpu.memory_space<vmem>>, %arg2: memref<128x1024xf32, #tpu.memory_space<vmem>>, %arg3: memref<1x1024xf32, #tpu.memory_space<vmem>>, %arg4: memref<1x1024xf32, #tpu.memory_space<vmem>>, %arg5: memref<1024x256xf32, #tpu.memory_space<vmem>>, %arg6: memref<1x1x256xf32, #tpu.memory_space<vmem>>, %arg7: memref<1x1x256xf32, #tpu.memory_space<vmem>>) attributes {dimension_semantics = [#tpu.dimension_semantics<parallel>], iteration_bounds = array<i64: 1>, scalar_prefetch = 0 : i64, scratch_operands = 0 : i64, tpu.core_type = #tpu.core_type<tc>, window_params = [{transform_indices = @transform_0, window_bounds = array<i64: 8, 128>}, {pipeline_mode = #tpu.pipeline_mode<synchronous>, transform_indices = @transform_1, window_bounds = array<i64: 128, 1024>}, {pipeline_mode = #tpu.pipeline_mode<synchronous>, transform_indices = @transform_2, window_bounds = array<i64: 1, 1024>}, {pipeline_mode = #tpu.pipeline_mode<synchronous>, transform_indices = @transform_3, window_bounds = array<i64: 1, 1024>}, {pipeline_mode = #tpu.pipeline_mode<synchronous>, transform_indices = @transform_4, window_bounds = array<i64: 1024, 256>}, {transform_indices = @transform_5, window_bounds = array<i64: 1, 1, 256>}, {transform_indices = @transform_6, window_bounds = array<i64: 1, 1, 256>}]} {
    %c0 = arith.constant 0 : index
    %c0_0 = arith.constant 0 : index
    %0 = vector.load %arg1[%c0, %c0_0] : memref<8x128xf32, #tpu.memory_space<vmem>>, vector<8x128xf32>
    %c0_1 = arith.constant 0 : index
    %c0_2 = arith.constant 0 : index
    %1 = vector.load %arg2[%c0_1, %c0_2] : memref<128x1024xf32, #tpu.memory_space<vmem>>, vector<128x1024xf32>
    %cst = arith.constant dense<0.000000e+00> : vector<8x1024xf32>
    %2 = tpu.matmul %0, %1, %cst {dimension_numbers = #tpu.dot_dimension_numbers<[1], [0], [0], [1], [0, 0, 1, 1], [], []>} : vector<8x128xf32>, vector<128x1024xf32>, vector<8x1024xf32> -> vector<8x1024xf32>
    %c0_3 = arith.constant 0 : index
    %c0_4 = arith.constant 0 : index
    %3 = vector.load %arg3[%c0_3, %c0_4] : memref<1x1024xf32, #tpu.memory_space<vmem>>, vector<1x1024xf32>
    %c0_5 = arith.constant 0 : index
    %c0_6 = arith.constant 0 : index
    %4 = vector.load %arg4[%c0_5, %c0_6] : memref<1x1024xf32, #tpu.memory_space<vmem>>, vector<1x1024xf32>
    %c0_7 = arith.constant 0 : index
    %c0_8 = arith.constant 0 : index
    %5 = vector.load %arg5[%c0_7, %c0_8] : memref<1024x256xf32, #tpu.memory_space<vmem>>, vector<1024x256xf32>
    %6 = vector.broadcast %3 : vector<1x1024xf32> to vector<8x1024xf32>
    %7 = arith.mulf %2, %6 : vector<8x1024xf32>
    %8 = vector.broadcast %4 : vector<1x1024xf32> to vector<8x1024xf32>
    %9 = arith.addf %7, %8 : vector<8x1024xf32>
    %cst_9 = arith.constant 0.000000e+00 : f32
    %10 = vector.broadcast %cst_9 : f32 to vector<8x1024xf32>
    %11 = arith.maximumf %9, %10 : vector<8x1024xf32>
    %cst_10 = arith.constant dense<0.000000e+00> : vector<8x256xf32>
    %12 = tpu.matmul %11, %5, %cst_10 {dimension_numbers = #tpu.dot_dimension_numbers<[1], [0], [0], [1], [0, 0, 1, 1], [], []>} : vector<8x1024xf32>, vector<1024x256xf32>, vector<8x256xf32> -> vector<8x256xf32>
    %cst_11 = arith.constant dense<0.000000e+00> : vector<256xf32>
    %13 = vector.multi_reduction <add>, %12, %cst_11 [0] : vector<8x256xf32> to vector<256xf32>
    %14 = vector.shape_cast %13 : vector<256xf32> to vector<1x256xf32>
    %cst_12 = arith.constant 1.250000e-01 : f32
    %15 = vector.broadcast %cst_12 : f32 to vector<1x256xf32>
    %16 = arith.mulf %14, %15 : vector<1x256xf32>
    %17 = vector.broadcast %16 : vector<1x256xf32> to vector<8x256xf32>
    %18 = arith.subf %12, %17 : vector<8x256xf32>
    %19 = vector.shape_cast %14 : vector<1x256xf32> to vector<1x1x256xf32>
    %c0_13 = arith.constant 0 : index
    %c0_14 = arith.constant 0 : index
    %c0_15 = arith.constant 0 : index
    %20 = vector.load %arg6[%c0_13, %c0_14, %c0_15] : memref<1x1x256xf32, #tpu.memory_space<vmem>>, vector<1x1x256xf32>
    tpu.vector_store %arg6[%c0_13, %c0_14, %c0_15], %19 {strides = array<i32>} : memref<1x1x256xf32, #tpu.memory_space<vmem>>, vector<1x1x256xf32>,
    %21 = arith.mulf %18, %18 : vector<8x256xf32>
    %cst_16 = arith.constant dense<0.000000e+00> : vector<256xf32>
    %22 = vector.multi_reduction <add>, %21, %cst_16 [0] : vector<8x256xf32> to vector<256xf32>
    %23 = vector.shape_cast %22 : vector<256xf32> to vector<1x256xf32>
    %24 = vector.shape_cast %23 : vector<1x256xf32> to vector<1x1x256xf32>
    %c0_17 = arith.constant 0 : index
    %c0_18 = arith.constant 0 : index
    %c0_19 = arith.constant 0 : index
    %25 = vector.load %arg7[%c0_17, %c0_18, %c0_19] : memref<1x1x256xf32, #tpu.memory_space<vmem>>, vector<1x1x256xf32>
    tpu.vector_store %arg7[%c0_17, %c0_18, %c0_19], %24 {strides = array<i32>} : memref<1x1x256xf32, #tpu.memory_space<vmem>>, vector<1x1x256xf32>,
    return
  }
  func.func @transform_0(%arg0: i32) -> (i32, i32) {
    %c0_i32 = arith.constant 0 : i32
    %c0_i32_0 = arith.constant 0 : i32
    return %arg0, %c0_i32 : i32, i32
  }
  func.func @transform_1(%arg0: i32) -> (i32, i32) {
    %c0_i32 = arith.constant 0 : i32
    %c0_i32_0 = arith.constant 0 : i32
    %c0_i32_1 = arith.constant 0 : i32
    return %c0_i32, %c0_i32_0 : i32, i32
  }
  func.func @transform_2(%arg0: i32) -> (i32, i32) {
    %c0_i32 = arith.constant 0 : i32
    %c0_i32_0 = arith.constant 0 : i32
    %c0_i32_1 = arith.constant 0 : i32
    return %c0_i32, %c0_i32_0 : i32, i32
  }
  func.func @transform_3(%arg0: i32) -> (i32, i32) {
    %c0_i32 = arith.constant 0 : i32
    %c0_i32_0 = arith.constant 0 : i32
    %c0_i32_1 = arith.constant 0 : i32
    return %c0_i32, %c0_i32_0 : i32, i32
  }
  func.func @transform_4(%arg0: i32) -> (i32, i32) {
    %c0_i32 = arith.constant 0 : i32
    %c0_i32_0 = arith.constant 0 : i32
    %c0_i32_1 = arith.constant 0 : i32
    return %c0_i32, %c0_i32_0 : i32, i32
  }
  func.func @transform_5(%arg0: i32) -> (i32, i32, i32) {
    %c0_i32 = arith.constant 0 : i32
    %c0_i32_0 = arith.constant 0 : i32
    %c0_i32_1 = arith.constant 0 : i32
    return %arg0, %c0_i32, %c0_i32_0 : i32, i32, i32
  }
  func.func @transform_6(%arg0: i32) -> (i32, i32, i32) {
    %c0_i32 = arith.constant 0 : i32
    %c0_i32_0 = arith.constant 0 : i32
    %c0_i32_1 = arith.constant 0 : i32
    return %arg0, %c0_i32, %c0_i32_0 : i32, i32, i32
  }
}

module attributes {stable_mosaic.version = 11 : i64} {
  func.func @_output_kernel(%arg0: i32, %arg1: memref<8x128xf32, #tpu.memory_space<vmem>>, %arg2: memref<128x1024xf32, #tpu.memory_space<vmem>>, %arg3: memref<1x1024xf32, #tpu.memory_space<vmem>>, %arg4: memref<1x1024xf32, #tpu.memory_space<vmem>>, %arg5: memref<1024x256xf32, #tpu.memory_space<vmem>>, %arg6: memref<1x256xf32, #tpu.memory_space<vmem>>, %arg7: memref<1x256xf32, #tpu.memory_space<vmem>>, %arg8: memref<8x256xf32, #tpu.memory_space<vmem>>) attributes {dimension_semantics = [#tpu.dimension_semantics<parallel>], iteration_bounds = array<i64: 1>, scalar_prefetch = 0 : i64, scratch_operands = 0 : i64, tpu.core_type = #tpu.core_type<tc>, window_params = [{transform_indices = @transform_0, window_bounds = array<i64: 8, 128>}, {pipeline_mode = #tpu.pipeline_mode<synchronous>, transform_indices = @transform_1, window_bounds = array<i64: 128, 1024>}, {pipeline_mode = #tpu.pipeline_mode<synchronous>, transform_indices = @transform_2, window_bounds = array<i64: 1, 1024>}, {pipeline_mode = #tpu.pipeline_mode<synchronous>, transform_indices = @transform_3, window_bounds = array<i64: 1, 1024>}, {pipeline_mode = #tpu.pipeline_mode<synchronous>, transform_indices = @transform_4, window_bounds = array<i64: 1024, 256>}, {pipeline_mode = #tpu.pipeline_mode<synchronous>, transform_indices = @transform_5, window_bounds = array<i64: 1, 256>}, {pipeline_mode = #tpu.pipeline_mode<synchronous>, transform_indices = @transform_6, window_bounds = array<i64: 1, 256>}, {transform_indices = @transform_7, window_bounds = array<i64: 8, 256>}]} {
    %c0 = arith.constant 0 : index
    %c0_0 = arith.constant 0 : index
    %0 = vector.load %arg1[%c0, %c0_0] : memref<8x128xf32, #tpu.memory_space<vmem>>, vector<8x128xf32>
    %c0_1 = arith.constant 0 : index
    %c0_2 = arith.constant 0 : index
    %1 = vector.load %arg2[%c0_1, %c0_2] : memref<128x1024xf32, #tpu.memory_space<vmem>>, vector<128x1024xf32>
    %cst = arith.constant dense<0.000000e+00> : vector<8x1024xf32>
    %2 = tpu.matmul %0, %1, %cst {dimension_numbers = #tpu.dot_dimension_numbers<[1], [0], [0], [1], [0, 0, 1, 1], [], []>} : vector<8x128xf32>, vector<128x1024xf32>, vector<8x1024xf32> -> vector<8x1024xf32>
    %c0_3 = arith.constant 0 : index
    %c0_4 = arith.constant 0 : index
    %3 = vector.load %arg3[%c0_3, %c0_4] : memref<1x1024xf32, #tpu.memory_space<vmem>>, vector<1x1024xf32>
    %c0_5 = arith.constant 0 : index
    %c0_6 = arith.constant 0 : index
    %4 = vector.load %arg4[%c0_5, %c0_6] : memref<1x1024xf32, #tpu.memory_space<vmem>>, vector<1x1024xf32>
    %c0_7 = arith.constant 0 : index
    %c0_8 = arith.constant 0 : index
    %5 = vector.load %arg5[%c0_7, %c0_8] : memref<1024x256xf32, #tpu.memory_space<vmem>>, vector<1024x256xf32>
    %6 = vector.broadcast %3 : vector<1x1024xf32> to vector<8x1024xf32>
    %7 = arith.mulf %2, %6 : vector<8x1024xf32>
    %8 = vector.broadcast %4 : vector<1x1024xf32> to vector<8x1024xf32>
    %9 = arith.addf %7, %8 : vector<8x1024xf32>
    %cst_9 = arith.constant 0.000000e+00 : f32
    %10 = vector.broadcast %cst_9 : f32 to vector<8x1024xf32>
    %11 = arith.maximumf %9, %10 : vector<8x1024xf32>
    %cst_10 = arith.constant dense<0.000000e+00> : vector<8x256xf32>
    %12 = tpu.matmul %11, %5, %cst_10 {dimension_numbers = #tpu.dot_dimension_numbers<[1], [0], [0], [1], [0, 0, 1, 1], [], []>} : vector<8x1024xf32>, vector<1024x256xf32>, vector<8x256xf32> -> vector<8x256xf32>
    %c0_11 = arith.constant 0 : index
    %c0_12 = arith.constant 0 : index
    %13 = vector.load %arg6[%c0_11, %c0_12] : memref<1x256xf32, #tpu.memory_space<vmem>>, vector<1x256xf32>
    %14 = vector.broadcast %13 : vector<1x256xf32> to vector<8x256xf32>
    %15 = arith.mulf %12, %14 : vector<8x256xf32>
    %c0_13 = arith.constant 0 : index
    %c0_14 = arith.constant 0 : index
    %16 = vector.load %arg7[%c0_13, %c0_14] : memref<1x256xf32, #tpu.memory_space<vmem>>, vector<1x256xf32>
    %17 = vector.broadcast %16 : vector<1x256xf32> to vector<8x256xf32>
    %18 = arith.addf %15, %17 : vector<8x256xf32>
    %c0_15 = arith.constant 0 : index
    %c0_16 = arith.constant 0 : index
    %19 = vector.load %arg8[%c0_15, %c0_16] : memref<8x256xf32, #tpu.memory_space<vmem>>, vector<8x256xf32>
    tpu.vector_store %arg8[%c0_15, %c0_16], %18 {strides = array<i32>} : memref<8x256xf32, #tpu.memory_space<vmem>>, vector<8x256xf32>,
    return
  }
  func.func @transform_0(%arg0: i32) -> (i32, i32) {
    %c0_i32 = arith.constant 0 : i32
    %c0_i32_0 = arith.constant 0 : i32
    return %arg0, %c0_i32 : i32, i32
  }
  func.func @transform_1(%arg0: i32) -> (i32, i32) {
    %c0_i32 = arith.constant 0 : i32
    %c0_i32_0 = arith.constant 0 : i32
    %c0_i32_1 = arith.constant 0 : i32
    return %c0_i32, %c0_i32_0 : i32, i32
  }
  func.func @transform_2(%arg0: i32) -> (i32, i32) {
    %c0_i32 = arith.constant 0 : i32
    %c0_i32_0 = arith.constant 0 : i32
    %c0_i32_1 = arith.constant 0 : i32
    return %c0_i32, %c0_i32_0 : i32, i32
  }
  func.func @transform_3(%arg0: i32) -> (i32, i32) {
    %c0_i32 = arith.constant 0 : i32
    %c0_i32_0 = arith.constant 0 : i32
    %c0_i32_1 = arith.constant 0 : i32
    return %c0_i32, %c0_i32_0 : i32, i32
  }
  func.func @transform_4(%arg0: i32) -> (i32, i32) {
    %c0_i32 = arith.constant 0 : i32
    %c0_i32_0 = arith.constant 0 : i32
    %c0_i32_1 = arith.constant 0 : i32
    return %c0_i32, %c0_i32_0 : i32, i32
  }
  func.func @transform_5(%arg0: i32) -> (i32, i32) {
    %c0_i32 = arith.constant 0 : i32
    %c0_i32_0 = arith.constant 0 : i32
    %c0_i32_1 = arith.constant 0 : i32
    return %c0_i32, %c0_i32_0 : i32, i32
  }
  func.func @transform_6(%arg0: i32) -> (i32, i32) {
    %c0_i32 = arith.constant 0 : i32
    %c0_i32_0 = arith.constant 0 : i32
    %c0_i32_1 = arith.constant 0 : i32
    return %c0_i32, %c0_i32_0 : i32, i32
  }
  func.func @transform_7(%arg0: i32) -> (i32, i32) {
    %c0_i32 = arith.constant 0 : i32
    %c0_i32_0 = arith.constant 0 : i32
    return %arg0, %c0_i32 : i32, i32
  }
}

</mosaic_0001>

<llo_original>
// kernel: local_embedding_forward.3
$region0: #{local_embedding_forward.3}
  #allocation0 [shape = 'u32[]', space=smem, size = 0x4, offset = 0x4, fixed_abs, tag = 'smem constant byte address 0x4 - core index']
  #allocation1 [shape = 'u32[144,128]{1,0:T(1,128)}', space=vmem, size = 0x12000, scoped, tag = 'internal scratch']
  %s0 = inlined_call_operand.vmem [shape: f32[8,128], index: 0, kind: input, shape index: {}]
  %s1 = inlined_call_operand.vmem [shape: f32[128,1024], index: 1, kind: input, shape index: {}]
  %s2 = inlined_call_operand.vmem [shape: f32[1,1,1024], index: 2, kind: output, shape index: {0}]
  %s3 = inlined_call_operand.vmem [shape: f32[1,1,1024], index: 3, kind: output, shape index: {1}]
  %4 = xla_tuple %s2, %s3
  %s5 = sld [smem:[#allocation0]]
  $region26: #{local_embedding_forward.3} parent=0
    _
  %s7 = ssub.s32 1, %s5
  %s8 = scalar_select 0, %s7, %s5
  // Predicated region
  $region2: #{local_embedding_forward.3} parent=0 // pred_check
    _
  $region3: #{local_embedding_forward.3} parent=0 // pred_check_branch
    %10 = sbr.rel (0) target = $region5
  $region4: #{local_embedding_forward.3} parent=0 // pred_region
    _
  $region5: #{local_embedding_forward.3} parent=0 // pred_fallthru
    _
  // Predicated region
  $region6: #{local_embedding_forward.3} parent=0 // pred_check
    _
  $region7: #{local_embedding_forward.3} parent=0 // pred_check_branch
    %12 = sbr.rel (0) target = $region9
  $region8: #{local_embedding_forward.3} parent=0 // pred_region
    _
  $region9: #{local_embedding_forward.3} parent=0 // pred_fallthru
    _
  %v13 = vld [vmem:[%s0] sm:$0xff]
  %v14 = vld [vmem:[%s1] sm:$0xff]
  %v15 = vld [vmem:[%s1 + $0x8] sm:$0xff]
  %v16 = vld [vmem:[%s1 + $0x10] sm:$0xff]
  %v17 = vld [vmem:[%s1 + $0x18] sm:$0xff]
  %v18 = vld [vmem:[%s1 + $0x20] sm:$0xff]
  %v19 = vld [vmem:[%s1 + $0x28] sm:$0xff]
  %v20 = vld [vmem:[%s1 + $0x30] sm:$0xff]
  %v21 = vld [vmem:[%s1 + $0x38] sm:$0xff]
  %v22 = vld [vmem:[%s1 + $0x40] sm:$0xff]
  %v23 = vld [vmem:[%s1 + $0x48] sm:$0xff]
  %v24 = vld [vmem:[%s1 + $0x50] sm:$0xff]
  %v25 = vld [vmem:[%s1 + $0x58] sm:$0xff]
  %v26 = vld [vmem:[%s1 + $0x60] sm:$0xff]
  %v27 = vld [vmem:[%s1 + $0x68] sm:$0xff]
  %v28 = vld [vmem:[%s1 + $0x70] sm:$0xff]
  %v29 = vld [vmem:[%s1 + $0x78] sm:$0xff]
  %v30 = vld [vmem:[%s1 + $0x80] sm:$0xff]
  %v31 = vld [vmem:[%s1 + $0x88] sm:$0xff]
  %v32 = vld [vmem:[%s1 + $0x90] sm:$0xff]
  %v33 = vld [vmem:[%s1 + $0x98] sm:$0xff]
  %v34 = vld [vmem:[%s1 + $0xa0] sm:$0xff]
  %v35 = vld [vmem:[%s1 + $0xa8] sm:$0xff]
  %v36 = vld [vmem:[%s1 + $0xb0] sm:$0xff]
  %v37 = vld [vmem:[%s1 + $0xb8] sm:$0xff]
  %v38 = vld [vmem:[%s1 + $0xc0] sm:$0xff]
  %v39 = vld [vmem:[%s1 + $0xc8] sm:$0xff]
  %v40 = vld [vmem:[%s1 + $0xd0] sm:$0xff]
  %v41 = vld [vmem:[%s1 + $0xd8] sm:$0xff]
  %v42 = vld [vmem:[%s1 + $0xe0] sm:$0xff]
  %v43 = vld [vmem:[%s1 + $0xe8] sm:$0xff]
  %v44 = vld [vmem:[%s1 + $0xf0] sm:$0xff]
  %v45 = vld [vmem:[%s1 + $0xf8] sm:$0xff]
  %v46 = vld [vmem:[%s1 + $0x100] sm:$0xff]
  %v47 = vld [vmem:[%s1 + $0x108] sm:$0xff]
  %v48 = vld [vmem:[%s1 + $0x110] sm:$0xff]
  %v49 = vld [vmem:[%s1 + $0x118] sm:$0xff]
  %v50 = vld [vmem:[%s1 + $0x120] sm:$0xff]
  %v51 = vld [vmem:[%s1 + $0x128] sm:$0xff]
  %v52 = vld [vmem:[%s1 + $0x130] sm:$0xff]
  %v53 = vld [vmem:[%s1 + $0x138] sm:$0xff]
  %v54 = vld [vmem:[%s1 + $0x140] sm:$0xff]
  %v55 = vld [vmem:[%s1 + $0x148] sm:$0xff]
  %v56 = vld [vmem:[%s1 + $0x150] sm:$0xff]
  %v57 = vld [vmem:[%s1 + $0x158] sm:$0xff]
  %v58 = vld [vmem:[%s1 + $0x160] sm:$0xff]
  %v59 = vld [vmem:[%s1 + $0x168] sm:$0xff]
  %v60 = vld [vmem:[%s1 + $0x170] sm:$0xff]
  %v61 = vld [vmem:[%s1 + $0x178] sm:$0xff]
  %v62 = vld [vmem:[%s1 + $0x180] sm:$0xff]
  %v63 = vld [vmem:[%s1 + $0x188] sm:$0xff]
  %v64 = vld [vmem:[%s1 + $0x190] sm:$0xff]
  %v65 = vld [vmem:[%s1 + $0x198] sm:$0xff]
  %v66 = vld [vmem:[%s1 + $0x1a0] sm:$0xff]
  %v67 = vld [vmem:[%s1 + $0x1a8] sm:$0xff]
  %v68 = vld [vmem:[%s1 + $0x1b0] sm:$0xff]
  %v69 = vld [vmem:[%s1 + $0x1b8] sm:$0xff]
  %v70 = vld [vmem:[%s1 + $0x1c0] sm:$0xff]
  %v71 = vld [vmem:[%s1 + $0x1c8] sm:$0xff]
  %v72 = vld [vmem:[%s1 + $0x1d0] sm:$0xff]
  %v73 = vld [vmem:[%s1 + $0x1d8] sm:$0xff]
  %v74 = vld [vmem:[%s1 + $0x1e0] sm:$0xff]
  %v75 = vld [vmem:[%s1 + $0x1e8] sm:$0xff]
  %v76 = vld [vmem:[%s1 + $0x1f0] sm:$0xff]
  %v77 = vld [vmem:[%s1 + $0x1f8] sm:$0xff]
  %v78 = vld [vmem:[%s1 + $0x200] sm:$0xff]
  %v79 = vld [vmem:[%s1 + $0x208] sm:$0xff]
  %v80 = vld [vmem:[%s1 + $0x210] sm:$0xff]
  %v81 = vld [vmem:[%s1 + $0x218] sm:$0xff]
  %v82 = vld [vmem:[%s1 + $0x220] sm:$0xff]
  %v83 = vld [vmem:[%s1 + $0x228] sm:$0xff]
  %v84 = vld [vmem:[%s1 + $0x230] sm:$0xff]
  %v85 = vld [vmem:[%s1 + $0x238] sm:$0xff]
  %v86 = vld [vmem:[%s1 + $0x240] sm:$0xff]
  %v87 = vld [vmem:[%s1 + $0x248] sm:$0xff]
  %v88 = vld [vmem:[%s1 + $0x250] sm:$0xff]
  %v89 = vld [vmem:[%s1 + $0x258] sm:$0xff]
  %v90 = vld [vmem:[%s1 + $0x260] sm:$0xff]
  %v91 = vld [vmem:[%s1 + $0x268] sm:$0xff]
  %v92 = vld [vmem:[%s1 + $0x270] sm:$0xff]
  %v93 = vld [vmem:[%s1 + $0x278] sm:$0xff]
  %v94 = vld [vmem:[%s1 + $0x280] sm:$0xff]
  %v95 = vld [vmem:[%s1 + $0x288] sm:$0xff]
  %v96 = vld [vmem:[%s1 + $0x290] sm:$0xff]
  %v97 = vld [vmem:[%s1 + $0x298] sm:$0xff]
  %v98 = vld [vmem:[%s1 + $0x2a0] sm:$0xff]
  %v99 = vld [vmem:[%s1 + $0x2a8] sm:$0xff]
  %v100 = vld [vmem:[%s1 + $0x2b0] sm:$0xff]
  %v101 = vld [vmem:[%s1 + $0x2b8] sm:$0xff]
  %v102 = vld [vmem:[%s1 + $0x2c0] sm:$0xff]
  %v103 = vld [vmem:[%s1 + $0x2c8] sm:$0xff]
  %v104 = vld [vmem:[%s1 + $0x2d0] sm:$0xff]
  %v105 = vld [vmem:[%s1 + $0x2d8] sm:$0xff]
  %v106 = vld [vmem:[%s1 + $0x2e0] sm:$0xff]
  %v107 = vld [vmem:[%s1 + $0x2e8] sm:$0xff]
  %v108 = vld [vmem:[%s1 + $0x2f0] sm:$0xff]
  %v109 = vld [vmem:[%s1 + $0x2f8] sm:$0xff]
  %v110 = vld [vmem:[%s1 + $0x300] sm:$0xff]
  %v111 = vld [vmem:[%s1 + $0x308] sm:$0xff]
  %v112 = vld [vmem:[%s1 + $0x310] sm:$0xff]
  %v113 = vld [vmem:[%s1 + $0x318] sm:$0xff]
  %v114 = vld [vmem:[%s1 + $0x320] sm:$0xff]
  %v115 = vld [vmem:[%s1 + $0x328] sm:$0xff]
  %v116 = vld [vmem:[%s1 + $0x330] sm:$0xff]
  %v117 = vld [vmem:[%s1 + $0x338] sm:$0xff]
  %v118 = vld [vmem:[%s1 + $0x340] sm:$0xff]
  %v119 = vld [vmem:[%s1 + $0x348] sm:$0xff]
  %v120 = vld [vmem:[%s1 + $0x350] sm:$0xff]
  %v121 = vld [vmem:[%s1 + $0x358] sm:$0xff]
  %v122 = vld [vmem:[%s1 + $0x360] sm:$0xff]
  %v123 = vld [vmem:[%s1 + $0x368] sm:$0xff]
  %v124 = vld [vmem:[%s1 + $0x370] sm:$0xff]
  %v125 = vld [vmem:[%s1 + $0x378] sm:$0xff]
  %v126 = vld [vmem:[%s1 + $0x380] sm:$0xff]
  %v127 = vld [vmem:[%s1 + $0x388] sm:$0xff]
  %v128 = vld [vmem:[%s1 + $0x390] sm:$0xff]
  %v129 = vld [vmem:[%s1 + $0x398] sm:$0xff]
  %v130 = vld [vmem:[%s1 + $0x3a0] sm:$0xff]
  %v131 = vld [vmem:[%s1 + $0x3a8] sm:$0xff]
  %v132 = vld [vmem:[%s1 + $0x3b0] sm:$0xff]
  %v133 = vld [vmem:[%s1 + $0x3b8] sm:$0xff]
  %v134 = vld [vmem:[%s1 + $0x3c0] sm:$0xff]
  %v135 = vld [vmem:[%s1 + $0x3c8] sm:$0xff]
  %v136 = vld [vmem:[%s1 + $0x3d0] sm:$0xff]
  %v137 = vld [vmem:[%s1 + $0x3d8] sm:$0xff]
  %v138 = vld [vmem:[%s1 + $0x3e0] sm:$0xff]
  %v139 = vld [vmem:[%s1 + $0x3e8] sm:$0xff]
  %v140 = vld [vmem:[%s1 + $0x3f0] sm:$0xff]
  %v141 = vld [vmem:[%s1 + $0x3f8] sm:$0xff]
  %142 = vmatprep.subr.mxu0 %v135
  %143 = vmatpush1.msra.mxu0 %v134
  %144 = vmatprep.subr.mxu0 %v127
  %145 = vmatpush1.msra.mxu0 %v126
  %146 = vmatprep.subr.mxu0 %v119
  %147 = vmatpush1.msra.mxu0 %v118
  %148 = vmatprep.subr.mxu0 %v111
  %149 = vmatpush1.msra.mxu0 %v110
  %150 = vmatprep.subr.mxu0 %v103
  %151 = vmatpush1.msra.mxu0 %v102
  %152 = vmatprep.subr.mxu0 %v95
  %153 = vmatpush1.msra.mxu0 %v94
  %154 = vmatprep.subr.mxu0 %v87
  %155 = vmatpush1.msra.mxu0 %v86
  %156 = vmatprep.subr.mxu0 %v79
  %157 = vmatpush1.msra.mxu0 %v78
  %158 = vmatprep.subr.mxu0 %v71
  %159 = vmatpush1.msra.mxu0 %v70
  %160 = vmatprep.subr.mxu0 %v63
  %161 = vmatpush1.msra.mxu0 %v62
  %162 = vmatprep.subr.mxu0 %v55
  %163 = vmatpush1.msra.mxu0 %v54
  %164 = vmatprep.subr.mxu0 %v47
  %165 = vmatpush1.msra.mxu0 %v46
  %166 = vmatprep.subr.mxu0 %v39
  %167 = vmatpush1.msra.mxu0 %v38
  %168 = vmatprep.subr.mxu0 %v31
  %169 = vmatpush1.msra.mxu0 %v30
  %170 = vmatprep.subr.mxu0 %v23
  %171 = vmatpush1.msra.mxu0 %v22
  %172 = vmatprep.subr.mxu0 %v15
  %173 = vmatpush1.msra.mxu0 %v14
  %174 = vmatprep.subr.mxu0 0.0
  %175 = vmatpush2.msra.mxu0 0.0
  %176 = vmatprep.subr.mxu0 0.0
  %177 = vmatpush2.msra.mxu0 0.0
  %178 = vmatprep.subr.mxu0 0.0
  %179 = vmatpush2.msra.mxu0 0.0
  %180 = vmatprep.subr.mxu0 0.0
  %181 = vmatpush2.msra.mxu0 0.0
  %182 = vmatprep.subr.mxu0 0.0
  %183 = vmatpush2.msra.mxu0 0.0
  %184 = vmatprep.subr.mxu0 0.0
  %185 = vmatpush2.msra.mxu0 0.0
  %186 = vmatprep.subr.mxu0 0.0
  %187 = vmatpush2.msra.mxu0 0.0
  %188 = vmatprep.subr.mxu0 0.0
  %189 = vmatpush2.msra.mxu0 0.0
  %190 = vmatprep.subr.mxu0 0.0
  %191 = vmatpush2.msra.mxu0 0.0
  %192 = vmatprep.subr.mxu0 0.0
  %193 = vmatpush2.msra.mxu0 0.0
  %194 = vmatprep.subr.mxu0 0.0
  %195 = vmatpush2.msra.mxu0 0.0
  %196 = vmatprep.subr.mxu0 0.0
  %197 = vmatpush2.msra.mxu0 0.0
  %198 = vmatprep.subr.mxu0 0.0
  %199 = vmatpush2.msra.mxu0 0.0
  %200 = vmatprep.subr.mxu0 0.0
  %201 = vmatpush2.msra.mxu0 0.0
  %202 = vmatprep.subr.mxu0 0.0
  %203 = vmatpush2.msra.mxu0 0.0
  %204 = vmatprep.subr.mxu0 0.0
  %205 = vmatpush2.msra.mxu0 0.0
  %206 = vmatprep.mubr.f32.mxu0 0.0
  %207 = vmatmul.mubr.f32.gmra.mxu0 %v13
  %v208 = vpop.f32.mrf.mxu0
  %v209 = vadd.f32 0.0, %v208
  %v210 = vpop.f32.mrf.mxu0
  %v211 = vadd.f32 0.0, %v210
  %212 = vdwg.mxu0
  %213 = vmatprep.subr.mxu0 %v137
  %214 = vmatpush1.msra.mxu0 %v136
  %215 = vmatprep.subr.mxu0 %v129
  %216 = vmatpush1.msra.mxu0 %v128
  %217 = vmatprep.subr.mxu0 %v121
  %218 = vmatpush1.msra.mxu0 %v120
  %219 = vmatprep.subr.mxu0 %v113
  %220 = vmatpush1.msra.mxu0 %v112
  %221 = vmatprep.subr.mxu0 %v105
  %222 = vmatpush1.msra.mxu0 %v104
  %223 = vmatprep.subr.mxu0 %v97
  %224 = vmatpush1.msra.mxu0 %v96
  %225 = vmatprep.subr.mxu0 %v89
  %226 = vmatpush1.msra.mxu0 %v88
  %227 = vmatprep.subr.mxu0 %v81
  %228 = vmatpush1.msra.mxu0 %v80
  %229 = vmatprep.subr.mxu0 %v73
  %230 = vmatpush1.msra.mxu0 %v72
  %231 = vmatprep.subr.mxu0 %v65
  %232 = vmatpush1.msra.mxu0 %v64
  %233 = vmatprep.subr.mxu0 %v57
  %234 = vmatpush1.msra.mxu0 %v56
  %235 = vmatprep.subr.mxu0 %v49
  %236 = vmatpush1.msra.mxu0 %v48
  %237 = vmatprep.subr.mxu0 %v41
  %238 = vmatpush1.msra.mxu0 %v40
  %239 = vmatprep.subr.mxu0 %v33
  %240 = vmatpush1.msra.mxu0 %v32
  %241 = vmatprep.subr.mxu0 %v25
  %242 = vmatpush1.msra.mxu0 %v24
  %243 = vmatprep.subr.mxu0 %v17
  %244 = vmatpush1.msra.mxu0 %v16
  %245 = vmatprep.subr.mxu0 0.0
  %246 = vmatpush2.msra.mxu0 0.0
  %247 = vmatprep.subr.mxu0 0.0
  %248 = vmatpush2.msra.mxu0 0.0
  %249 = vmatprep.subr.mxu0 0.0
  %250 = vmatpush2.msra.mxu0 0.0
  %251 = vmatprep.subr.mxu0 0.0
  %252 = vmatpush2.msra.mxu0 0.0
  %253 = vmatprep.subr.mxu0 0.0
  %254 = vmatpush2.msra.mxu0 0.0
  %255 = vmatprep.subr.mxu0 0.0
  %256 = vmatpush2.msra.mxu0 0.0
  %257 = vmatprep.subr.mxu0 0.0
  %258 = vmatpush2.msra.mxu0 0.0
  %259 = vmatprep.subr.mxu0 0.0
  %260 = vmatpush2.msra.mxu0 0.0
  %261 = vmatprep.subr.mxu0 0.0
  %262 = vmatpush2.msra.mxu0 0.0
  %263 = vmatprep.subr.mxu0 0.0
  %264 = vmatpush2.msra.mxu0 0.0
  %265 = vmatprep.subr.mxu0 0.0
  %266 = vmatpush2.msra.mxu0 0.0
  %267 = vmatprep.subr.mxu0 0.0
  %268 = vmatpush2.msra.mxu0 0.0
  %269 = vmatprep.subr.mxu0 0.0
  %270 = vmatpush2.msra.mxu0 0.0
  %271 = vmatprep.subr.mxu0 0.0
  %272 = vmatpush2.msra.mxu0 0.0
  %273 = vmatprep.subr.mxu0 0.0
  %274 = vmatpush2.msra.mxu0 0.0
  %275 = vmatprep.subr.mxu0 0.0
  %276 = vmatpush2.msra.mxu0 0.0
  %277 = vmatprep.mubr.f32.mxu0 0.0
  %278 = vmatmul.mubr.f32.gmra.mxu0 %v13
  %v279 = vpop.f32.mrf.mxu0
  %v280 = vadd.f32 0.0, %v279
  %v281 = vpop.f32.mrf.mxu0
  %v282 = vadd.f32 0.0, %v281
  %283 = vdwg.mxu0
  %284 = vmatprep.subr.mxu0 %v139
  %285 = vmatpush1.msra.mxu0 %v138
  %286 = vmatprep.subr.mxu0 %v131
  %287 = vmatpush1.msra.mxu0 %v130
  %288 = vmatprep.subr.mxu0 %v123
  %289 = vmatpush1.msra.mxu0 %v122
  %290 = vmatprep.subr.mxu0 %v115
  %291 = vmatpush1.msra.mxu0 %v114
  %292 = vmatprep.subr.mxu0 %v107
  %293 = vmatpush1.msra.mxu0 %v106
  %294 = vmatprep.subr.mxu0 %v99
  %295 = vmatpush1.msra.mxu0 %v98
  %296 = vmatprep.subr.mxu0 %v91
  %297 = vmatpush1.msra.mxu0 %v90
  %298 = vmatprep.subr.mxu0 %v83
  %299 = vmatpush1.msra.mxu0 %v82
  %300 = vmatprep.subr.mxu0 %v75
  %301 = vmatpush1.msra.mxu0 %v74
  %302 = vmatprep.subr.mxu0 %v67
  %303 = vmatpush1.msra.mxu0 %v66
  %304 = vmatprep.subr.mxu0 %v59
  %305 = vmatpush1.msra.mxu0 %v58
  %306 = vmatprep.subr.mxu0 %v51
  %307 = vmatpush1.msra.mxu0 %v50
  %308 = vmatprep.subr.mxu0 %v43
  %309 = vmatpush1.msra.mxu0 %v42
  %310 = vmatprep.subr.mxu0 %v35
  %311 = vmatpush1.msra.mxu0 %v34
  %312 = vmatprep.subr.mxu0 %v27
  %313 = vmatpush1.msra.mxu0 %v26
  %314 = vmatprep.subr.mxu0 %v19
  %315 = vmatpush1.msra.mxu0 %v18
  %316 = vmatprep.subr.mxu0 0.0
  %317 = vmatpush2.msra.mxu0 0.0
  %318 = vmatprep.subr.mxu0 0.0
  %319 = vmatpush2.msra.mxu0 0.0
  %320 = vmatprep.subr.mxu0 0.0
  %321 = vmatpush2.msra.mxu0 0.0
  %322 = vmatprep.subr.mxu0 0.0
  %323 = vmatpush2.msra.mxu0 0.0
  %324 = vmatprep.subr.mxu0 0.0
  %325 = vmatpush2.msra.mxu0 0.0
  %326 = vmatprep.subr.mxu0 0.0
  %327 = vmatpush2.msra.mxu0 0.0
  %328 = vmatprep.subr.mxu0 0.0
  %329 = vmatpush2.msra.mxu0 0.0
  %330 = vmatprep.subr.mxu0 0.0
  %331 = vmatpush2.msra.mxu0 0.0
  %332 = vmatprep.subr.mxu0 0.0
  %333 = vmatpush2.msra.mxu0 0.0
  %334 = vmatprep.subr.mxu0 0.0
  %335 = vmatpush2.msra.mxu0 0.0
  %336 = vmatprep.subr.mxu0 0.0
  %337 = vmatpush2.msra.mxu0 0.0
  %338 = vmatprep.subr.mxu0 0.0
  %339 = vmatpush2.msra.mxu0 0.0
  %340 = vmatprep.subr.mxu0 0.0
  %341 = vmatpush2.msra.mxu0 0.0
  %342 = vmatprep.subr.mxu0 0.0
  %343 = vmatpush2.msra.mxu0 0.0
  %344 = vmatprep.subr.mxu0 0.0
  %345 = vmatpush2.msra.mxu0 0.0
  %346 = vmatprep.subr.mxu0 0.0
  %347 = vmatpush2.msra.mxu0 0.0
  %348 = vmatprep.mubr.f32.mxu0 0.0
  %349 = vmatmul.mubr.f32.gmra.mxu0 %v13
  %v350 = vpop.f32.mrf.mxu0
  %v351 = vadd.f32 0.0, %v350
  %v352 = vpop.f32.mrf.mxu0
  %v353 = vadd.f32 0.0, %v352
  %354 = vdwg.mxu0
  %355 = vmatprep.subr.mxu0 %v141
  %356 = vmatpush1.msra.mxu0 %v140
  %357 = vmatprep.subr.mxu0 %v133
  %358 = vmatpush1.msra.mxu0 %v132
  %359 = vmatprep.subr.mxu0 %v125
  %360 = vmatpush1.msra.mxu0 %v124
  %361 = vmatprep.subr.mxu0 %v117
  %362 = vmatpush1.msra.mxu0 %v116
  %363 = vmatprep.subr.mxu0 %v109
  %364 = vmatpush1.msra.mxu0 %v108
  %365 = vmatprep.subr.mxu0 %v101
  %366 = vmatpush1.msra.mxu0 %v100
  %367 = vmatprep.subr.mxu0 %v93
  %368 = vmatpush1.msra.mxu0 %v92
  %369 = vmatprep.subr.mxu0 %v85
  %370 = vmatpush1.msra.mxu0 %v84
  %371 = vmatprep.subr.mxu0 %v77
  %372 = vmatpush1.msra.mxu0 %v76
  %373 = vmatprep.subr.mxu0 %v69
  %374 = vmatpush1.msra.mxu0 %v68
  %375 = vmatprep.subr.mxu0 %v61
  %376 = vmatpush1.msra.mxu0 %v60
  %377 = vmatprep.subr.mxu0 %v53
  %378 = vmatpush1.msra.mxu0 %v52
  %379 = vmatprep.subr.mxu0 %v45
  %380 = vmatpush1.msra.mxu0 %v44
  %381 = vmatprep.subr.mxu0 %v37
  %382 = vmatpush1.msra.mxu0 %v36
  %383 = vmatprep.subr.mxu0 %v29
  %384 = vmatpush1.msra.mxu0 %v28
  %385 = vmatprep.subr.mxu0 %v21
  %386 = vmatpush1.msra.mxu0 %v20
  %387 = vmatprep.subr.mxu0 0.0
  %388 = vmatpush2.msra.mxu0 0.0
  %389 = vmatprep.subr.mxu0 0.0
  %390 = vmatpush2.msra.mxu0 0.0
  %391 = vmatprep.subr.mxu0 0.0
  %392 = vmatpush2.msra.mxu0 0.0
  %393 = vmatprep.subr.mxu0 0.0
  %394 = vmatpush2.msra.mxu0 0.0
  %395 = vmatprep.subr.mxu0 0.0
  %396 = vmatpush2.msra.mxu0 0.0
  %397 = vmatprep.subr.mxu0 0.0
  %398 = vmatpush2.msra.mxu0 0.0
  %399 = vmatprep.subr.mxu0 0.0
  %400 = vmatpush2.msra.mxu0 0.0
  %401 = vmatprep.subr.mxu0 0.0
  %402 = vmatpush2.msra.mxu0 0.0
  %403 = vmatprep.subr.mxu0 0.0
  %404 = vmatpush2.msra.mxu0 0.0
  %405 = vmatprep.subr.mxu0 0.0
  %406 = vmatpush2.msra.mxu0 0.0
  %407 = vmatprep.subr.mxu0 0.0
  %408 = vmatpush2.msra.mxu0 0.0
  %409 = vmatprep.subr.mxu0 0.0
  %410 = vmatpush2.msra.mxu0 0.0
  %411 = vmatprep.subr.mxu0 0.0
  %412 = vmatpush2.msra.mxu0 0.0
  %413 = vmatprep.subr.mxu0 0.0
  %414 = vmatpush2.msra.mxu0 0.0
  %415 = vmatprep.subr.mxu0 0.0
  %416 = vmatpush2.msra.mxu0 0.0
  %417 = vmatprep.subr.mxu0 0.0
  %418 = vmatpush2.msra.mxu0 0.0
  %419 = vmatprep.mubr.f32.mxu0 0.0
  %420 = vmatmul.mubr.f32.gmra.mxu0 %v13
  %v421 = vpop.f32.mrf.mxu0
  %v422 = vadd.f32 0.0, %v421
  %v423 = vpop.f32.mrf.mxu0
  %v424 = vadd.f32 0.0, %v423
  %425 = vdwg.mxu0
  %v426 = vrot.slane %v209, 4
  %v427 = vadd.f32 %v209, %v426
  %v428 = vrot.slane %v427, 2
  %v429 = vadd.f32 %v427, %v428
  %v430 = vrot.slane %v429, 1
  %v431 = vadd.f32 %v429, %v430
  %v432 = vrot.slane %v211, 4
  %v433 = vadd.f32 %v211, %v432
  %v434 = vrot.slane %v433, 2
  %v435 = vadd.f32 %v433, %v434
  %v436 = vrot.slane %v435, 1
  %v437 = vadd.f32 %v435, %v436
  %v438 = vrot.slane %v280, 4
  %v439 = vadd.f32 %v280, %v438
  %v440 = vrot.slane %v439, 2
  %v441 = vadd.f32 %v439, %v440
  %v442 = vrot.slane %v441, 1
  %v443 = vadd.f32 %v441, %v442
  %v444 = vrot.slane %v282, 4
  %v445 = vadd.f32 %v282, %v444
  %v446 = vrot.slane %v445, 2
  %v447 = vadd.f32 %v445, %v446
  %v448 = vrot.slane %v447, 1
  %v449 = vadd.f32 %v447, %v448
  %v450 = vrot.slane %v351, 4
  %v451 = vadd.f32 %v351, %v450
  %v452 = vrot.slane %v451, 2
  %v453 = vadd.f32 %v451, %v452
  %v454 = vrot.slane %v453, 1
  %v455 = vadd.f32 %v453, %v454
  %v456 = vrot.slane %v353, 4
  %v457 = vadd.f32 %v353, %v456
  %v458 = vrot.slane %v457, 2
  %v459 = vadd.f32 %v457, %v458
  %v460 = vrot.slane %v459, 1
  %v461 = vadd.f32 %v459, %v460
  %v462 = vrot.slane %v422, 4
  %v463 = vadd.f32 %v422, %v462
  %v464 = vrot.slane %v463, 2
  %v465 = vadd.f32 %v463, %v464
  %v466 = vrot.slane %v465, 1
  %v467 = vadd.f32 %v465, %v466
  %v468 = vrot.slane %v424, 4
  %v469 = vadd.f32 %v424, %v468
  %v470 = vrot.slane %v469, 2
  %v471 = vadd.f32 %v469, %v470
  %v472 = vrot.slane %v471, 1
  %v473 = vadd.f32 %v471, %v472
  %v474 = vmul.f32 %v431, 0.125
  %v475 = vmul.f32 %v437, 0.125
  %v476 = vmul.f32 %v443, 0.125
  %v477 = vmul.f32 %v449, 0.125
  %v478 = vmul.f32 %v455, 0.125
  %v479 = vmul.f32 %v461, 0.125
  %v480 = vmul.f32 %v467, 0.125
  %v481 = vmul.f32 %v473, 0.125
  %v482 = vsub.f32 %v209, %v474
  %v483 = vsub.f32 %v211, %v475
  %v484 = vsub.f32 %v280, %v476
  %v485 = vsub.f32 %v282, %v477
  %v486 = vsub.f32 %v351, %v478
  %v487 = vsub.f32 %v353, %v479
  %v488 = vsub.f32 %v422, %v480
  %v489 = vsub.f32 %v424, %v481
  %v498 = vcombine.low %v431, %v437
  %v499 = vcombine.low %v443, %v449
  %v500 = vcombine.low %v455, %v461
  %v501 = vcombine.low %v467, %v473
  %v503 = vunpack.c.l.s4 1966171168
  %v504 = vunpack.c.0.s8 %v503
  %v505 = vlaneseq
  %v506 = vshrl.u32 %v505, 7
  %v507 = vsub.s32 %v504, %v506
  %v508 = vrot.slane %v498, %v507
  %v510 = vunpack.c.l.s4 1966171168
  %v511 = vunpack.c.0.s8 %v510
  %v512 = vlaneseq
  %v513 = vshrl.u32 %v512, 7
  %v514 = vsub.s32 %v511, %v513
  %v515 = vrot.slane %v499, %v514
  %v517 = vunpack.c.l.s4 1966171168
  %v518 = vunpack.c.0.s8 %v517
  %v519 = vlaneseq
  %v520 = vshrl.u32 %v519, 7
  %v521 = vsub.s32 %v518, %v520
  %v522 = vrot.slane %v500, %v521
  %v524 = vunpack.c.l.s4 1966171168
  %v525 = vunpack.c.0.s8 %v524
  %v526 = vlaneseq
  %v527 = vshrl.u32 %v526, 7
  %v528 = vsub.s32 %v525, %v527
  %v529 = vrot.slane %v501, %v528
  %v530 = vcombine.low %v508, %v515
  %v531 = vcombine.low %v522, %v529
  %v533 = vunpack.c.l.s4 1966171168
  %v534 = vunpack.c.0.s8 %v533
  %v535 = vlaneseq
  %v536 = vshrl.u32 %v535, 7
  %v537 = vsub.s32 %v534, %v536
  %v538 = vrot.slane %v530, %v537
  %v540 = vunpack.c.l.s4 1966171168
  %v541 = vunpack.c.0.s8 %v540
  %v542 = vlaneseq
  %v543 = vshrl.u32 %v542, 7
  %v544 = vsub.s32 %v541, %v543
  %v545 = vrot.slane %v531, %v544
  %v546 = vcombine.low %v538, %v545
  %548 = vst [vmem:[%s2] sm:$0xff] %v546
  %v549 = vmul.f32 %v482, %v482
  %v550 = vmul.f32 %v483, %v483
  %v551 = vmul.f32 %v484, %v484
  %v552 = vmul.f32 %v485, %v485
  %v553 = vmul.f32 %v486, %v486
  %v554 = vmul.f32 %v487, %v487
  %v555 = vmul.f32 %v488, %v488
  %v556 = vmul.f32 %v489, %v489
  %v557 = vrot.slane %v549, 4
  %v558 = vadd.f32 %v549, %v557
  %v559 = vrot.slane %v558, 2
  %v560 = vadd.f32 %v558, %v559
  %v561 = vrot.slane %v560, 1
  %v562 = vadd.f32 %v560, %v561
  %v563 = vrot.slane %v550, 4
  %v564 = vadd.f32 %v550, %v563
  %v565 = vrot.slane %v564, 2
  %v566 = vadd.f32 %v564, %v565
  %v567 = vrot.slane %v566, 1
  %v568 = vadd.f32 %v566, %v567
  %v569 = vrot.slane %v551, 4
  %v570 = vadd.f32 %v551, %v569
  %v571 = vrot.slane %v570, 2
  %v572 = vadd.f32 %v570, %v571
  %v573 = vrot.slane %v572, 1
  %v574 = vadd.f32 %v572, %v573
  %v575 = vrot.slane %v552, 4
  %v576 = vadd.f32 %v552, %v575
  %v577 = vrot.slane %v576, 2
  %v578 = vadd.f32 %v576, %v577
  %v579 = vrot.slane %v578, 1
  %v580 = vadd.f32 %v578, %v579
  %v581 = vrot.slane %v553, 4
  %v582 = vadd.f32 %v553, %v581
  %v583 = vrot.slane %v582, 2
  %v584 = vadd.f32 %v582, %v583
  %v585 = vrot.slane %v584, 1
  %v586 = vadd.f32 %v584, %v585
  %v587 = vrot.slane %v554, 4
  %v588 = vadd.f32 %v554, %v587
  %v589 = vrot.slane %v588, 2
  %v590 = vadd.f32 %v588, %v589
  %v591 = vrot.slane %v590, 1
  %v592 = vadd.f32 %v590, %v591
  %v593 = vrot.slane %v555, 4
  %v594 = vadd.f32 %v555, %v593
  %v595 = vrot.slane %v594, 2
  %v596 = vadd.f32 %v594, %v595
  %v597 = vrot.slane %v596, 1
  %v598 = vadd.f32 %v596, %v597
  %v599 = vrot.slane %v556, 4
  %v600 = vadd.f32 %v556, %v599
  %v601 = vrot.slane %v600, 2
  %v602 = vadd.f32 %v600, %v601
  %v603 = vrot.slane %v602, 1
  %v604 = vadd.f32 %v602, %v603
  %v613 = vcombine.low %v562, %v568
  %v614 = vcombine.low %v574, %v580
  %v615 = vcombine.low %v586, %v592
  %v616 = vcombine.low %v598, %v604
  %v618 = vunpack.c.l.s4 1966171168
  %v619 = vunpack.c.0.s8 %v618
  %v620 = vlaneseq
  %v621 = vshrl.u32 %v620, 7
  %v622 = vsub.s32 %v619, %v621
  %v623 = vrot.slane %v613, %v622
  %v625 = vunpack.c.l.s4 1966171168
  %v626 = vunpack.c.0.s8 %v625
  %v627 = vlaneseq
  %v628 = vshrl.u32 %v627, 7
  %v629 = vsub.s32 %v626, %v628
  %v630 = vrot.slane %v614, %v629
  %v632 = vunpack.c.l.s4 1966171168
  %v633 = vunpack.c.0.s8 %v632
  %v634 = vlaneseq
  %v635 = vshrl.u32 %v634, 7
  %v636 = vsub.s32 %v633, %v635
  %v637 = vrot.slane %v615, %v636
  %v639 = vunpack.c.l.s4 1966171168
  %v640 = vunpack.c.0.s8 %v639
  %v641 = vlaneseq
  %v642 = vshrl.u32 %v641, 7
  %v643 = vsub.s32 %v640, %v642
  %v644 = vrot.slane %v616, %v643
  %v645 = vcombine.low %v623, %v630
  %v646 = vcombine.low %v637, %v644
  %v648 = vunpack.c.l.s4 1966171168
  %v649 = vunpack.c.0.s8 %v648
  %v650 = vlaneseq
  %v651 = vshrl.u32 %v650, 7
  %v652 = vsub.s32 %v649, %v651
  %v653 = vrot.slane %v645, %v652
  %v655 = vunpack.c.l.s4 1966171168
  %v656 = vunpack.c.0.s8 %v655
  %v657 = vlaneseq
  %v658 = vshrl.u32 %v657, 7
  %v659 = vsub.s32 %v656, %v658
  %v660 = vrot.slane %v646, %v659
  %v661 = vcombine.low %v653, %v660
  %663 = vst [vmem:[%s3] sm:$0xff] %v661
  // Predicated region
  $region10: #{local_embedding_forward.3} parent=0 // pred_check
    _
  $region11: #{local_embedding_forward.3} parent=0 // pred_check_branch
    %665 = sbr.rel (0) target = $region13
  $region12: #{local_embedding_forward.3} parent=0 // pred_region
    _
  $region13: #{local_embedding_forward.3} parent=0 // pred_fallthru
    _
  // Predicated region
  $region14: #{local_embedding_forward.3} parent=0 // pred_check
    _
  $region15: #{local_embedding_forward.3} parent=0 // pred_check_branch
    %667 = sbr.rel (0) target = $region17
  $region16: #{local_embedding_forward.3} parent=0 // pred_region
    _
  $region17: #{local_embedding_forward.3} parent=0 // pred_fallthru
    _
  // Predicated region
  $region18: #{local_embedding_forward.3} parent=0 // pred_check
    _
  $region19: #{local_embedding_forward.3} parent=0 // pred_check_branch
    %669 = sbr.rel (0) target = $region21
  $region20: #{local_embedding_forward.3} parent=0 // pred_region
    _
  $region21: #{local_embedding_forward.3} parent=0 // pred_fallthru
    _
  // Predicated region
  $region22: #{local_embedding_forward.3} parent=0 // pred_check
    _
  $region23: #{local_embedding_forward.3} parent=0 // pred_check_branch
    %671 = sbr.rel (0) target = $region25
  $region24: #{local_embedding_forward.3} parent=0 // pred_region
    _
  $region25: #{local_embedding_forward.3} parent=0 // pred_fallthru
    _

// kernel: local_embedding_forward.4
$region0: #{local_embedding_forward.4}
  #allocation0 [shape = 'u32[]', space=smem, size = 0x4, offset = 0x4, fixed_abs, tag = 'smem constant byte address 0x4 - core index']
  #allocation1 [shape = 'u32[144,128]{1,0:T(1,128)}', space=vmem, size = 0x12000, scoped, tag = 'internal scratch']
  %s0 = inlined_call_operand.vmem [shape: f32[8,128], index: 0, kind: input, shape index: {}]
  %s1 = inlined_call_operand.vmem [shape: f32[128,1024], index: 1, kind: input, shape index: {}]
  %s2 = inlined_call_operand.vmem [shape: f32[1,1024], index: 2, kind: input, shape index: {}]
  %s3 = inlined_call_operand.vmem [shape: f32[1,1024], index: 3, kind: input, shape index: {}]
  %s4 = inlined_call_operand.vmem [shape: f32[1024,256], index: 4, kind: input, shape index: {}]
  %s5 = inlined_call_operand.vmem [shape: f32[1,1,256], index: 5, kind: output, shape index: {0}]
  %s6 = inlined_call_operand.vmem [shape: f32[1,1,256], index: 6, kind: output, shape index: {1}]
  %7 = xla_tuple %s5, %s6
  %s8 = sld [smem:[#allocation0]]
  $region38: #{local_embedding_forward.4} parent=0
    _
  %s10 = ssub.s32 1, %s8
  %s11 = scalar_select 0, %s10, %s8
  // Predicated region
  $region2: #{local_embedding_forward.4} parent=0 // pred_check
    _
  $region3: #{local_embedding_forward.4} parent=0 // pred_check_branch
    %13 = sbr.rel (0) target = $region5
  $region4: #{local_embedding_forward.4} parent=0 // pred_region
    _
  $region5: #{local_embedding_forward.4} parent=0 // pred_fallthru
    _
  // Predicated region
  $region6: #{local_embedding_forward.4} parent=0 // pred_check
    _
  $region7: #{local_embedding_forward.4} parent=0 // pred_check_branch
    %15 = sbr.rel (0) target = $region9
  $region8: #{local_embedding_forward.4} parent=0 // pred_region
    _
  $region9: #{local_embedding_forward.4} parent=0 // pred_fallthru
    _
  // Predicated region
  $region10: #{local_embedding_forward.4} parent=0 // pred_check
    _
  $region11: #{local_embedding_forward.4} parent=0 // pred_check_branch
    %17 = sbr.rel (0) target = $region13
  $region12: #{local_embedding_forward.4} parent=0 // pred_region
    _
  $region13: #{local_embedding_forward.4} parent=0 // pred_fallthru
    _
  // Predicated region
  $region14: #{local_embedding_forward.4} parent=0 // pred_check
    _
  $region15: #{local_embedding_forward.4} parent=0 // pred_check_branch
    %19 = sbr.rel (0) target = $region17
  $region16: #{local_embedding_forward.4} parent=0 // pred_region
    _
  $region17: #{local_embedding_forward.4} parent=0 // pred_fallthru
    _
  // Predicated region
  $region18: #{local_embedding_forward.4} parent=0 // pred_check
    _
  $region19: #{local_embedding_forward.4} parent=0 // pred_check_branch
    %21 = sbr.rel (0) target = $region21
  $region20: #{local_embedding_forward.4} parent=0 // pred_region
    _
  $region21: #{local_embedding_forward.4} parent=0 // pred_fallthru
    _
  %v22 = vld [vmem:[%s0] sm:$0xff]
  %v23 = vld [vmem:[%s1] sm:$0xff]
  %v24 = vld [vmem:[%s1 + $0x8] sm:$0xff]
  %v25 = vld [vmem:[%s1 + $0x10] sm:$0xff]
  %v26 = vld [vmem:[%s1 + $0x18] sm:$0xff]
  %v27 = vld [vmem:[%s1 + $0x20] sm:$0xff]
  %v28 = vld [vmem:[%s1 + $0x28] sm:$0xff]
  %v29 = vld [vmem:[%s1 + $0x30] sm:$0xff]
  %v30 = vld [vmem:[%s1 + $0x38] sm:$0xff]
  %v31 = vld [vmem:[%s1 + $0x40] sm:$0xff]
  %v32 = vld [vmem:[%s1 + $0x48] sm:$0xff]
  %v33 = vld [vmem:[%s1 + $0x50] sm:$0xff]
  %v34 = vld [vmem:[%s1 + $0x58] sm:$0xff]
  %v35 = vld [vmem:[%s1 + $0x60] sm:$0xff]
  %v36 = vld [vmem:[%s1 + $0x68] sm:$0xff]
  %v37 = vld [vmem:[%s1 + $0x70] sm:$0xff]
  %v38 = vld [vmem:[%s1 + $0x78] sm:$0xff]
  %v39 = vld [vmem:[%s1 + $0x80] sm:$0xff]
  %v40 = vld [vmem:[%s1 + $0x88] sm:$0xff]
  %v41 = vld [vmem:[%s1 + $0x90] sm:$0xff]
  %v42 = vld [vmem:[%s1 + $0x98] sm:$0xff]
  %v43 = vld [vmem:[%s1 + $0xa0] sm:$0xff]
  %v44 = vld [vmem:[%s1 + $0xa8] sm:$0xff]
  %v45 = vld [vmem:[%s1 + $0xb0] sm:$0xff]
  %v46 = vld [vmem:[%s1 + $0xb8] sm:$0xff]
  %v47 = vld [vmem:[%s1 + $0xc0] sm:$0xff]
  %v48 = vld [vmem:[%s1 + $0xc8] sm:$0xff]
  %v49 = vld [vmem:[%s1 + $0xd0] sm:$0xff]
  %v50 = vld [vmem:[%s1 + $0xd8] sm:$0xff]
  %v51 = vld [vmem:[%s1 + $0xe0] sm:$0xff]
  %v52 = vld [vmem:[%s1 + $0xe8] sm:$0xff]
  %v53 = vld [vmem:[%s1 + $0xf0] sm:$0xff]
  %v54 = vld [vmem:[%s1 + $0xf8] sm:$0xff]
  %v55 = vld [vmem:[%s1 + $0x100] sm:$0xff]
  %v56 = vld [vmem:[%s1 + $0x108] sm:$0xff]
  %v57 = vld [vmem:[%s1 + $0x110] sm:$0xff]
  %v58 = vld [vmem:[%s1 + $0x118] sm:$0xff]
  %v59 = vld [vmem:[%s1 + $0x120] sm:$0xff]
  %v60 = vld [vmem:[%s1 + $0x128] sm:$0xff]
  %v61 = vld [vmem:[%s1 + $0x130] sm:$0xff]
  %v62 = vld [vmem:[%s1 + $0x138] sm:$0xff]
  %v63 = vld [vmem:[%s1 + $0x140] sm:$0xff]
  %v64 = vld [vmem:[%s1 + $0x148] sm:$0xff]
  %v65 = vld [vmem:[%s1 + $0x150] sm:$0xff]
  %v66 = vld [vmem:[%s1 + $0x158] sm:$0xff]
  %v67 = vld [vmem:[%s1 + $0x160] sm:$0xff]
  %v68 = vld [vmem:[%s1 + $0x168] sm:$0xff]
  %v69 = vld [vmem:[%s1 + $0x170] sm:$0xff]
  %v70 = vld [vmem:[%s1 + $0x178] sm:$0xff]
  %v71 = vld [vmem:[%s1 + $0x180] sm:$0xff]
  %v72 = vld [vmem:[%s1 + $0x188] sm:$0xff]
  %v73 = vld [vmem:[%s1 + $0x190] sm:$0xff]
  %v74 = vld [vmem:[%s1 + $0x198] sm:$0xff]
  %v75 = vld [vmem:[%s1 + $0x1a0] sm:$0xff]
  %v76 = vld [vmem:[%s1 + $0x1a8] sm:$0xff]
  %v77 = vld [vmem:[%s1 + $0x1b0] sm:$0xff]
  %v78 = vld [vmem:[%s1 + $0x1b8] sm:$0xff]
  %v79 = vld [vmem:[%s1 + $0x1c0] sm:$0xff]
  %v80 = vld [vmem:[%s1 + $0x1c8] sm:$0xff]
  %v81 = vld [vmem:[%s1 + $0x1d0] sm:$0xff]
  %v82 = vld [vmem:[%s1 + $0x1d8] sm:$0xff]
  %v83 = vld [vmem:[%s1 + $0x1e0] sm:$0xff]
  %v84 = vld [vmem:[%s1 + $0x1e8] sm:$0xff]
  %v85 = vld [vmem:[%s1 + $0x1f0] sm:$0xff]
  %v86 = vld [vmem:[%s1 + $0x1f8] sm:$0xff]
  %v87 = vld [vmem:[%s1 + $0x200] sm:$0xff]
  %v88 = vld [vmem:[%s1 + $0x208] sm:$0xff]
  %v89 = vld [vmem:[%s1 + $0x210] sm:$0xff]
  %v90 = vld [vmem:[%s1 + $0x218] sm:$0xff]
  %v91 = vld [vmem:[%s1 + $0x220] sm:$0xff]
  %v92 = vld [vmem:[%s1 + $0x228] sm:$0xff]
  %v93 = vld [vmem:[%s1 + $0x230] sm:$0xff]
  %v94 = vld [vmem:[%s1 + $0x238] sm:$0xff]
  %v95 = vld [vmem:[%s1 + $0x240] sm:$0xff]
  %v96 = vld [vmem:[%s1 + $0x248] sm:$0xff]
  %v97 = vld [vmem:[%s1 + $0x250] sm:$0xff]
  %v98 = vld [vmem:[%s1 + $0x258] sm:$0xff]
  %v99 = vld [vmem:[%s1 + $0x260] sm:$0xff]
  %v100 = vld [vmem:[%s1 + $0x268] sm:$0xff]
  %v101 = vld [vmem:[%s1 + $0x270] sm:$0xff]
  %v102 = vld [vmem:[%s1 + $0x278] sm:$0xff]
  %v103 = vld [vmem:[%s1 + $0x280] sm:$0xff]
  %v104 = vld [vmem:[%s1 + $0x288] sm:$0xff]
  %v105 = vld [vmem:[%s1 + $0x290] sm:$0xff]
  %v106 = vld [vmem:[%s1 + $0x298] sm:$0xff]
  %v107 = vld [vmem:[%s1 + $0x2a0] sm:$0xff]
  %v108 = vld [vmem:[%s1 + $0x2a8] sm:$0xff]
  %v109 = vld [vmem:[%s1 + $0x2b0] sm:$0xff]
  %v110 = vld [vmem:[%s1 + $0x2b8] sm:$0xff]
  %v111 = vld [vmem:[%s1 + $0x2c0] sm:$0xff]
  %v112 = vld [vmem:[%s1 + $0x2c8] sm:$0xff]
  %v113 = vld [vmem:[%s1 + $0x2d0] sm:$0xff]
  %v114 = vld [vmem:[%s1 + $0x2d8] sm:$0xff]
  %v115 = vld [vmem:[%s1 + $0x2e0] sm:$0xff]
  %v116 = vld [vmem:[%s1 + $0x2e8] sm:$0xff]
  %v117 = vld [vmem:[%s1 + $0x2f0] sm:$0xff]
  %v118 = vld [vmem:[%s1 + $0x2f8] sm:$0xff]
  %v119 = vld [vmem:[%s1 + $0x300] sm:$0xff]
  %v120 = vld [vmem:[%s1 + $0x308] sm:$0xff]
  %v121 = vld [vmem:[%s1 + $0x310] sm:$0xff]
  %v122 = vld [vmem:[%s1 + $0x318] sm:$0xff]
  %v123 = vld [vmem:[%s1 + $0x320] sm:$0xff]
  %v124 = vld [vmem:[%s1 + $0x328] sm:$0xff]
  %v125 = vld [vmem:[%s1 + $0x330] sm:$0xff]
  %v126 = vld [vmem:[%s1 + $0x338] sm:$0xff]
  %v127 = vld [vmem:[%s1 + $0x340] sm:$0xff]
  %v128 = vld [vmem:[%s1 + $0x348] sm:$0xff]
  %v129 = vld [vmem:[%s1 + $0x350] sm:$0xff]
  %v130 = vld [vmem:[%s1 + $0x358] sm:$0xff]
  %v131 = vld [vmem:[%s1 + $0x360] sm:$0xff]
  %v132 = vld [vmem:[%s1 + $0x368] sm:$0xff]
  %v133 = vld [vmem:[%s1 + $0x370] sm:$0xff]
  %v134 = vld [vmem:[%s1 + $0x378] sm:$0xff]
  %v135 = vld [vmem:[%s1 + $0x380] sm:$0xff]
  %v136 = vld [vmem:[%s1 + $0x388] sm:$0xff]
  %v137 = vld [vmem:[%s1 + $0x390] sm:$0xff]
  %v138 = vld [vmem:[%s1 + $0x398] sm:$0xff]
  %v139 = vld [vmem:[%s1 + $0x3a0] sm:$0xff]
  %v140 = vld [vmem:[%s1 + $0x3a8] sm:$0xff]
  %v141 = vld [vmem:[%s1 + $0x3b0] sm:$0xff]
  %v142 = vld [vmem:[%s1 + $0x3b8] sm:$0xff]
  %v143 = vld [vmem:[%s1 + $0x3c0] sm:$0xff]
  %v144 = vld [vmem:[%s1 + $0x3c8] sm:$0xff]
  %v145 = vld [vmem:[%s1 + $0x3d0] sm:$0xff]
  %v146 = vld [vmem:[%s1 + $0x3d8] sm:$0xff]
  %v147 = vld [vmem:[%s1 + $0x3e0] sm:$0xff]
  %v148 = vld [vmem:[%s1 + $0x3e8] sm:$0xff]
  %v149 = vld [vmem:[%s1 + $0x3f0] sm:$0xff]
  %v150 = vld [vmem:[%s1 + $0x3f8] sm:$0xff]
  %151 = vmatprep.subr.mxu0 %v144
  %152 = vmatpush1.msra.mxu0 %v143
  %153 = vmatprep.subr.mxu0 %v136
  %154 = vmatpush1.msra.mxu0 %v135
  %155 = vmatprep.subr.mxu0 %v128
  %156 = vmatpush1.msra.mxu0 %v127
  %157 = vmatprep.subr.mxu0 %v120
  %158 = vmatpush1.msra.mxu0 %v119
  %159 = vmatprep.subr.mxu0 %v112
  %160 = vmatpush1.msra.mxu0 %v111
  %161 = vmatprep.subr.mxu0 %v104
  %162 = vmatpush1.msra.mxu0 %v103
  %163 = vmatprep.subr.mxu0 %v96
  %164 = vmatpush1.msra.mxu0 %v95
  %165 = vmatprep.subr.mxu0 %v88
  %166 = vmatpush1.msra.mxu0 %v87
  %167 = vmatprep.subr.mxu0 %v80
  %168 = vmatpush1.msra.mxu0 %v79
  %169 = vmatprep.subr.mxu0 %v72
  %170 = vmatpush1.msra.mxu0 %v71
  %171 = vmatprep.subr.mxu0 %v64
  %172 = vmatpush1.msra.mxu0 %v63
  %173 = vmatprep.subr.mxu0 %v56
  %174 = vmatpush1.msra.mxu0 %v55
  %175 = vmatprep.subr.mxu0 %v48
  %176 = vmatpush1.msra.mxu0 %v47
  %177 = vmatprep.subr.mxu0 %v40
  %178 = vmatpush1.msra.mxu0 %v39
  %179 = vmatprep.subr.mxu0 %v32
  %180 = vmatpush1.msra.mxu0 %v31
  %181 = vmatprep.subr.mxu0 %v24
  %182 = vmatpush1.msra.mxu0 %v23
  %183 = vmatprep.subr.mxu0 0.0
  %184 = vmatpush2.msra.mxu0 0.0
  %185 = vmatprep.subr.mxu0 0.0
  %186 = vmatpush2.msra.mxu0 0.0
  %187 = vmatprep.subr.mxu0 0.0
  %188 = vmatpush2.msra.mxu0 0.0
  %189 = vmatprep.subr.mxu0 0.0
  %190 = vmatpush2.msra.mxu0 0.0
  %191 = vmatprep.subr.mxu0 0.0
  %192 = vmatpush2.msra.mxu0 0.0
  %193 = vmatprep.subr.mxu0 0.0
  %194 = vmatpush2.msra.mxu0 0.0
  %195 = vmatprep.subr.mxu0 0.0
  %196 = vmatpush2.msra.mxu0 0.0
  %197 = vmatprep.subr.mxu0 0.0
  %198 = vmatpush2.msra.mxu0 0.0
  %199 = vmatprep.subr.mxu0 0.0
  %200 = vmatpush2.msra.mxu0 0.0
  %201 = vmatprep.subr.mxu0 0.0
  %202 = vmatpush2.msra.mxu0 0.0
  %203 = vmatprep.subr.mxu0 0.0
  %204 = vmatpush2.msra.mxu0 0.0
  %205 = vmatprep.subr.mxu0 0.0
  %206 = vmatpush2.msra.mxu0 0.0
  %207 = vmatprep.subr.mxu0 0.0
  %208 = vmatpush2.msra.mxu0 0.0
  %209 = vmatprep.subr.mxu0 0.0
  %210 = vmatpush2.msra.mxu0 0.0
  %211 = vmatprep.subr.mxu0 0.0
  %212 = vmatpush2.msra.mxu0 0.0
  %213 = vmatprep.subr.mxu0 0.0
  %214 = vmatpush2.msra.mxu0 0.0
  %215 = vmatprep.mubr.f32.mxu0 0.0
  %216 = vmatmul.mubr.f32.gmra.mxu0 %v22
  %v217 = vpop.f32.mrf.mxu0
  %v218 = vadd.f32 0.0, %v217
  %v219 = vpop.f32.mrf.mxu0
  %v220 = vadd.f32 0.0, %v219
  %221 = vdwg.mxu0
  %222 = vmatprep.subr.mxu0 %v146
  %223 = vmatpush1.msra.mxu0 %v145
  %224 = vmatprep.subr.mxu0 %v138
  %225 = vmatpush1.msra.mxu0 %v137
  %226 = vmatprep.subr.mxu0 %v130
  %227 = vmatpush1.msra.mxu0 %v129
  %228 = vmatprep.subr.mxu0 %v122
  %229 = vmatpush1.msra.mxu0 %v121
  %230 = vmatprep.subr.mxu0 %v114
  %231 = vmatpush1.msra.mxu0 %v113
  %232 = vmatprep.subr.mxu0 %v106
  %233 = vmatpush1.msra.mxu0 %v105
  %234 = vmatprep.subr.mxu0 %v98
  %235 = vmatpush1.msra.mxu0 %v97
  %236 = vmatprep.subr.mxu0 %v90
  %237 = vmatpush1.msra.mxu0 %v89
  %238 = vmatprep.subr.mxu0 %v82
  %239 = vmatpush1.msra.mxu0 %v81
  %240 = vmatprep.subr.mxu0 %v74
  %241 = vmatpush1.msra.mxu0 %v73
  %242 = vmatprep.subr.mxu0 %v66
  %243 = vmatpush1.msra.mxu0 %v65
  %244 = vmatprep.subr.mxu0 %v58
  %245 = vmatpush1.msra.mxu0 %v57
  %246 = vmatprep.subr.mxu0 %v50
  %247 = vmatpush1.msra.mxu0 %v49
  %248 = vmatprep.subr.mxu0 %v42
  %249 = vmatpush1.msra.mxu0 %v41
  %250 = vmatprep.subr.mxu0 %v34
  %251 = vmatpush1.msra.mxu0 %v33
  %252 = vmatprep.subr.mxu0 %v26
  %253 = vmatpush1.msra.mxu0 %v25
  %254 = vmatprep.subr.mxu0 0.0
  %255 = vmatpush2.msra.mxu0 0.0
  %256 = vmatprep.subr.mxu0 0.0
  %257 = vmatpush2.msra.mxu0 0.0
  %258 = vmatprep.subr.mxu0 0.0
  %259 = vmatpush2.msra.mxu0 0.0
  %260 = vmatprep.subr.mxu0 0.0
  %261 = vmatpush2.msra.mxu0 0.0
  %262 = vmatprep.subr.mxu0 0.0
  %263 = vmatpush2.msra.mxu0 0.0
  %264 = vmatprep.subr.mxu0 0.0
  %265 = vmatpush2.msra.mxu0 0.0
  %266 = vmatprep.subr.mxu0 0.0
  %267 = vmatpush2.msra.mxu0 0.0
  %268 = vmatprep.subr.mxu0 0.0
  %269 = vmatpush2.msra.mxu0 0.0
  %270 = vmatprep.subr.mxu0 0.0
  %271 = vmatpush2.msra.mxu0 0.0
  %272 = vmatprep.subr.mxu0 0.0
  %273 = vmatpush2.msra.mxu0 0.0
  %274 = vmatprep.subr.mxu0 0.0
  %275 = vmatpush2.msra.mxu0 0.0
  %276 = vmatprep.subr.mxu0 0.0
  %277 = vmatpush2.msra.mxu0 0.0
  %278 = vmatprep.subr.mxu0 0.0
  %279 = vmatpush2.msra.mxu0 0.0
  %280 = vmatprep.subr.mxu0 0.0
  %281 = vmatpush2.msra.mxu0 0.0
  %282 = vmatprep.subr.mxu0 0.0
  %283 = vmatpush2.msra.mxu0 0.0
  %284 = vmatprep.subr.mxu0 0.0
  %285 = vmatpush2.msra.mxu0 0.0
  %286 = vmatprep.mubr.f32.mxu0 0.0
  %287 = vmatmul.mubr.f32.gmra.mxu0 %v22
  %v288 = vpop.f32.mrf.mxu0
  %v289 = vadd.f32 0.0, %v288
  %v290 = vpop.f32.mrf.mxu0
  %v291 = vadd.f32 0.0, %v290
  %292 = vdwg.mxu0
  %293 = vmatprep.subr.mxu0 %v148
  %294 = vmatpush1.msra.mxu0 %v147
  %295 = vmatprep.subr.mxu0 %v140
  %296 = vmatpush1.msra.mxu0 %v139
  %297 = vmatprep.subr.mxu0 %v132
  %298 = vmatpush1.msra.mxu0 %v131
  %299 = vmatprep.subr.mxu0 %v124
  %300 = vmatpush1.msra.mxu0 %v123
  %301 = vmatprep.subr.mxu0 %v116
  %302 = vmatpush1.msra.mxu0 %v115
  %303 = vmatprep.subr.mxu0 %v108
  %304 = vmatpush1.msra.mxu0 %v107
  %305 = vmatprep.subr.mxu0 %v100
  %306 = vmatpush1.msra.mxu0 %v99
  %307 = vmatprep.subr.mxu0 %v92
  %308 = vmatpush1.msra.mxu0 %v91
  %309 = vmatprep.subr.mxu0 %v84
  %310 = vmatpush1.msra.mxu0 %v83
  %311 = vmatprep.subr.mxu0 %v76
  %312 = vmatpush1.msra.mxu0 %v75
  %313 = vmatprep.subr.mxu0 %v68
  %314 = vmatpush1.msra.mxu0 %v67
  %315 = vmatprep.subr.mxu0 %v60
  %316 = vmatpush1.msra.mxu0 %v59
  %317 = vmatprep.subr.mxu0 %v52
  %318 = vmatpush1.msra.mxu0 %v51
  %319 = vmatprep.subr.mxu0 %v44
  %320 = vmatpush1.msra.mxu0 %v43
  %321 = vmatprep.subr.mxu0 %v36
  %322 = vmatpush1.msra.mxu0 %v35
  %323 = vmatprep.subr.mxu0 %v28
  %324 = vmatpush1.msra.mxu0 %v27
  %325 = vmatprep.subr.mxu0 0.0
  %326 = vmatpush2.msra.mxu0 0.0
  %327 = vmatprep.subr.mxu0 0.0
  %328 = vmatpush2.msra.mxu0 0.0
  %329 = vmatprep.subr.mxu0 0.0
  %330 = vmatpush2.msra.mxu0 0.0
  %331 = vmatprep.subr.mxu0 0.0
  %332 = vmatpush2.msra.mxu0 0.0
  %333 = vmatprep.subr.mxu0 0.0
  %334 = vmatpush2.msra.mxu0 0.0
  %335 = vmatprep.subr.mxu0 0.0
  %336 = vmatpush2.msra.mxu0 0.0
  %337 = vmatprep.subr.mxu0 0.0
  %338 = vmatpush2.msra.mxu0 0.0
  %339 = vmatprep.subr.mxu0 0.0
  %340 = vmatpush2.msra.mxu0 0.0
  %341 = vmatprep.subr.mxu0 0.0
  %342 = vmatpush2.msra.mxu0 0.0
  %343 = vmatprep.subr.mxu0 0.0
  %344 = vmatpush2.msra.mxu0 0.0
  %345 = vmatprep.subr.mxu0 0.0
  %346 = vmatpush2.msra.mxu0 0.0
  %347 = vmatprep.subr.mxu0 0.0
  %348 = vmatpush2.msra.mxu0 0.0
  %349 = vmatprep.subr.mxu0 0.0
  %350 = vmatpush2.msra.mxu0 0.0
  %351 = vmatprep.subr.mxu0 0.0
  %352 = vmatpush2.msra.mxu0 0.0
  %353 = vmatprep.subr.mxu0 0.0
  %354 = vmatpush2.msra.mxu0 0.0
  %355 = vmatprep.subr.mxu0 0.0
  %356 = vmatpush2.msra.mxu0 0.0
  %357 = vmatprep.mubr.f32.mxu0 0.0
  %358 = vmatmul.mubr.f32.gmra.mxu0 %v22
  %v359 = vpop.f32.mrf.mxu0
  %v360 = vadd.f32 0.0, %v359
  %v361 = vpop.f32.mrf.mxu0
  %v362 = vadd.f32 0.0, %v361
  %363 = vdwg.mxu0
  %364 = vmatprep.subr.mxu0 %v150
  %365 = vmatpush1.msra.mxu0 %v149
  %366 = vmatprep.subr.mxu0 %v142
  %367 = vmatpush1.msra.mxu0 %v141
  %368 = vmatprep.subr.mxu0 %v134
  %369 = vmatpush1.msra.mxu0 %v133
  %370 = vmatprep.subr.mxu0 %v126
  %371 = vmatpush1.msra.mxu0 %v125
  %372 = vmatprep.subr.mxu0 %v118
  %373 = vmatpush1.msra.mxu0 %v117
  %374 = vmatprep.subr.mxu0 %v110
  %375 = vmatpush1.msra.mxu0 %v109
  %376 = vmatprep.subr.mxu0 %v102
  %377 = vmatpush1.msra.mxu0 %v101
  %378 = vmatprep.subr.mxu0 %v94
  %379 = vmatpush1.msra.mxu0 %v93
  %380 = vmatprep.subr.mxu0 %v86
  %381 = vmatpush1.msra.mxu0 %v85
  %382 = vmatprep.subr.mxu0 %v78
  %383 = vmatpush1.msra.mxu0 %v77
  %384 = vmatprep.subr.mxu0 %v70
  %385 = vmatpush1.msra.mxu0 %v69
  %386 = vmatprep.subr.mxu0 %v62
  %387 = vmatpush1.msra.mxu0 %v61
  %388 = vmatprep.subr.mxu0 %v54
  %389 = vmatpush1.msra.mxu0 %v53
  %390 = vmatprep.subr.mxu0 %v46
  %391 = vmatpush1.msra.mxu0 %v45
  %392 = vmatprep.subr.mxu0 %v38
  %393 = vmatpush1.msra.mxu0 %v37
  %394 = vmatprep.subr.mxu0 %v30
  %395 = vmatpush1.msra.mxu0 %v29
  %396 = vmatprep.subr.mxu0 0.0
  %397 = vmatpush2.msra.mxu0 0.0
  %398 = vmatprep.subr.mxu0 0.0
  %399 = vmatpush2.msra.mxu0 0.0
  %400 = vmatprep.subr.mxu0 0.0
  %401 = vmatpush2.msra.mxu0 0.0
  %402 = vmatprep.subr.mxu0 0.0
  %403 = vmatpush2.msra.mxu0 0.0
  %404 = vmatprep.subr.mxu0 0.0
  %405 = vmatpush2.msra.mxu0 0.0
  %406 = vmatprep.subr.mxu0 0.0
  %407 = vmatpush2.msra.mxu0 0.0
  %408 = vmatprep.subr.mxu0 0.0
  %409 = vmatpush2.msra.mxu0 0.0
  %410 = vmatprep.subr.mxu0 0.0
  %411 = vmatpush2.msra.mxu0 0.0
  %412 = vmatprep.subr.mxu0 0.0
  %413 = vmatpush2.msra.mxu0 0.0
  %414 = vmatprep.subr.mxu0 0.0
  %415 = vmatpush2.msra.mxu0 0.0
  %416 = vmatprep.subr.mxu0 0.0
  %417 = vmatpush2.msra.mxu0 0.0
  %418 = vmatprep.subr.mxu0 0.0
  %419 = vmatpush2.msra.mxu0 0.0
  %420 = vmatprep.subr.mxu0 0.0
  %421 = vmatpush2.msra.mxu0 0.0
  %422 = vmatprep.subr.mxu0 0.0
  %423 = vmatpush2.msra.mxu0 0.0
  %424 = vmatprep.subr.mxu0 0.0
  %425 = vmatpush2.msra.mxu0 0.0
  %426 = vmatprep.subr.mxu0 0.0
  %427 = vmatpush2.msra.mxu0 0.0
  %428 = vmatprep.mubr.f32.mxu0 0.0
  %429 = vmatmul.mubr.f32.gmra.mxu0 %v22
  %v430 = vpop.f32.mrf.mxu0
  %v431 = vadd.f32 0.0, %v430
  %v432 = vpop.f32.mrf.mxu0
  %v433 = vadd.f32 0.0, %v432
  %434 = vdwg.mxu0
  %v435 = vld [vmem:[%s2] sm:$0xff]
  %v436 = vld [vmem:[%s3] sm:$0xff]
  %v437 = vld [vmem:[%s4] sm:$0xff]
  %v438 = vld [vmem:[%s4 + $0x8] sm:$0xff]
  %v439 = vld [vmem:[%s4 + $0x10] sm:$0xff]
  %v440 = vld [vmem:[%s4 + $0x18] sm:$0xff]
  %v441 = vld [vmem:[%s4 + $0x20] sm:$0xff]
  %v442 = vld [vmem:[%s4 + $0x28] sm:$0xff]
  %v443 = vld [vmem:[%s4 + $0x30] sm:$0xff]
  %v444 = vld [vmem:[%s4 + $0x38] sm:$0xff]
  %v445 = vld [vmem:[%s4 + $0x40] sm:$0xff]
  %v446 = vld [vmem:[%s4 + $0x48] sm:$0xff]
  %v447 = vld [vmem:[%s4 + $0x50] sm:$0xff]
  %v448 = vld [vmem:[%s4 + $0x58] sm:$0xff]
  %v449 = vld [vmem:[%s4 + $0x60] sm:$0xff]
  %v450 = vld [vmem:[%s4 + $0x68] sm:$0xff]
  %v451 = vld [vmem:[%s4 + $0x70] sm:$0xff]
  %v452 = vld [vmem:[%s4 + $0x78] sm:$0xff]
  %v453 = vld [vmem:[%s4 + $0x80] sm:$0xff]
  %v454 = vld [vmem:[%s4 + $0x88] sm:$0xff]
  %v455 = vld [vmem:[%s4 + $0x90] sm:$0xff]
  %v456 = vld [vmem:[%s4 + $0x98] sm:$0xff]
  %v457 = vld [vmem:[%s4 + $0xa0] sm:$0xff]
  %v458 = vld [vmem:[%s4 + $0xa8] sm:$0xff]
  %v459 = vld [vmem:[%s4 + $0xb0] sm:$0xff]
  %v460 = vld [vmem:[%s4 + $0xb8] sm:$0xff]
  %v461 = vld [vmem:[%s4 + $0xc0] sm:$0xff]
  %v462 = vld [vmem:[%s4 + $0xc8] sm:$0xff]
  %v463 = vld [vmem:[%s4 + $0xd0] sm:$0xff]
  %v464 = vld [vmem:[%s4 + $0xd8] sm:$0xff]
  %v465 = vld [vmem:[%s4 + $0xe0] sm:$0xff]
  %v466 = vld [vmem:[%s4 + $0xe8] sm:$0xff]
  %v467 = vld [vmem:[%s4 + $0xf0] sm:$0xff]
  %v468 = vld [vmem:[%s4 + $0xf8] sm:$0xff]
  %v469 = vld [vmem:[%s4 + $0x100] sm:$0xff]
  %v470 = vld [vmem:[%s4 + $0x108] sm:$0xff]
  %v471 = vld [vmem:[%s4 + $0x110] sm:$0xff]
  %v472 = vld [vmem:[%s4 + $0x118] sm:$0xff]
  %v473 = vld [vmem:[%s4 + $0x120] sm:$0xff]
  %v474 = vld [vmem:[%s4 + $0x128] sm:$0xff]
  %v475 = vld [vmem:[%s4 + $0x130] sm:$0xff]
  %v476 = vld [vmem:[%s4 + $0x138] sm:$0xff]
  %v477 = vld [vmem:[%s4 + $0x140] sm:$0xff]
  %v478 = vld [vmem:[%s4 + $0x148] sm:$0xff]
  %v479 = vld [vmem:[%s4 + $0x150] sm:$0xff]
  %v480 = vld [vmem:[%s4 + $0x158] sm:$0xff]
  %v481 = vld [vmem:[%s4 + $0x160] sm:$0xff]
  %v482 = vld [vmem:[%s4 + $0x168] sm:$0xff]
  %v483 = vld [vmem:[%s4 + $0x170] sm:$0xff]
  %v484 = vld [vmem:[%s4 + $0x178] sm:$0xff]
  %v485 = vld [vmem:[%s4 + $0x180] sm:$0xff]
  %v486 = vld [vmem:[%s4 + $0x188] sm:$0xff]
  %v487 = vld [vmem:[%s4 + $0x190] sm:$0xff]
  %v488 = vld [vmem:[%s4 + $0x198] sm:$0xff]
  %v489 = vld [vmem:[%s4 + $0x1a0] sm:$0xff]
  %v490 = vld [vmem:[%s4 + $0x1a8] sm:$0xff]
  %v491 = vld [vmem:[%s4 + $0x1b0] sm:$0xff]
  %v492 = vld [vmem:[%s4 + $0x1b8] sm:$0xff]
  %v493 = vld [vmem:[%s4 + $0x1c0] sm:$0xff]
  %v494 = vld [vmem:[%s4 + $0x1c8] sm:$0xff]
  %v495 = vld [vmem:[%s4 + $0x1d0] sm:$0xff]
  %v496 = vld [vmem:[%s4 + $0x1d8] sm:$0xff]
  %v497 = vld [vmem:[%s4 + $0x1e0] sm:$0xff]
  %v498 = vld [vmem:[%s4 + $0x1e8] sm:$0xff]
  %v499 = vld [vmem:[%s4 + $0x1f0] sm:$0xff]
  %v500 = vld [vmem:[%s4 + $0x1f8] sm:$0xff]
  %v501 = vld [vmem:[%s4 + $0x200] sm:$0xff]
  %v502 = vld [vmem:[%s4 + $0x208] sm:$0xff]
  %v503 = vld [vmem:[%s4 + $0x210] sm:$0xff]
  %v504 = vld [vmem:[%s4 + $0x218] sm:$0xff]
  %v505 = vld [vmem:[%s4 + $0x220] sm:$0xff]
  %v506 = vld [vmem:[%s4 + $0x228] sm:$0xff]
  %v507 = vld [vmem:[%s4 + $0x230] sm:$0xff]
  %v508 = vld [vmem:[%s4 + $0x238] sm:$0xff]
  %v509 = vld [vmem:[%s4 + $0x240] sm:$0xff]
  %v510 = vld [vmem:[%s4 + $0x248] sm:$0xff]
  %v511 = vld [vmem:[%s4 + $0x250] sm:$0xff]
  %v512 = vld [vmem:[%s4 + $0x258] sm:$0xff]
  %v513 = vld [vmem:[%s4 + $0x260] sm:$0xff]
  %v514 = vld [vmem:[%s4 + $0x268] sm:$0xff]
  %v515 = vld [vmem:[%s4 + $0x270] sm:$0xff]
  %v516 = vld [vmem:[%s4 + $0x278] sm:$0xff]
  %v517 = vld [vmem:[%s4 + $0x280] sm:$0xff]
  %v518 = vld [vmem:[%s4 + $0x288] sm:$0xff]
  %v519 = vld [vmem:[%s4 + $0x290] sm:$0xff]
  %v520 = vld [vmem:[%s4 + $0x298] sm:$0xff]
  %v521 = vld [vmem:[%s4 + $0x2a0] sm:$0xff]
  %v522 = vld [vmem:[%s4 + $0x2a8] sm:$0xff]
  %v523 = vld [vmem:[%s4 + $0x2b0] sm:$0xff]
  %v524 = vld [vmem:[%s4 + $0x2b8] sm:$0xff]
  %v525 = vld [vmem:[%s4 + $0x2c0] sm:$0xff]
  %v526 = vld [vmem:[%s4 + $0x2c8] sm:$0xff]
  %v527 = vld [vmem:[%s4 + $0x2d0] sm:$0xff]
  %v528 = vld [vmem:[%s4 + $0x2d8] sm:$0xff]
  %v529 = vld [vmem:[%s4 + $0x2e0] sm:$0xff]
  %v530 = vld [vmem:[%s4 + $0x2e8] sm:$0xff]
  %v531 = vld [vmem:[%s4 + $0x2f0] sm:$0xff]
  %v532 = vld [vmem:[%s4 + $0x2f8] sm:$0xff]
  %v533 = vld [vmem:[%s4 + $0x300] sm:$0xff]
  %v534 = vld [vmem:[%s4 + $0x308] sm:$0xff]
  %v535 = vld [vmem:[%s4 + $0x310] sm:$0xff]
  %v536 = vld [vmem:[%s4 + $0x318] sm:$0xff]
  %v537 = vld [vmem:[%s4 + $0x320] sm:$0xff]
  %v538 = vld [vmem:[%s4 + $0x328] sm:$0xff]
  %v539 = vld [vmem:[%s4 + $0x330] sm:$0xff]
  %v540 = vld [vmem:[%s4 + $0x338] sm:$0xff]
  %v541 = vld [vmem:[%s4 + $0x340] sm:$0xff]
  %v542 = vld [vmem:[%s4 + $0x348] sm:$0xff]
  %v543 = vld [vmem:[%s4 + $0x350] sm:$0xff]
  %v544 = vld [vmem:[%s4 + $0x358] sm:$0xff]
  %v545 = vld [vmem:[%s4 + $0x360] sm:$0xff]
  %v546 = vld [vmem:[%s4 + $0x368] sm:$0xff]
  %v547 = vld [vmem:[%s4 + $0x370] sm:$0xff]
  %v548 = vld [vmem:[%s4 + $0x378] sm:$0xff]
  %v549 = vld [vmem:[%s4 + $0x380] sm:$0xff]
  %v550 = vld [vmem:[%s4 + $0x388] sm:$0xff]
  %v551 = vld [vmem:[%s4 + $0x390] sm:$0xff]
  %v552 = vld [vmem:[%s4 + $0x398] sm:$0xff]
  %v553 = vld [vmem:[%s4 + $0x3a0] sm:$0xff]
  %v554 = vld [vmem:[%s4 + $0x3a8] sm:$0xff]
  %v555 = vld [vmem:[%s4 + $0x3b0] sm:$0xff]
  %v556 = vld [vmem:[%s4 + $0x3b8] sm:$0xff]
  %v557 = vld [vmem:[%s4 + $0x3c0] sm:$0xff]
  %v558 = vld [vmem:[%s4 + $0x3c8] sm:$0xff]
  %v559 = vld [vmem:[%s4 + $0x3d0] sm:$0xff]
  %v560 = vld [vmem:[%s4 + $0x3d8] sm:$0xff]
  %v561 = vld [vmem:[%s4 + $0x3e0] sm:$0xff]
  %v562 = vld [vmem:[%s4 + $0x3e8] sm:$0xff]
  %v563 = vld [vmem:[%s4 + $0x3f0] sm:$0xff]
  %v564 = vld [vmem:[%s4 + $0x3f8] sm:$0xff]
  %v565 = vld [vmem:[%s4 + $0x400] sm:$0xff]
  %v566 = vld [vmem:[%s4 + $0x408] sm:$0xff]
  %v567 = vld [vmem:[%s4 + $0x410] sm:$0xff]
  %v568 = vld [vmem:[%s4 + $0x418] sm:$0xff]
  %v569 = vld [vmem:[%s4 + $0x420] sm:$0xff]
  %v570 = vld [vmem:[%s4 + $0x428] sm:$0xff]
  %v571 = vld [vmem:[%s4 + $0x430] sm:$0xff]
  %v572 = vld [vmem:[%s4 + $0x438] sm:$0xff]
  %v573 = vld [vmem:[%s4 + $0x440] sm:$0xff]
  %v574 = vld [vmem:[%s4 + $0x448] sm:$0xff]
  %v575 = vld [vmem:[%s4 + $0x450] sm:$0xff]
  %v576 = vld [vmem:[%s4 + $0x458] sm:$0xff]
  %v577 = vld [vmem:[%s4 + $0x460] sm:$0xff]
  %v578 = vld [vmem:[%s4 + $0x468] sm:$0xff]
  %v579 = vld [vmem:[%s4 + $0x470] sm:$0xff]
  %v580 = vld [vmem:[%s4 + $0x478] sm:$0xff]
  %v581 = vld [vmem:[%s4 + $0x480] sm:$0xff]
  %v582 = vld [vmem:[%s4 + $0x488] sm:$0xff]
  %v583 = vld [vmem:[%s4 + $0x490] sm:$0xff]
  %v584 = vld [vmem:[%s4 + $0x498] sm:$0xff]
  %v585 = vld [vmem:[%s4 + $0x4a0] sm:$0xff]
  %v586 = vld [vmem:[%s4 + $0x4a8] sm:$0xff]
  %v587 = vld [vmem:[%s4 + $0x4b0] sm:$0xff]
  %v588 = vld [vmem:[%s4 + $0x4b8] sm:$0xff]
  %v589 = vld [vmem:[%s4 + $0x4c0] sm:$0xff]
  %v590 = vld [vmem:[%s4 + $0x4c8] sm:$0xff]
  %v591 = vld [vmem:[%s4 + $0x4d0] sm:$0xff]
  %v592 = vld [vmem:[%s4 + $0x4d8] sm:$0xff]
  %v593 = vld [vmem:[%s4 + $0x4e0] sm:$0xff]
  %v594 = vld [vmem:[%s4 + $0x4e8] sm:$0xff]
  %v595 = vld [vmem:[%s4 + $0x4f0] sm:$0xff]
  %v596 = vld [vmem:[%s4 + $0x4f8] sm:$0xff]
  %v597 = vld [vmem:[%s4 + $0x500] sm:$0xff]
  %v598 = vld [vmem:[%s4 + $0x508] sm:$0xff]
  %v599 = vld [vmem:[%s4 + $0x510] sm:$0xff]
  %v600 = vld [vmem:[%s4 + $0x518] sm:$0xff]
  %v601 = vld [vmem:[%s4 + $0x520] sm:$0xff]
  %v602 = vld [vmem:[%s4 + $0x528] sm:$0xff]
  %v603 = vld [vmem:[%s4 + $0x530] sm:$0xff]
  %v604 = vld [vmem:[%s4 + $0x538] sm:$0xff]
  %v605 = vld [vmem:[%s4 + $0x540] sm:$0xff]
  %v606 = vld [vmem:[%s4 + $0x548] sm:$0xff]
  %v607 = vld [vmem:[%s4 + $0x550] sm:$0xff]
  %v608 = vld [vmem:[%s4 + $0x558] sm:$0xff]
  %v609 = vld [vmem:[%s4 + $0x560] sm:$0xff]
  %v610 = vld [vmem:[%s4 + $0x568] sm:$0xff]
  %v611 = vld [vmem:[%s4 + $0x570] sm:$0xff]
  %v612 = vld [vmem:[%s4 + $0x578] sm:$0xff]
  %v613 = vld [vmem:[%s4 + $0x580] sm:$0xff]
  %v614 = vld [vmem:[%s4 + $0x588] sm:$0xff]
  %v615 = vld [vmem:[%s4 + $0x590] sm:$0xff]
  %v616 = vld [vmem:[%s4 + $0x598] sm:$0xff]
  %v617 = vld [vmem:[%s4 + $0x5a0] sm:$0xff]
  %v618 = vld [vmem:[%s4 + $0x5a8] sm:$0xff]
  %v619 = vld [vmem:[%s4 + $0x5b0] sm:$0xff]
  %v620 = vld [vmem:[%s4 + $0x5b8] sm:$0xff]
  %v621 = vld [vmem:[%s4 + $0x5c0] sm:$0xff]
  %v622 = vld [vmem:[%s4 + $0x5c8] sm:$0xff]
  %v623 = vld [vmem:[%s4 + $0x5d0] sm:$0xff]
  %v624 = vld [vmem:[%s4 + $0x5d8] sm:$0xff]
  %v625 = vld [vmem:[%s4 + $0x5e0] sm:$0xff]
  %v626 = vld [vmem:[%s4 + $0x5e8] sm:$0xff]
  %v627 = vld [vmem:[%s4 + $0x5f0] sm:$0xff]
  %v628 = vld [vmem:[%s4 + $0x5f8] sm:$0xff]
  %v629 = vld [vmem:[%s4 + $0x600] sm:$0xff]
  %v630 = vld [vmem:[%s4 + $0x608] sm:$0xff]
  %v631 = vld [vmem:[%s4 + $0x610] sm:$0xff]
  %v632 = vld [vmem:[%s4 + $0x618] sm:$0xff]
  %v633 = vld [vmem:[%s4 + $0x620] sm:$0xff]
  %v634 = vld [vmem:[%s4 + $0x628] sm:$0xff]
  %v635 = vld [vmem:[%s4 + $0x630] sm:$0xff]
  %v636 = vld [vmem:[%s4 + $0x638] sm:$0xff]
  %v637 = vld [vmem:[%s4 + $0x640] sm:$0xff]
  %v638 = vld [vmem:[%s4 + $0x648] sm:$0xff]
  %v639 = vld [vmem:[%s4 + $0x650] sm:$0xff]
  %v640 = vld [vmem:[%s4 + $0x658] sm:$0xff]
  %v641 = vld [vmem:[%s4 + $0x660] sm:$0xff]
  %v642 = vld [vmem:[%s4 + $0x668] sm:$0xff]
  %v643 = vld [vmem:[%s4 + $0x670] sm:$0xff]
  %v644 = vld [vmem:[%s4 + $0x678] sm:$0xff]
  %v645 = vld [vmem:[%s4 + $0x680] sm:$0xff]
  %v646 = vld [vmem:[%s4 + $0x688] sm:$0xff]
  %v647 = vld [vmem:[%s4 + $0x690] sm:$0xff]
  %v648 = vld [vmem:[%s4 + $0x698] sm:$0xff]
  %v649 = vld [vmem:[%s4 + $0x6a0] sm:$0xff]
  %v650 = vld [vmem:[%s4 + $0x6a8] sm:$0xff]
  %v651 = vld [vmem:[%s4 + $0x6b0] sm:$0xff]
  %v652 = vld [vmem:[%s4 + $0x6b8] sm:$0xff]
  %v653 = vld [vmem:[%s4 + $0x6c0] sm:$0xff]
  %v654 = vld [vmem:[%s4 + $0x6c8] sm:$0xff]
  %v655 = vld [vmem:[%s4 + $0x6d0] sm:$0xff]
  %v656 = vld [vmem:[%s4 + $0x6d8] sm:$0xff]
  %v657 = vld [vmem:[%s4 + $0x6e0] sm:$0xff]
  %v658 = vld [vmem:[%s4 + $0x6e8] sm:$0xff]
  %v659 = vld [vmem:[%s4 + $0x6f0] sm:$0xff]
  %v660 = vld [vmem:[%s4 + $0x6f8] sm:$0xff]
  %v661 = vld [vmem:[%s4 + $0x700] sm:$0xff]
  %v662 = vld [vmem:[%s4 + $0x708] sm:$0xff]
  %v663 = vld [vmem:[%s4 + $0x710] sm:$0xff]
  %v664 = vld [vmem:[%s4 + $0x718] sm:$0xff]
  %v665 = vld [vmem:[%s4 + $0x720] sm:$0xff]
  %v666 = vld [vmem:[%s4 + $0x728] sm:$0xff]
  %v667 = vld [vmem:[%s4 + $0x730] sm:$0xff]
  %v668 = vld [vmem:[%s4 + $0x738] sm:$0xff]
  %v669 = vld [vmem:[%s4 + $0x740] sm:$0xff]
  %v670 = vld [vmem:[%s4 + $0x748] sm:$0xff]
  %v671 = vld [vmem:[%s4 + $0x750] sm:$0xff]
  %v672 = vld [vmem:[%s4 + $0x758] sm:$0xff]
  %v673 = vld [vmem:[%s4 + $0x760] sm:$0xff]
  %v674 = vld [vmem:[%s4 + $0x768] sm:$0xff]
  %v675 = vld [vmem:[%s4 + $0x770] sm:$0xff]
  %v676 = vld [vmem:[%s4 + $0x778] sm:$0xff]
  %v677 = vld [vmem:[%s4 + $0x780] sm:$0xff]
  %v678 = vld [vmem:[%s4 + $0x788] sm:$0xff]
  %v679 = vld [vmem:[%s4 + $0x790] sm:$0xff]
  %v680 = vld [vmem:[%s4 + $0x798] sm:$0xff]
  %v681 = vld [vmem:[%s4 + $0x7a0] sm:$0xff]
  %v682 = vld [vmem:[%s4 + $0x7a8] sm:$0xff]
  %v683 = vld [vmem:[%s4 + $0x7b0] sm:$0xff]
  %v684 = vld [vmem:[%s4 + $0x7b8] sm:$0xff]
  %v685 = vld [vmem:[%s4 + $0x7c0] sm:$0xff]
  %v686 = vld [vmem:[%s4 + $0x7c8] sm:$0xff]
  %v687 = vld [vmem:[%s4 + $0x7d0] sm:$0xff]
  %v688 = vld [vmem:[%s4 + $0x7d8] sm:$0xff]
  %v689 = vld [vmem:[%s4 + $0x7e0] sm:$0xff]
  %v690 = vld [vmem:[%s4 + $0x7e8] sm:$0xff]
  %v691 = vld [vmem:[%s4 + $0x7f0] sm:$0xff]
  %v692 = vld [vmem:[%s4 + $0x7f8] sm:$0xff]
  %v694 = vlaneseq
  %v695 = vshrl.u32 %v694, 7
  %v696 = vsub.s32 0, %v695
  %v697 = vrot.slane %v435, %v696
  %v698 = vlaneseq
  %v699 = vshrl.u32 %v698, 7
  %v700 = vsub.s32 1, %v699
  %v701 = vrot.slane %v435, %v700
  %v702 = vlaneseq
  %v703 = vshrl.u32 %v702, 7
  %v704 = vsub.s32 2, %v703
  %v705 = vrot.slane %v435, %v704
  %v706 = vlaneseq
  %v707 = vshrl.u32 %v706, 7
  %v708 = vsub.s32 3, %v707
  %v709 = vrot.slane %v435, %v708
  %v710 = vlaneseq
  %v711 = vshrl.u32 %v710, 7
  %v712 = vsub.s32 4, %v711
  %v713 = vrot.slane %v435, %v712
  %v714 = vlaneseq
  %v715 = vshrl.u32 %v714, 7
  %v716 = vsub.s32 5, %v715
  %v717 = vrot.slane %v435, %v716
  %v718 = vlaneseq
  %v719 = vshrl.u32 %v718, 7
  %v720 = vsub.s32 6, %v719
  %v721 = vrot.slane %v435, %v720
  %v722 = vlaneseq
  %v723 = vshrl.u32 %v722, 7
  %v724 = vsub.s32 7, %v723
  %v725 = vrot.slane %v435, %v724
  %v734 = vmul.f32 %v218, %v697
  %v735 = vmul.f32 %v220, %v701
  %v736 = vmul.f32 %v289, %v705
  %v737 = vmul.f32 %v291, %v709
  %v738 = vmul.f32 %v360, %v713
  %v739 = vmul.f32 %v362, %v717
  %v740 = vmul.f32 %v431, %v721
  %v741 = vmul.f32 %v433, %v725
  %v743 = vlaneseq
  %v744 = vshrl.u32 %v743, 7
  %v745 = vsub.s32 0, %v744
  %v746 = vrot.slane %v436, %v745
  %v747 = vlaneseq
  %v748 = vshrl.u32 %v747, 7
  %v749 = vsub.s32 1, %v748
  %v750 = vrot.slane %v436, %v749
  %v751 = vlaneseq
  %v752 = vshrl.u32 %v751, 7
  %v753 = vsub.s32 2, %v752
  %v754 = vrot.slane %v436, %v753
  %v755 = vlaneseq
  %v756 = vshrl.u32 %v755, 7
  %v757 = vsub.s32 3, %v756
  %v758 = vrot.slane %v436, %v757
  %v759 = vlaneseq
  %v760 = vshrl.u32 %v759, 7
  %v761 = vsub.s32 4, %v760
  %v762 = vrot.slane %v436, %v761
  %v763 = vlaneseq
  %v764 = vshrl.u32 %v763, 7
  %v765 = vsub.s32 5, %v764
  %v766 = vrot.slane %v436, %v765
  %v767 = vlaneseq
  %v768 = vshrl.u32 %v767, 7
  %v769 = vsub.s32 6, %v768
  %v770 = vrot.slane %v436, %v769
  %v771 = vlaneseq
  %v772 = vshrl.u32 %v771, 7
  %v773 = vsub.s32 7, %v772
  %v774 = vrot.slane %v436, %v773
  %v783 = vadd.f32 %v734, %v746
  %v784 = vadd.f32 %v735, %v750
  %v785 = vadd.f32 %v736, %v754
  %v786 = vadd.f32 %v737, %v758
  %v787 = vadd.f32 %v738, %v762
  %v788 = vadd.f32 %v739, %v766
  %v789 = vadd.f32 %v740, %v770
  %v790 = vadd.f32 %v741, %v774
  %v791 = vmax.f32 %v783, 0.0
  %v792 = vmax.f32 %v784, 0.0
  %v793 = vmax.f32 %v785, 0.0
  %v794 = vmax.f32 %v786, 0.0
  %v795 = vmax.f32 %v787, 0.0
  %v796 = vmax.f32 %v788, 0.0
  %v797 = vmax.f32 %v789, 0.0
  %v798 = vmax.f32 %v790, 0.0
  %799 = vmatprep.subr.mxu0 %v468
  %800 = vmatpush1.msra.mxu0 %v467
  %801 = vmatprep.subr.mxu0 %v466
  %802 = vmatpush1.msra.mxu0 %v465
  %803 = vmatprep.subr.mxu0 %v464
  %804 = vmatpush1.msra.mxu0 %v463
  %805 = vmatprep.subr.mxu0 %v462
  %806 = vmatpush1.msra.mxu0 %v461
  %807 = vmatprep.subr.mxu0 %v460
  %808 = vmatpush1.msra.mxu0 %v459
  %809 = vmatprep.subr.mxu0 %v458
  %810 = vmatpush1.msra.mxu0 %v457
  %811 = vmatprep.subr.mxu0 %v456
  %812 = vmatpush1.msra.mxu0 %v455
  %813 = vmatprep.subr.mxu0 %v454
  %814 = vmatpush1.msra.mxu0 %v453
  %815 = vmatprep.subr.mxu0 %v452
  %816 = vmatpush1.msra.mxu0 %v451
  %817 = vmatprep.subr.mxu0 %v450
  %818 = vmatpush1.msra.mxu0 %v449
  %819 = vmatprep.subr.mxu0 %v448
  %820 = vmatpush1.msra.mxu0 %v447
  %821 = vmatprep.subr.mxu0 %v446
  %822 = vmatpush1.msra.mxu0 %v445
  %823 = vmatprep.subr.mxu0 %v444
  %824 = vmatpush1.msra.mxu0 %v443
  %825 = vmatprep.subr.mxu0 %v442
  %826 = vmatpush1.msra.mxu0 %v441
  %827 = vmatprep.subr.mxu0 %v440
  %828 = vmatpush1.msra.mxu0 %v439
  %829 = vmatprep.subr.mxu0 %v438
  %830 = vmatpush1.msra.mxu0 %v437
  %831 = vmatprep.subr.mxu0 %v500
  %832 = vmatpush2.msra.mxu0 %v499
  %833 = vmatprep.subr.mxu0 %v498
  %834 = vmatpush2.msra.mxu0 %v497
  %835 = vmatprep.subr.mxu0 %v496
  %836 = vmatpush2.msra.mxu0 %v495
  %837 = vmatprep.subr.mxu0 %v494
  %838 = vmatpush2.msra.mxu0 %v493
  %839 = vmatprep.subr.mxu0 %v492
  %840 = vmatpush2.msra.mxu0 %v491
  %841 = vmatprep.subr.mxu0 %v490
  %842 = vmatpush2.msra.mxu0 %v489
  %843 = vmatprep.subr.mxu0 %v488
  %844 = vmatpush2.msra.mxu0 %v487
  %845 = vmatprep.subr.mxu0 %v486
  %846 = vmatpush2.msra.mxu0 %v485
  %847 = vmatprep.subr.mxu0 %v484
  %848 = vmatpush2.msra.mxu0 %v483
  %849 = vmatprep.subr.mxu0 %v482
  %850 = vmatpush2.msra.mxu0 %v481
  %851 = vmatprep.subr.mxu0 %v480
  %852 = vmatpush2.msra.mxu0 %v479
  %853 = vmatprep.subr.mxu0 %v478
  %854 = vmatpush2.msra.mxu0 %v477
  %855 = vmatprep.subr.mxu0 %v476
  %856 = vmatpush2.msra.mxu0 %v475
  %857 = vmatprep.subr.mxu0 %v474
  %858 = vmatpush2.msra.mxu0 %v473
  %859 = vmatprep.subr.mxu0 %v472
  %860 = vmatpush2.msra.mxu0 %v471
  %861 = vmatprep.subr.mxu0 %v470
  %862 = vmatpush2.msra.mxu0 %v469
  %863 = vmatprep.mubr.f32.mxu0 %v792
  %864 = vmatmul.mubr.f32.gmra.mxu0 %v791
  %v865 = vpop.f32.mrf.mxu0
  %v866 = vadd.f32 0.0, %v865
  %v867 = vpop.f32.mrf.mxu0
  %v868 = vadd.f32 0.0, %v867
  %869 = vdwg.mxu0
  %870 = vmatprep.subr.mxu0 %v532
  %871 = vmatpush1.msra.mxu0 %v531
  %872 = vmatprep.subr.mxu0 %v530
  %873 = vmatpush1.msra.mxu0 %v529
  %874 = vmatprep.subr.mxu0 %v528
  %875 = vmatpush1.msra.mxu0 %v527
  %876 = vmatprep.subr.mxu0 %v526
  %877 = vmatpush1.msra.mxu0 %v525
  %878 = vmatprep.subr.mxu0 %v524
  %879 = vmatpush1.msra.mxu0 %v523
  %880 = vmatprep.subr.mxu0 %v522
  %881 = vmatpush1.msra.mxu0 %v521
  %882 = vmatprep.subr.mxu0 %v520
  %883 = vmatpush1.msra.mxu0 %v519
  %884 = vmatprep.subr.mxu0 %v518
  %885 = vmatpush1.msra.mxu0 %v517
  %886 = vmatprep.subr.mxu0 %v516
  %887 = vmatpush1.msra.mxu0 %v515
  %888 = vmatprep.subr.mxu0 %v514
  %889 = vmatpush1.msra.mxu0 %v513
  %890 = vmatprep.subr.mxu0 %v512
  %891 = vmatpush1.msra.mxu0 %v511
  %892 = vmatprep.subr.mxu0 %v510
  %893 = vmatpush1.msra.mxu0 %v509
  %894 = vmatprep.subr.mxu0 %v508
  %895 = vmatpush1.msra.mxu0 %v507
  %896 = vmatprep.subr.mxu0 %v506
  %897 = vmatpush1.msra.mxu0 %v505
  %898 = vmatprep.subr.mxu0 %v504
  %899 = vmatpush1.msra.mxu0 %v503
  %900 = vmatprep.subr.mxu0 %v502
  %901 = vmatpush1.msra.mxu0 %v501
  %902 = vmatprep.subr.mxu0 %v564
  %903 = vmatpush2.msra.mxu0 %v563
  %904 = vmatprep.subr.mxu0 %v562
  %905 = vmatpush2.msra.mxu0 %v561
  %906 = vmatprep.subr.mxu0 %v560
  %907 = vmatpush2.msra.mxu0 %v559
  %908 = vmatprep.subr.mxu0 %v558
  %909 = vmatpush2.msra.mxu0 %v557
  %910 = vmatprep.subr.mxu0 %v556
  %911 = vmatpush2.msra.mxu0 %v555
  %912 = vmatprep.subr.mxu0 %v554
  %913 = vmatpush2.msra.mxu0 %v553
  %914 = vmatprep.subr.mxu0 %v552
  %915 = vmatpush2.msra.mxu0 %v551
  %916 = vmatprep.subr.mxu0 %v550
  %917 = vmatpush2.msra.mxu0 %v549
  %918 = vmatprep.subr.mxu0 %v548
  %919 = vmatpush2.msra.mxu0 %v547
  %920 = vmatprep.subr.mxu0 %v546
  %921 = vmatpush2.msra.mxu0 %v545
  %922 = vmatprep.subr.mxu0 %v544
  %923 = vmatpush2.msra.mxu0 %v543
  %924 = vmatprep.subr.mxu0 %v542
  %925 = vmatpush2.msra.mxu0 %v541
  %926 = vmatprep.subr.mxu0 %v540
  %927 = vmatpush2.msra.mxu0 %v539
  %928 = vmatprep.subr.mxu0 %v538
  %929 = vmatpush2.msra.mxu0 %v537
  %930 = vmatprep.subr.mxu0 %v536
  %931 = vmatpush2.msra.mxu0 %v535
  %932 = vmatprep.subr.mxu0 %v534
  %933 = vmatpush2.msra.mxu0 %v533
  %934 = vmatprep.mubr.f32.mxu0 %v794
  %935 = vmatmul.mubr.f32.gmra.mxu0 %v793
  %v936 = vpop.f32.mrf.mxu0
  %v937 = vadd.f32 %v866, %v936
  %v938 = vpop.f32.mrf.mxu0
  %v939 = vadd.f32 %v868, %v938
  %940 = vdwg.mxu0
  %941 = vmatprep.subr.mxu0 %v596
  %942 = vmatpush1.msra.mxu0 %v595
  %943 = vmatprep.subr.mxu0 %v594
  %944 = vmatpush1.msra.mxu0 %v593
  %945 = vmatprep.subr.mxu0 %v592
  %946 = vmatpush1.msra.mxu0 %v591
  %947 = vmatprep.subr.mxu0 %v590
  %948 = vmatpush1.msra.mxu0 %v589
  %949 = vmatprep.subr.mxu0 %v588
  %950 = vmatpush1.msra.mxu0 %v587
  %951 = vmatprep.subr.mxu0 %v586
  %952 = vmatpush1.msra.mxu0 %v585
  %953 = vmatprep.subr.mxu0 %v584
  %954 = vmatpush1.msra.mxu0 %v583
  %955 = vmatprep.subr.mxu0 %v582
  %956 = vmatpush1.msra.mxu0 %v581
  %957 = vmatprep.subr.mxu0 %v580
  %958 = vmatpush1.msra.mxu0 %v579
  %959 = vmatprep.subr.mxu0 %v578
  %960 = vmatpush1.msra.mxu0 %v577
  %961 = vmatprep.subr.mxu0 %v576
  %962 = vmatpush1.msra.mxu0 %v575
  %963 = vmatprep.subr.mxu0 %v574
  %964 = vmatpush1.msra.mxu0 %v573
  %965 = vmatprep.subr.mxu0 %v572
  %966 = vmatpush1.msra.mxu0 %v571
  %967 = vmatprep.subr.mxu0 %v570
  %968 = vmatpush1.msra.mxu0 %v569
  %969 = vmatprep.subr.mxu0 %v568
  %970 = vmatpush1.msra.mxu0 %v567
  %971 = vmatprep.subr.mxu0 %v566
  %972 = vmatpush1.msra.mxu0 %v565
  %973 = vmatprep.subr.mxu0 %v628
  %974 = vmatpush2.msra.mxu0 %v627
  %975 = vmatprep.subr.mxu0 %v626
  %976 = vmatpush2.msra.mxu0 %v625
  %977 = vmatprep.subr.mxu0 %v624
  %978 = vmatpush2.msra.mxu0 %v623
  %979 = vmatprep.subr.mxu0 %v622
  %980 = vmatpush2.msra.mxu0 %v621
  %981 = vmatprep.subr.mxu0 %v620
  %982 = vmatpush2.msra.mxu0 %v619
  %983 = vmatprep.subr.mxu0 %v618
  %984 = vmatpush2.msra.mxu0 %v617
  %985 = vmatprep.subr.mxu0 %v616
  %986 = vmatpush2.msra.mxu0 %v615
  %987 = vmatprep.subr.mxu0 %v614
  %988 = vmatpush2.msra.mxu0 %v613
  %989 = vmatprep.subr.mxu0 %v612
  %990 = vmatpush2.msra.mxu0 %v611
  %991 = vmatprep.subr.mxu0 %v610
  %992 = vmatpush2.msra.mxu0 %v609
  %993 = vmatprep.subr.mxu0 %v608
  %994 = vmatpush2.msra.mxu0 %v607
  %995 = vmatprep.subr.mxu0 %v606
  %996 = vmatpush2.msra.mxu0 %v605
  %997 = vmatprep.subr.mxu0 %v604
  %998 = vmatpush2.msra.mxu0 %v603
  %999 = vmatprep.subr.mxu0 %v602
  %1000 = vmatpush2.msra.mxu0 %v601
  %1001 = vmatprep.subr.mxu0 %v600
  %1002 = vmatpush2.msra.mxu0 %v599
  %1003 = vmatprep.subr.mxu0 %v598
  %1004 = vmatpush2.msra.mxu0 %v597
  %1005 = vmatprep.mubr.f32.mxu0 %v796
  %1006 = vmatmul.mubr.f32.gmra.mxu0 %v795
  %v1007 = vpop.f32.mrf.mxu0
  %v1008 = vadd.f32 %v937, %v1007
  %v1009 = vpop.f32.mrf.mxu0
  %v1010 = vadd.f32 %v939, %v1009
  %1011 = vdwg.mxu0
  %1012 = vmatprep.subr.mxu0 %v660
  %1013 = vmatpush1.msra.mxu0 %v659
  %1014 = vmatprep.subr.mxu0 %v658
  %1015 = vmatpush1.msra.mxu0 %v657
  %1016 = vmatprep.subr.mxu0 %v656
  %1017 = vmatpush1.msra.mxu0 %v655
  %1018 = vmatprep.subr.mxu0 %v654
  %1019 = vmatpush1.msra.mxu0 %v653
  %1020 = vmatprep.subr.mxu0 %v652
  %1021 = vmatpush1.msra.mxu0 %v651
  %1022 = vmatprep.subr.mxu0 %v650
  %1023 = vmatpush1.msra.mxu0 %v649
  %1024 = vmatprep.subr.mxu0 %v648
  %1025 = vmatpush1.msra.mxu0 %v647
  %1026 = vmatprep.subr.mxu0 %v646
  %1027 = vmatpush1.msra.mxu0 %v645
  %1028 = vmatprep.subr.mxu0 %v644
  %1029 = vmatpush1.msra.mxu0 %v643
  %1030 = vmatprep.subr.mxu0 %v642
  %1031 = vmatpush1.msra.mxu0 %v641
  %1032 = vmatprep.subr.mxu0 %v640
  %1033 = vmatpush1.msra.mxu0 %v639
  %1034 = vmatprep.subr.mxu0 %v638
  %1035 = vmatpush1.msra.mxu0 %v637
  %1036 = vmatprep.subr.mxu0 %v636
  %1037 = vmatpush1.msra.mxu0 %v635
  %1038 = vmatprep.subr.mxu0 %v634
  %1039 = vmatpush1.msra.mxu0 %v633
  %1040 = vmatprep.subr.mxu0 %v632
  %1041 = vmatpush1.msra.mxu0 %v631
  %1042 = vmatprep.subr.mxu0 %v630
  %1043 = vmatpush1.msra.mxu0 %v629
  %1044 = vmatprep.subr.mxu0 %v692
  %1045 = vmatpush2.msra.mxu0 %v691
  %1046 = vmatprep.subr.mxu0 %v690
  %1047 = vmatpush2.msra.mxu0 %v689
  %1048 = vmatprep.subr.mxu0 %v688
  %1049 = vmatpush2.msra.mxu0 %v687
  %1050 = vmatprep.subr.mxu0 %v686
  %1051 = vmatpush2.msra.mxu0 %v685
  %1052 = vmatprep.subr.mxu0 %v684
  %1053 = vmatpush2.msra.mxu0 %v683
  %1054 = vmatprep.subr.mxu0 %v682
  %1055 = vmatpush2.msra.mxu0 %v681
  %1056 = vmatprep.subr.mxu0 %v680
  %1057 = vmatpush2.msra.mxu0 %v679
  %1058 = vmatprep.subr.mxu0 %v678
  %1059 = vmatpush2.msra.mxu0 %v677
  %1060 = vmatprep.subr.mxu0 %v676
  %1061 = vmatpush2.msra.mxu0 %v675
  %1062 = vmatprep.subr.mxu0 %v674
  %1063 = vmatpush2.msra.mxu0 %v673
  %1064 = vmatprep.subr.mxu0 %v672
  %1065 = vmatpush2.msra.mxu0 %v671
  %1066 = vmatprep.subr.mxu0 %v670
  %1067 = vmatpush2.msra.mxu0 %v669
  %1068 = vmatprep.subr.mxu0 %v668
  %1069 = vmatpush2.msra.mxu0 %v667
  %1070 = vmatprep.subr.mxu0 %v666
  %1071 = vmatpush2.msra.mxu0 %v665
  %1072 = vmatprep.subr.mxu0 %v664
  %1073 = vmatpush2.msra.mxu0 %v663
  %1074 = vmatprep.subr.mxu0 %v662
  %1075 = vmatpush2.msra.mxu0 %v661
  %1076 = vmatprep.mubr.f32.mxu0 %v798
  %1077 = vmatmul.mubr.f32.gmra.mxu0 %v797
  %v1078 = vpop.f32.mrf.mxu0
  %v1079 = vadd.f32 %v1008, %v1078
  %v1080 = vpop.f32.mrf.mxu0
  %v1081 = vadd.f32 %v1010, %v1080
  %1082 = vdwg.mxu0
  %v1083 = vrot.slane %v1079, 4
  %v1084 = vadd.f32 %v1079, %v1083
  %v1085 = vrot.slane %v1084, 2
  %v1086 = vadd.f32 %v1084, %v1085
  %v1087 = vrot.slane %v1086, 1
  %v1088 = vadd.f32 %v1086, %v1087
  %v1089 = vrot.slane %v1081, 4
  %v1090 = vadd.f32 %v1081, %v1089
  %v1091 = vrot.slane %v1090, 2
  %v1092 = vadd.f32 %v1090, %v1091
  %v1093 = vrot.slane %v1092, 1
  %v1094 = vadd.f32 %v1092, %v1093
  %v1095 = vmul.f32 %v1088, 0.125
  %v1096 = vmul.f32 %v1094, 0.125
  %v1097 = vsub.f32 %v1079, %v1095
  %v1098 = vsub.f32 %v1081, %v1096
  %v1101 = vcombine.low %v1088, %v1094
  %v1103 = vunpack.c.l.s4 1966171168
  %v1104 = vunpack.c.0.s8 %v1103
  %v1105 = vlaneseq
  %v1106 = vshrl.u32 %v1105, 7
  %v1107 = vsub.s32 %v1104, %v1106
  %v1108 = vrot.slane %v1101, %v1107
  %v1110 = vunpack.c.l.s4 1966171168
  %v1111 = vunpack.c.0.s8 %v1110
  %v1112 = vlaneseq
  %v1113 = vshrl.u32 %v1112, 7
  %v1114 = vsub.s32 %v1111, %v1113
  %v1115 = vrot.slane %v1108, %v1114
  %v1117 = vlaneseq
  %vm1118 = vcmp.ge.s32.totalorder %v1117, 0
  %vm1119 = vcmp.lt.s32.totalorder %v1117, 256
  %vm1120 = vmand %vm1118, %vm1119
  %1121 = vst.msk [vmem:[%s5] sm:$0x3] %vm1120, %v1115
  %v1122 = vmul.f32 %v1097, %v1097
  %v1123 = vmul.f32 %v1098, %v1098
  %v1124 = vrot.slane %v1122, 4
  %v1125 = vadd.f32 %v1122, %v1124
  %v1126 = vrot.slane %v1125, 2
  %v1127 = vadd.f32 %v1125, %v1126
  %v1128 = vrot.slane %v1127, 1
  %v1129 = vadd.f32 %v1127, %v1128
  %v1130 = vrot.slane %v1123, 4
  %v1131 = vadd.f32 %v1123, %v1130
  %v1132 = vrot.slane %v1131, 2
  %v1133 = vadd.f32 %v1131, %v1132
  %v1134 = vrot.slane %v1133, 1
  %v1135 = vadd.f32 %v1133, %v1134
  %v1138 = vcombine.low %v1129, %v1135
  %v1140 = vunpack.c.l.s4 1966171168
  %v1141 = vunpack.c.0.s8 %v1140
  %v1142 = vlaneseq
  %v1143 = vshrl.u32 %v1142, 7
  %v1144 = vsub.s32 %v1141, %v1143
  %v1145 = vrot.slane %v1138, %v1144
  %v1147 = vunpack.c.l.s4 1966171168
  %v1148 = vunpack.c.0.s8 %v1147
  %v1149 = vlaneseq
  %v1150 = vshrl.u32 %v1149, 7
  %v1151 = vsub.s32 %v1148, %v1150
  %v1152 = vrot.slane %v1145, %v1151
  %1154 = vst.msk [vmem:[%s6] sm:$0x3] %vm1120, %v1152
  // Predicated region
  $region22: #{local_embedding_forward.4} parent=0 // pred_check
    _
  $region23: #{local_embedding_forward.4} parent=0 // pred_check_branch
    %1156 = sbr.rel (0) target = $region25
  $region24: #{local_embedding_forward.4} parent=0 // pred_region
    _
  $region25: #{local_embedding_forward.4} parent=0 // pred_fallthru
    _
  // Predicated region
  $region26: #{local_embedding_forward.4} parent=0 // pred_check
    _
  $region27: #{local_embedding_forward.4} parent=0 // pred_check_branch
    %1158 = sbr.rel (0) target = $region29
  $region28: #{local_embedding_forward.4} parent=0 // pred_region
    _
  $region29: #{local_embedding_forward.4} parent=0 // pred_fallthru
    _
  // Predicated region
  $region30: #{local_embedding_forward.4} parent=0 // pred_check
    _
  $region31: #{local_embedding_forward.4} parent=0 // pred_check_branch
    %1160 = sbr.rel (0) target = $region33
  $region32: #{local_embedding_forward.4} parent=0 // pred_region
    _
  $region33: #{local_embedding_forward.4} parent=0 // pred_fallthru
    _
  // Predicated region
  $region34: #{local_embedding_forward.4} parent=0 // pred_check
    _
  $region35: #{local_embedding_forward.4} parent=0 // pred_check_branch
    %1162 = sbr.rel (0) target = $region37
  $region36: #{local_embedding_forward.4} parent=0 // pred_region
    _
  $region37: #{local_embedding_forward.4} parent=0 // pred_fallthru
    _

// kernel: local_embedding_forward.5
$region0: #{local_embedding_forward.5}
  #allocation0 [shape = 'u32[]', space=smem, size = 0x4, offset = 0x4, fixed_abs, tag = 'smem constant byte address 0x4 - core index']
  #allocation1 [shape = 'u32[144,128]{1,0:T(1,128)}', space=vmem, size = 0x12000, scoped, tag = 'internal scratch']
  %s0 = inlined_call_operand.vmem [shape: f32[8,128], index: 0, kind: input, shape index: {}]
  %s1 = inlined_call_operand.vmem [shape: f32[128,1024], index: 1, kind: input, shape index: {}]
  %s2 = inlined_call_operand.vmem [shape: f32[1,1024], index: 2, kind: input, shape index: {}]
  %s3 = inlined_call_operand.vmem [shape: f32[1,1024], index: 3, kind: input, shape index: {}]
  %s4 = inlined_call_operand.vmem [shape: f32[1024,256], index: 4, kind: input, shape index: {}]
  %s5 = inlined_call_operand.vmem [shape: f32[1,256], index: 5, kind: input, shape index: {}]
  %s6 = inlined_call_operand.vmem [shape: f32[1,256], index: 6, kind: input, shape index: {}]
  %s7 = inlined_call_operand.vmem [shape: f32[8,256], index: 7, kind: output, shape index: {}]
  %s8 = sld [smem:[#allocation0]]
  $region38: #{local_embedding_forward.5} parent=0
    _
  %s10 = ssub.s32 1, %s8
  %s11 = scalar_select 0, %s10, %s8
  // Predicated region
  $region2: #{local_embedding_forward.5} parent=0 // pred_check
    _
  $region3: #{local_embedding_forward.5} parent=0 // pred_check_branch
    %13 = sbr.rel (0) target = $region5
  $region4: #{local_embedding_forward.5} parent=0 // pred_region
    _
  $region5: #{local_embedding_forward.5} parent=0 // pred_fallthru
    _
  // Predicated region
  $region6: #{local_embedding_forward.5} parent=0 // pred_check
    _
  $region7: #{local_embedding_forward.5} parent=0 // pred_check_branch
    %15 = sbr.rel (0) target = $region9
  $region8: #{local_embedding_forward.5} parent=0 // pred_region
    _
  $region9: #{local_embedding_forward.5} parent=0 // pred_fallthru
    _
  // Predicated region
  $region10: #{local_embedding_forward.5} parent=0 // pred_check
    _
  $region11: #{local_embedding_forward.5} parent=0 // pred_check_branch
    %17 = sbr.rel (0) target = $region13
  $region12: #{local_embedding_forward.5} parent=0 // pred_region
    _
  $region13: #{local_embedding_forward.5} parent=0 // pred_fallthru
    _
  // Predicated region
  $region14: #{local_embedding_forward.5} parent=0 // pred_check
    _
  $region15: #{local_embedding_forward.5} parent=0 // pred_check_branch
    %19 = sbr.rel (0) target = $region17
  $region16: #{local_embedding_forward.5} parent=0 // pred_region
    _
  $region17: #{local_embedding_forward.5} parent=0 // pred_fallthru
    _
  // Predicated region
  $region18: #{local_embedding_forward.5} parent=0 // pred_check
    _
  $region19: #{local_embedding_forward.5} parent=0 // pred_check_branch
    %21 = sbr.rel (0) target = $region21
  $region20: #{local_embedding_forward.5} parent=0 // pred_region
    _
  $region21: #{local_embedding_forward.5} parent=0 // pred_fallthru
    _
  // Predicated region
  $region22: #{local_embedding_forward.5} parent=0 // pred_check
    _
  $region23: #{local_embedding_forward.5} parent=0 // pred_check_branch
    %23 = sbr.rel (0) target = $region25
  $region24: #{local_embedding_forward.5} parent=0 // pred_region
    _
  $region25: #{local_embedding_forward.5} parent=0 // pred_fallthru
    _
  // Predicated region
  $region26: #{local_embedding_forward.5} parent=0 // pred_check
    _
  $region27: #{local_embedding_forward.5} parent=0 // pred_check_branch
    %25 = sbr.rel (0) target = $region29
  $region28: #{local_embedding_forward.5} parent=0 // pred_region
    _
  $region29: #{local_embedding_forward.5} parent=0 // pred_fallthru
    _
  %v26 = vld [vmem:[%s0] sm:$0xff]
  %v27 = vld [vmem:[%s1] sm:$0xff]
  %v28 = vld [vmem:[%s1 + $0x8] sm:$0xff]
  %v29 = vld [vmem:[%s1 + $0x10] sm:$0xff]
  %v30 = vld [vmem:[%s1 + $0x18] sm:$0xff]
  %v31 = vld [vmem:[%s1 + $0x20] sm:$0xff]
  %v32 = vld [vmem:[%s1 + $0x28] sm:$0xff]
  %v33 = vld [vmem:[%s1 + $0x30] sm:$0xff]
  %v34 = vld [vmem:[%s1 + $0x38] sm:$0xff]
  %v35 = vld [vmem:[%s1 + $0x40] sm:$0xff]
  %v36 = vld [vmem:[%s1 + $0x48] sm:$0xff]
  %v37 = vld [vmem:[%s1 + $0x50] sm:$0xff]
  %v38 = vld [vmem:[%s1 + $0x58] sm:$0xff]
  %v39 = vld [vmem:[%s1 + $0x60] sm:$0xff]
  %v40 = vld [vmem:[%s1 + $0x68] sm:$0xff]
  %v41 = vld [vmem:[%s1 + $0x70] sm:$0xff]
  %v42 = vld [vmem:[%s1 + $0x78] sm:$0xff]
  %v43 = vld [vmem:[%s1 + $0x80] sm:$0xff]
  %v44 = vld [vmem:[%s1 + $0x88] sm:$0xff]
  %v45 = vld [vmem:[%s1 + $0x90] sm:$0xff]
  %v46 = vld [vmem:[%s1 + $0x98] sm:$0xff]
  %v47 = vld [vmem:[%s1 + $0xa0] sm:$0xff]
  %v48 = vld [vmem:[%s1 + $0xa8] sm:$0xff]
  %v49 = vld [vmem:[%s1 + $0xb0] sm:$0xff]
  %v50 = vld [vmem:[%s1 + $0xb8] sm:$0xff]
  %v51 = vld [vmem:[%s1 + $0xc0] sm:$0xff]
  %v52 = vld [vmem:[%s1 + $0xc8] sm:$0xff]
  %v53 = vld [vmem:[%s1 + $0xd0] sm:$0xff]
  %v54 = vld [vmem:[%s1 + $0xd8] sm:$0xff]
  %v55 = vld [vmem:[%s1 + $0xe0] sm:$0xff]
  %v56 = vld [vmem:[%s1 + $0xe8] sm:$0xff]
  %v57 = vld [vmem:[%s1 + $0xf0] sm:$0xff]
  %v58 = vld [vmem:[%s1 + $0xf8] sm:$0xff]
  %v59 = vld [vmem:[%s1 + $0x100] sm:$0xff]
  %v60 = vld [vmem:[%s1 + $0x108] sm:$0xff]
  %v61 = vld [vmem:[%s1 + $0x110] sm:$0xff]
  %v62 = vld [vmem:[%s1 + $0x118] sm:$0xff]
  %v63 = vld [vmem:[%s1 + $0x120] sm:$0xff]
  %v64 = vld [vmem:[%s1 + $0x128] sm:$0xff]
  %v65 = vld [vmem:[%s1 + $0x130] sm:$0xff]
  %v66 = vld [vmem:[%s1 + $0x138] sm:$0xff]
  %v67 = vld [vmem:[%s1 + $0x140] sm:$0xff]
  %v68 = vld [vmem:[%s1 + $0x148] sm:$0xff]
  %v69 = vld [vmem:[%s1 + $0x150] sm:$0xff]
  %v70 = vld [vmem:[%s1 + $0x158] sm:$0xff]
  %v71 = vld [vmem:[%s1 + $0x160] sm:$0xff]
  %v72 = vld [vmem:[%s1 + $0x168] sm:$0xff]
  %v73 = vld [vmem:[%s1 + $0x170] sm:$0xff]
  %v74 = vld [vmem:[%s1 + $0x178] sm:$0xff]
  %v75 = vld [vmem:[%s1 + $0x180] sm:$0xff]
  %v76 = vld [vmem:[%s1 + $0x188] sm:$0xff]
  %v77 = vld [vmem:[%s1 + $0x190] sm:$0xff]
  %v78 = vld [vmem:[%s1 + $0x198] sm:$0xff]
  %v79 = vld [vmem:[%s1 + $0x1a0] sm:$0xff]
  %v80 = vld [vmem:[%s1 + $0x1a8] sm:$0xff]
  %v81 = vld [vmem:[%s1 + $0x1b0] sm:$0xff]
  %v82 = vld [vmem:[%s1 + $0x1b8] sm:$0xff]
  %v83 = vld [vmem:[%s1 + $0x1c0] sm:$0xff]
  %v84 = vld [vmem:[%s1 + $0x1c8] sm:$0xff]
  %v85 = vld [vmem:[%s1 + $0x1d0] sm:$0xff]
  %v86 = vld [vmem:[%s1 + $0x1d8] sm:$0xff]
  %v87 = vld [vmem:[%s1 + $0x1e0] sm:$0xff]
  %v88 = vld [vmem:[%s1 + $0x1e8] sm:$0xff]
  %v89 = vld [vmem:[%s1 + $0x1f0] sm:$0xff]
  %v90 = vld [vmem:[%s1 + $0x1f8] sm:$0xff]
  %v91 = vld [vmem:[%s1 + $0x200] sm:$0xff]
  %v92 = vld [vmem:[%s1 + $0x208] sm:$0xff]
  %v93 = vld [vmem:[%s1 + $0x210] sm:$0xff]
  %v94 = vld [vmem:[%s1 + $0x218] sm:$0xff]
  %v95 = vld [vmem:[%s1 + $0x220] sm:$0xff]
  %v96 = vld [vmem:[%s1 + $0x228] sm:$0xff]
  %v97 = vld [vmem:[%s1 + $0x230] sm:$0xff]
  %v98 = vld [vmem:[%s1 + $0x238] sm:$0xff]
  %v99 = vld [vmem:[%s1 + $0x240] sm:$0xff]
  %v100 = vld [vmem:[%s1 + $0x248] sm:$0xff]
  %v101 = vld [vmem:[%s1 + $0x250] sm:$0xff]
  %v102 = vld [vmem:[%s1 + $0x258] sm:$0xff]
  %v103 = vld [vmem:[%s1 + $0x260] sm:$0xff]
  %v104 = vld [vmem:[%s1 + $0x268] sm:$0xff]
  %v105 = vld [vmem:[%s1 + $0x270] sm:$0xff]
  %v106 = vld [vmem:[%s1 + $0x278] sm:$0xff]
  %v107 = vld [vmem:[%s1 + $0x280] sm:$0xff]
  %v108 = vld [vmem:[%s1 + $0x288] sm:$0xff]
  %v109 = vld [vmem:[%s1 + $0x290] sm:$0xff]
  %v110 = vld [vmem:[%s1 + $0x298] sm:$0xff]
  %v111 = vld [vmem:[%s1 + $0x2a0] sm:$0xff]
  %v112 = vld [vmem:[%s1 + $0x2a8] sm:$0xff]
  %v113 = vld [vmem:[%s1 + $0x2b0] sm:$0xff]
  %v114 = vld [vmem:[%s1 + $0x2b8] sm:$0xff]
  %v115 = vld [vmem:[%s1 + $0x2c0] sm:$0xff]
  %v116 = vld [vmem:[%s1 + $0x2c8] sm:$0xff]
  %v117 = vld [vmem:[%s1 + $0x2d0] sm:$0xff]
  %v118 = vld [vmem:[%s1 + $0x2d8] sm:$0xff]
  %v119 = vld [vmem:[%s1 + $0x2e0] sm:$0xff]
  %v120 = vld [vmem:[%s1 + $0x2e8] sm:$0xff]
  %v121 = vld [vmem:[%s1 + $0x2f0] sm:$0xff]
  %v122 = vld [vmem:[%s1 + $0x2f8] sm:$0xff]
  %v123 = vld [vmem:[%s1 + $0x300] sm:$0xff]
  %v124 = vld [vmem:[%s1 + $0x308] sm:$0xff]
  %v125 = vld [vmem:[%s1 + $0x310] sm:$0xff]
  %v126 = vld [vmem:[%s1 + $0x318] sm:$0xff]
  %v127 = vld [vmem:[%s1 + $0x320] sm:$0xff]
  %v128 = vld [vmem:[%s1 + $0x328] sm:$0xff]
  %v129 = vld [vmem:[%s1 + $0x330] sm:$0xff]
  %v130 = vld [vmem:[%s1 + $0x338] sm:$0xff]
  %v131 = vld [vmem:[%s1 + $0x340] sm:$0xff]
  %v132 = vld [vmem:[%s1 + $0x348] sm:$0xff]
  %v133 = vld [vmem:[%s1 + $0x350] sm:$0xff]
  %v134 = vld [vmem:[%s1 + $0x358] sm:$0xff]
  %v135 = vld [vmem:[%s1 + $0x360] sm:$0xff]
  %v136 = vld [vmem:[%s1 + $0x368] sm:$0xff]
  %v137 = vld [vmem:[%s1 + $0x370] sm:$0xff]
  %v138 = vld [vmem:[%s1 + $0x378] sm:$0xff]
  %v139 = vld [vmem:[%s1 + $0x380] sm:$0xff]
  %v140 = vld [vmem:[%s1 + $0x388] sm:$0xff]
  %v141 = vld [vmem:[%s1 + $0x390] sm:$0xff]
  %v142 = vld [vmem:[%s1 + $0x398] sm:$0xff]
  %v143 = vld [vmem:[%s1 + $0x3a0] sm:$0xff]
  %v144 = vld [vmem:[%s1 + $0x3a8] sm:$0xff]
  %v145 = vld [vmem:[%s1 + $0x3b0] sm:$0xff]
  %v146 = vld [vmem:[%s1 + $0x3b8] sm:$0xff]
  %v147 = vld [vmem:[%s1 + $0x3c0] sm:$0xff]
  %v148 = vld [vmem:[%s1 + $0x3c8] sm:$0xff]
  %v149 = vld [vmem:[%s1 + $0x3d0] sm:$0xff]
  %v150 = vld [vmem:[%s1 + $0x3d8] sm:$0xff]
  %v151 = vld [vmem:[%s1 + $0x3e0] sm:$0xff]
  %v152 = vld [vmem:[%s1 + $0x3e8] sm:$0xff]
  %v153 = vld [vmem:[%s1 + $0x3f0] sm:$0xff]
  %v154 = vld [vmem:[%s1 + $0x3f8] sm:$0xff]
  %155 = vmatprep.subr.mxu0 %v148
  %156 = vmatpush1.msra.mxu0 %v147
  %157 = vmatprep.subr.mxu0 %v140
  %158 = vmatpush1.msra.mxu0 %v139
  %159 = vmatprep.subr.mxu0 %v132
  %160 = vmatpush1.msra.mxu0 %v131
  %161 = vmatprep.subr.mxu0 %v124
  %162 = vmatpush1.msra.mxu0 %v123
  %163 = vmatprep.subr.mxu0 %v116
  %164 = vmatpush1.msra.mxu0 %v115
  %165 = vmatprep.subr.mxu0 %v108
  %166 = vmatpush1.msra.mxu0 %v107
  %167 = vmatprep.subr.mxu0 %v100
  %168 = vmatpush1.msra.mxu0 %v99
  %169 = vmatprep.subr.mxu0 %v92
  %170 = vmatpush1.msra.mxu0 %v91
  %171 = vmatprep.subr.mxu0 %v84
  %172 = vmatpush1.msra.mxu0 %v83
  %173 = vmatprep.subr.mxu0 %v76
  %174 = vmatpush1.msra.mxu0 %v75
  %175 = vmatprep.subr.mxu0 %v68
  %176 = vmatpush1.msra.mxu0 %v67
  %177 = vmatprep.subr.mxu0 %v60
  %178 = vmatpush1.msra.mxu0 %v59
  %179 = vmatprep.subr.mxu0 %v52
  %180 = vmatpush1.msra.mxu0 %v51
  %181 = vmatprep.subr.mxu0 %v44
  %182 = vmatpush1.msra.mxu0 %v43
  %183 = vmatprep.subr.mxu0 %v36
  %184 = vmatpush1.msra.mxu0 %v35
  %185 = vmatprep.subr.mxu0 %v28
  %186 = vmatpush1.msra.mxu0 %v27
  %187 = vmatprep.subr.mxu0 0.0
  %188 = vmatpush2.msra.mxu0 0.0
  %189 = vmatprep.subr.mxu0 0.0
  %190 = vmatpush2.msra.mxu0 0.0
  %191 = vmatprep.subr.mxu0 0.0
  %192 = vmatpush2.msra.mxu0 0.0
  %193 = vmatprep.subr.mxu0 0.0
  %194 = vmatpush2.msra.mxu0 0.0
  %195 = vmatprep.subr.mxu0 0.0
  %196 = vmatpush2.msra.mxu0 0.0
  %197 = vmatprep.subr.mxu0 0.0
  %198 = vmatpush2.msra.mxu0 0.0
  %199 = vmatprep.subr.mxu0 0.0
  %200 = vmatpush2.msra.mxu0 0.0
  %201 = vmatprep.subr.mxu0 0.0
  %202 = vmatpush2.msra.mxu0 0.0
  %203 = vmatprep.subr.mxu0 0.0
  %204 = vmatpush2.msra.mxu0 0.0
  %205 = vmatprep.subr.mxu0 0.0
  %206 = vmatpush2.msra.mxu0 0.0
  %207 = vmatprep.subr.mxu0 0.0
  %208 = vmatpush2.msra.mxu0 0.0
  %209 = vmatprep.subr.mxu0 0.0
  %210 = vmatpush2.msra.mxu0 0.0
  %211 = vmatprep.subr.mxu0 0.0
  %212 = vmatpush2.msra.mxu0 0.0
  %213 = vmatprep.subr.mxu0 0.0
  %214 = vmatpush2.msra.mxu0 0.0
  %215 = vmatprep.subr.mxu0 0.0
  %216 = vmatpush2.msra.mxu0 0.0
  %217 = vmatprep.subr.mxu0 0.0
  %218 = vmatpush2.msra.mxu0 0.0
  %219 = vmatprep.mubr.f32.mxu0 0.0
  %220 = vmatmul.mubr.f32.gmra.mxu0 %v26
  %v221 = vpop.f32.mrf.mxu0
  %v222 = vadd.f32 0.0, %v221
  %v223 = vpop.f32.mrf.mxu0
  %v224 = vadd.f32 0.0, %v223
  %225 = vdwg.mxu0
  %226 = vmatprep.subr.mxu0 %v150
  %227 = vmatpush1.msra.mxu0 %v149
  %228 = vmatprep.subr.mxu0 %v142
  %229 = vmatpush1.msra.mxu0 %v141
  %230 = vmatprep.subr.mxu0 %v134
  %231 = vmatpush1.msra.mxu0 %v133
  %232 = vmatprep.subr.mxu0 %v126
  %233 = vmatpush1.msra.mxu0 %v125
  %234 = vmatprep.subr.mxu0 %v118
  %235 = vmatpush1.msra.mxu0 %v117
  %236 = vmatprep.subr.mxu0 %v110
  %237 = vmatpush1.msra.mxu0 %v109
  %238 = vmatprep.subr.mxu0 %v102
  %239 = vmatpush1.msra.mxu0 %v101
  %240 = vmatprep.subr.mxu0 %v94
  %241 = vmatpush1.msra.mxu0 %v93
  %242 = vmatprep.subr.mxu0 %v86
  %243 = vmatpush1.msra.mxu0 %v85
  %244 = vmatprep.subr.mxu0 %v78
  %245 = vmatpush1.msra.mxu0 %v77
  %246 = vmatprep.subr.mxu0 %v70
  %247 = vmatpush1.msra.mxu0 %v69
  %248 = vmatprep.subr.mxu0 %v62
  %249 = vmatpush1.msra.mxu0 %v61
  %250 = vmatprep.subr.mxu0 %v54
  %251 = vmatpush1.msra.mxu0 %v53
  %252 = vmatprep.subr.mxu0 %v46
  %253 = vmatpush1.msra.mxu0 %v45
  %254 = vmatprep.subr.mxu0 %v38
  %255 = vmatpush1.msra.mxu0 %v37
  %256 = vmatprep.subr.mxu0 %v30
  %257 = vmatpush1.msra.mxu0 %v29
  %258 = vmatprep.subr.mxu0 0.0
  %259 = vmatpush2.msra.mxu0 0.0
  %260 = vmatprep.subr.mxu0 0.0
  %261 = vmatpush2.msra.mxu0 0.0
  %262 = vmatprep.subr.mxu0 0.0
  %263 = vmatpush2.msra.mxu0 0.0
  %264 = vmatprep.subr.mxu0 0.0
  %265 = vmatpush2.msra.mxu0 0.0
  %266 = vmatprep.subr.mxu0 0.0
  %267 = vmatpush2.msra.mxu0 0.0
  %268 = vmatprep.subr.mxu0 0.0
  %269 = vmatpush2.msra.mxu0 0.0
  %270 = vmatprep.subr.mxu0 0.0
  %271 = vmatpush2.msra.mxu0 0.0
  %272 = vmatprep.subr.mxu0 0.0
  %273 = vmatpush2.msra.mxu0 0.0
  %274 = vmatprep.subr.mxu0 0.0
  %275 = vmatpush2.msra.mxu0 0.0
  %276 = vmatprep.subr.mxu0 0.0
  %277 = vmatpush2.msra.mxu0 0.0
  %278 = vmatprep.subr.mxu0 0.0
  %279 = vmatpush2.msra.mxu0 0.0
  %280 = vmatprep.subr.mxu0 0.0
  %281 = vmatpush2.msra.mxu0 0.0
  %282 = vmatprep.subr.mxu0 0.0
  %283 = vmatpush2.msra.mxu0 0.0
  %284 = vmatprep.subr.mxu0 0.0
  %285 = vmatpush2.msra.mxu0 0.0
  %286 = vmatprep.subr.mxu0 0.0
  %287 = vmatpush2.msra.mxu0 0.0
  %288 = vmatprep.subr.mxu0 0.0
  %289 = vmatpush2.msra.mxu0 0.0
  %290 = vmatprep.mubr.f32.mxu0 0.0
  %291 = vmatmul.mubr.f32.gmra.mxu0 %v26
  %v292 = vpop.f32.mrf.mxu0
  %v293 = vadd.f32 0.0, %v292
  %v294 = vpop.f32.mrf.mxu0
  %v295 = vadd.f32 0.0, %v294
  %296 = vdwg.mxu0
  %297 = vmatprep.subr.mxu0 %v152
  %298 = vmatpush1.msra.mxu0 %v151
  %299 = vmatprep.subr.mxu0 %v144
  %300 = vmatpush1.msra.mxu0 %v143
  %301 = vmatprep.subr.mxu0 %v136
  %302 = vmatpush1.msra.mxu0 %v135
  %303 = vmatprep.subr.mxu0 %v128
  %304 = vmatpush1.msra.mxu0 %v127
  %305 = vmatprep.subr.mxu0 %v120
  %306 = vmatpush1.msra.mxu0 %v119
  %307 = vmatprep.subr.mxu0 %v112
  %308 = vmatpush1.msra.mxu0 %v111
  %309 = vmatprep.subr.mxu0 %v104
  %310 = vmatpush1.msra.mxu0 %v103
  %311 = vmatprep.subr.mxu0 %v96
  %312 = vmatpush1.msra.mxu0 %v95
  %313 = vmatprep.subr.mxu0 %v88
  %314 = vmatpush1.msra.mxu0 %v87
  %315 = vmatprep.subr.mxu0 %v80
  %316 = vmatpush1.msra.mxu0 %v79
  %317 = vmatprep.subr.mxu0 %v72
  %318 = vmatpush1.msra.mxu0 %v71
  %319 = vmatprep.subr.mxu0 %v64
  %320 = vmatpush1.msra.mxu0 %v63
  %321 = vmatprep.subr.mxu0 %v56
  %322 = vmatpush1.msra.mxu0 %v55
  %323 = vmatprep.subr.mxu0 %v48
  %324 = vmatpush1.msra.mxu0 %v47
  %325 = vmatprep.subr.mxu0 %v40
  %326 = vmatpush1.msra.mxu0 %v39
  %327 = vmatprep.subr.mxu0 %v32
  %328 = vmatpush1.msra.mxu0 %v31
  %329 = vmatprep.subr.mxu0 0.0
  %330 = vmatpush2.msra.mxu0 0.0
  %331 = vmatprep.subr.mxu0 0.0
  %332 = vmatpush2.msra.mxu0 0.0
  %333 = vmatprep.subr.mxu0 0.0
  %334 = vmatpush2.msra.mxu0 0.0
  %335 = vmatprep.subr.mxu0 0.0
  %336 = vmatpush2.msra.mxu0 0.0
  %337 = vmatprep.subr.mxu0 0.0
  %338 = vmatpush2.msra.mxu0 0.0
  %339 = vmatprep.subr.mxu0 0.0
  %340 = vmatpush2.msra.mxu0 0.0
  %341 = vmatprep.subr.mxu0 0.0
  %342 = vmatpush2.msra.mxu0 0.0
  %343 = vmatprep.subr.mxu0 0.0
  %344 = vmatpush2.msra.mxu0 0.0
  %345 = vmatprep.subr.mxu0 0.0
  %346 = vmatpush2.msra.mxu0 0.0
  %347 = vmatprep.subr.mxu0 0.0
  %348 = vmatpush2.msra.mxu0 0.0
  %349 = vmatprep.subr.mxu0 0.0
  %350 = vmatpush2.msra.mxu0 0.0
  %351 = vmatprep.subr.mxu0 0.0
  %352 = vmatpush2.msra.mxu0 0.0
  %353 = vmatprep.subr.mxu0 0.0
  %354 = vmatpush2.msra.mxu0 0.0
  %355 = vmatprep.subr.mxu0 0.0
  %356 = vmatpush2.msra.mxu0 0.0
  %357 = vmatprep.subr.mxu0 0.0
  %358 = vmatpush2.msra.mxu0 0.0
  %359 = vmatprep.subr.mxu0 0.0
  %360 = vmatpush2.msra.mxu0 0.0
  %361 = vmatprep.mubr.f32.mxu0 0.0
  %362 = vmatmul.mubr.f32.gmra.mxu0 %v26
  %v363 = vpop.f32.mrf.mxu0
  %v364 = vadd.f32 0.0, %v363
  %v365 = vpop.f32.mrf.mxu0
  %v366 = vadd.f32 0.0, %v365
  %367 = vdwg.mxu0
  %368 = vmatprep.subr.mxu0 %v154
  %369 = vmatpush1.msra.mxu0 %v153
  %370 = vmatprep.subr.mxu0 %v146
  %371 = vmatpush1.msra.mxu0 %v145
  %372 = vmatprep.subr.mxu0 %v138
  %373 = vmatpush1.msra.mxu0 %v137
  %374 = vmatprep.subr.mxu0 %v130
  %375 = vmatpush1.msra.mxu0 %v129
  %376 = vmatprep.subr.mxu0 %v122
  %377 = vmatpush1.msra.mxu0 %v121
  %378 = vmatprep.subr.mxu0 %v114
  %379 = vmatpush1.msra.mxu0 %v113
  %380 = vmatprep.subr.mxu0 %v106
  %381 = vmatpush1.msra.mxu0 %v105
  %382 = vmatprep.subr.mxu0 %v98
  %383 = vmatpush1.msra.mxu0 %v97
  %384 = vmatprep.subr.mxu0 %v90
  %385 = vmatpush1.msra.mxu0 %v89
  %386 = vmatprep.subr.mxu0 %v82
  %387 = vmatpush1.msra.mxu0 %v81
  %388 = vmatprep.subr.mxu0 %v74
  %389 = vmatpush1.msra.mxu0 %v73
  %390 = vmatprep.subr.mxu0 %v66
  %391 = vmatpush1.msra.mxu0 %v65
  %392 = vmatprep.subr.mxu0 %v58
  %393 = vmatpush1.msra.mxu0 %v57
  %394 = vmatprep.subr.mxu0 %v50
  %395 = vmatpush1.msra.mxu0 %v49
  %396 = vmatprep.subr.mxu0 %v42
  %397 = vmatpush1.msra.mxu0 %v41
  %398 = vmatprep.subr.mxu0 %v34
  %399 = vmatpush1.msra.mxu0 %v33
  %400 = vmatprep.subr.mxu0 0.0
  %401 = vmatpush2.msra.mxu0 0.0
  %402 = vmatprep.subr.mxu0 0.0
  %403 = vmatpush2.msra.mxu0 0.0
  %404 = vmatprep.subr.mxu0 0.0
  %405 = vmatpush2.msra.mxu0 0.0
  %406 = vmatprep.subr.mxu0 0.0
  %407 = vmatpush2.msra.mxu0 0.0
  %408 = vmatprep.subr.mxu0 0.0
  %409 = vmatpush2.msra.mxu0 0.0
  %410 = vmatprep.subr.mxu0 0.0
  %411 = vmatpush2.msra.mxu0 0.0
  %412 = vmatprep.subr.mxu0 0.0
  %413 = vmatpush2.msra.mxu0 0.0
  %414 = vmatprep.subr.mxu0 0.0
  %415 = vmatpush2.msra.mxu0 0.0
  %416 = vmatprep.subr.mxu0 0.0
  %417 = vmatpush2.msra.mxu0 0.0
  %418 = vmatprep.subr.mxu0 0.0
  %419 = vmatpush2.msra.mxu0 0.0
  %420 = vmatprep.subr.mxu0 0.0
  %421 = vmatpush2.msra.mxu0 0.0
  %422 = vmatprep.subr.mxu0 0.0
  %423 = vmatpush2.msra.mxu0 0.0
  %424 = vmatprep.subr.mxu0 0.0
  %425 = vmatpush2.msra.mxu0 0.0
  %426 = vmatprep.subr.mxu0 0.0
  %427 = vmatpush2.msra.mxu0 0.0
  %428 = vmatprep.subr.mxu0 0.0
  %429 = vmatpush2.msra.mxu0 0.0
  %430 = vmatprep.subr.mxu0 0.0
  %431 = vmatpush2.msra.mxu0 0.0
  %432 = vmatprep.mubr.f32.mxu0 0.0
  %433 = vmatmul.mubr.f32.gmra.mxu0 %v26
  %v434 = vpop.f32.mrf.mxu0
  %v435 = vadd.f32 0.0, %v434
  %v436 = vpop.f32.mrf.mxu0
  %v437 = vadd.f32 0.0, %v436
  %438 = vdwg.mxu0
  %v439 = vld [vmem:[%s2] sm:$0xff]
  %v440 = vld [vmem:[%s3] sm:$0xff]
  %v441 = vld [vmem:[%s4] sm:$0xff]
  %v442 = vld [vmem:[%s4 + $0x8] sm:$0xff]
  %v443 = vld [vmem:[%s4 + $0x10] sm:$0xff]
  %v444 = vld [vmem:[%s4 + $0x18] sm:$0xff]
  %v445 = vld [vmem:[%s4 + $0x20] sm:$0xff]
  %v446 = vld [vmem:[%s4 + $0x28] sm:$0xff]
  %v447 = vld [vmem:[%s4 + $0x30] sm:$0xff]
  %v448 = vld [vmem:[%s4 + $0x38] sm:$0xff]
  %v449 = vld [vmem:[%s4 + $0x40] sm:$0xff]
  %v450 = vld [vmem:[%s4 + $0x48] sm:$0xff]
  %v451 = vld [vmem:[%s4 + $0x50] sm:$0xff]
  %v452 = vld [vmem:[%s4 + $0x58] sm:$0xff]
  %v453 = vld [vmem:[%s4 + $0x60] sm:$0xff]
  %v454 = vld [vmem:[%s4 + $0x68] sm:$0xff]
  %v455 = vld [vmem:[%s4 + $0x70] sm:$0xff]
  %v456 = vld [vmem:[%s4 + $0x78] sm:$0xff]
  %v457 = vld [vmem:[%s4 + $0x80] sm:$0xff]
  %v458 = vld [vmem:[%s4 + $0x88] sm:$0xff]
  %v459 = vld [vmem:[%s4 + $0x90] sm:$0xff]
  %v460 = vld [vmem:[%s4 + $0x98] sm:$0xff]
  %v461 = vld [vmem:[%s4 + $0xa0] sm:$0xff]
  %v462 = vld [vmem:[%s4 + $0xa8] sm:$0xff]
  %v463 = vld [vmem:[%s4 + $0xb0] sm:$0xff]
  %v464 = vld [vmem:[%s4 + $0xb8] sm:$0xff]
  %v465 = vld [vmem:[%s4 + $0xc0] sm:$0xff]
  %v466 = vld [vmem:[%s4 + $0xc8] sm:$0xff]
  %v467 = vld [vmem:[%s4 + $0xd0] sm:$0xff]
  %v468 = vld [vmem:[%s4 + $0xd8] sm:$0xff]
  %v469 = vld [vmem:[%s4 + $0xe0] sm:$0xff]
  %v470 = vld [vmem:[%s4 + $0xe8] sm:$0xff]
  %v471 = vld [vmem:[%s4 + $0xf0] sm:$0xff]
  %v472 = vld [vmem:[%s4 + $0xf8] sm:$0xff]
  %v473 = vld [vmem:[%s4 + $0x100] sm:$0xff]
  %v474 = vld [vmem:[%s4 + $0x108] sm:$0xff]
  %v475 = vld [vmem:[%s4 + $0x110] sm:$0xff]
  %v476 = vld [vmem:[%s4 + $0x118] sm:$0xff]
  %v477 = vld [vmem:[%s4 + $0x120] sm:$0xff]
  %v478 = vld [vmem:[%s4 + $0x128] sm:$0xff]
  %v479 = vld [vmem:[%s4 + $0x130] sm:$0xff]
  %v480 = vld [vmem:[%s4 + $0x138] sm:$0xff]
  %v481 = vld [vmem:[%s4 + $0x140] sm:$0xff]
  %v482 = vld [vmem:[%s4 + $0x148] sm:$0xff]
  %v483 = vld [vmem:[%s4 + $0x150] sm:$0xff]
  %v484 = vld [vmem:[%s4 + $0x158] sm:$0xff]
  %v485 = vld [vmem:[%s4 + $0x160] sm:$0xff]
  %v486 = vld [vmem:[%s4 + $0x168] sm:$0xff]
  %v487 = vld [vmem:[%s4 + $0x170] sm:$0xff]
  %v488 = vld [vmem:[%s4 + $0x178] sm:$0xff]
  %v489 = vld [vmem:[%s4 + $0x180] sm:$0xff]
  %v490 = vld [vmem:[%s4 + $0x188] sm:$0xff]
  %v491 = vld [vmem:[%s4 + $0x190] sm:$0xff]
  %v492 = vld [vmem:[%s4 + $0x198] sm:$0xff]
  %v493 = vld [vmem:[%s4 + $0x1a0] sm:$0xff]
  %v494 = vld [vmem:[%s4 + $0x1a8] sm:$0xff]
  %v495 = vld [vmem:[%s4 + $0x1b0] sm:$0xff]
  %v496 = vld [vmem:[%s4 + $0x1b8] sm:$0xff]
  %v497 = vld [vmem:[%s4 + $0x1c0] sm:$0xff]
  %v498 = vld [vmem:[%s4 + $0x1c8] sm:$0xff]
  %v499 = vld [vmem:[%s4 + $0x1d0] sm:$0xff]
  %v500 = vld [vmem:[%s4 + $0x1d8] sm:$0xff]
  %v501 = vld [vmem:[%s4 + $0x1e0] sm:$0xff]
  %v502 = vld [vmem:[%s4 + $0x1e8] sm:$0xff]
  %v503 = vld [vmem:[%s4 + $0x1f0] sm:$0xff]
  %v504 = vld [vmem:[%s4 + $0x1f8] sm:$0xff]
  %v505 = vld [vmem:[%s4 + $0x200] sm:$0xff]
  %v506 = vld [vmem:[%s4 + $0x208] sm:$0xff]
  %v507 = vld [vmem:[%s4 + $0x210] sm:$0xff]
  %v508 = vld [vmem:[%s4 + $0x218] sm:$0xff]
  %v509 = vld [vmem:[%s4 + $0x220] sm:$0xff]
  %v510 = vld [vmem:[%s4 + $0x228] sm:$0xff]
  %v511 = vld [vmem:[%s4 + $0x230] sm:$0xff]
  %v512 = vld [vmem:[%s4 + $0x238] sm:$0xff]
  %v513 = vld [vmem:[%s4 + $0x240] sm:$0xff]
  %v514 = vld [vmem:[%s4 + $0x248] sm:$0xff]
  %v515 = vld [vmem:[%s4 + $0x250] sm:$0xff]
  %v516 = vld [vmem:[%s4 + $0x258] sm:$0xff]
  %v517 = vld [vmem:[%s4 + $0x260] sm:$0xff]
  %v518 = vld [vmem:[%s4 + $0x268] sm:$0xff]
  %v519 = vld [vmem:[%s4 + $0x270] sm:$0xff]
  %v520 = vld [vmem:[%s4 + $0x278] sm:$0xff]
  %v521 = vld [vmem:[%s4 + $0x280] sm:$0xff]
  %v522 = vld [vmem:[%s4 + $0x288] sm:$0xff]
  %v523 = vld [vmem:[%s4 + $0x290] sm:$0xff]
  %v524 = vld [vmem:[%s4 + $0x298] sm:$0xff]
  %v525 = vld [vmem:[%s4 + $0x2a0] sm:$0xff]
  %v526 = vld [vmem:[%s4 + $0x2a8] sm:$0xff]
  %v527 = vld [vmem:[%s4 + $0x2b0] sm:$0xff]
  %v528 = vld [vmem:[%s4 + $0x2b8] sm:$0xff]
  %v529 = vld [vmem:[%s4 + $0x2c0] sm:$0xff]
  %v530 = vld [vmem:[%s4 + $0x2c8] sm:$0xff]
  %v531 = vld [vmem:[%s4 + $0x2d0] sm:$0xff]
  %v532 = vld [vmem:[%s4 + $0x2d8] sm:$0xff]
  %v533 = vld [vmem:[%s4 + $0x2e0] sm:$0xff]
  %v534 = vld [vmem:[%s4 + $0x2e8] sm:$0xff]
  %v535 = vld [vmem:[%s4 + $0x2f0] sm:$0xff]
  %v536 = vld [vmem:[%s4 + $0x2f8] sm:$0xff]
  %v537 = vld [vmem:[%s4 + $0x300] sm:$0xff]
  %v538 = vld [vmem:[%s4 + $0x308] sm:$0xff]
  %v539 = vld [vmem:[%s4 + $0x310] sm:$0xff]
  %v540 = vld [vmem:[%s4 + $0x318] sm:$0xff]
  %v541 = vld [vmem:[%s4 + $0x320] sm:$0xff]
  %v542 = vld [vmem:[%s4 + $0x328] sm:$0xff]
  %v543 = vld [vmem:[%s4 + $0x330] sm:$0xff]
  %v544 = vld [vmem:[%s4 + $0x338] sm:$0xff]
  %v545 = vld [vmem:[%s4 + $0x340] sm:$0xff]
  %v546 = vld [vmem:[%s4 + $0x348] sm:$0xff]
  %v547 = vld [vmem:[%s4 + $0x350] sm:$0xff]
  %v548 = vld [vmem:[%s4 + $0x358] sm:$0xff]
  %v549 = vld [vmem:[%s4 + $0x360] sm:$0xff]
  %v550 = vld [vmem:[%s4 + $0x368] sm:$0xff]
  %v551 = vld [vmem:[%s4 + $0x370] sm:$0xff]
  %v552 = vld [vmem:[%s4 + $0x378] sm:$0xff]
  %v553 = vld [vmem:[%s4 + $0x380] sm:$0xff]
  %v554 = vld [vmem:[%s4 + $0x388] sm:$0xff]
  %v555 = vld [vmem:[%s4 + $0x390] sm:$0xff]
  %v556 = vld [vmem:[%s4 + $0x398] sm:$0xff]
  %v557 = vld [vmem:[%s4 + $0x3a0] sm:$0xff]
  %v558 = vld [vmem:[%s4 + $0x3a8] sm:$0xff]
  %v559 = vld [vmem:[%s4 + $0x3b0] sm:$0xff]
  %v560 = vld [vmem:[%s4 + $0x3b8] sm:$0xff]
  %v561 = vld [vmem:[%s4 + $0x3c0] sm:$0xff]
  %v562 = vld [vmem:[%s4 + $0x3c8] sm:$0xff]
  %v563 = vld [vmem:[%s4 + $0x3d0] sm:$0xff]
  %v564 = vld [vmem:[%s4 + $0x3d8] sm:$0xff]
  %v565 = vld [vmem:[%s4 + $0x3e0] sm:$0xff]
  %v566 = vld [vmem:[%s4 + $0x3e8] sm:$0xff]
  %v567 = vld [vmem:[%s4 + $0x3f0] sm:$0xff]
  %v568 = vld [vmem:[%s4 + $0x3f8] sm:$0xff]
  %v569 = vld [vmem:[%s4 + $0x400] sm:$0xff]
  %v570 = vld [vmem:[%s4 + $0x408] sm:$0xff]
  %v571 = vld [vmem:[%s4 + $0x410] sm:$0xff]
  %v572 = vld [vmem:[%s4 + $0x418] sm:$0xff]
  %v573 = vld [vmem:[%s4 + $0x420] sm:$0xff]
  %v574 = vld [vmem:[%s4 + $0x428] sm:$0xff]
  %v575 = vld [vmem:[%s4 + $0x430] sm:$0xff]
  %v576 = vld [vmem:[%s4 + $0x438] sm:$0xff]
  %v577 = vld [vmem:[%s4 + $0x440] sm:$0xff]
  %v578 = vld [vmem:[%s4 + $0x448] sm:$0xff]
  %v579 = vld [vmem:[%s4 + $0x450] sm:$0xff]
  %v580 = vld [vmem:[%s4 + $0x458] sm:$0xff]
  %v581 = vld [vmem:[%s4 + $0x460] sm:$0xff]
  %v582 = vld [vmem:[%s4 + $0x468] sm:$0xff]
  %v583 = vld [vmem:[%s4 + $0x470] sm:$0xff]
  %v584 = vld [vmem:[%s4 + $0x478] sm:$0xff]
  %v585 = vld [vmem:[%s4 + $0x480] sm:$0xff]
  %v586 = vld [vmem:[%s4 + $0x488] sm:$0xff]
  %v587 = vld [vmem:[%s4 + $0x490] sm:$0xff]
  %v588 = vld [vmem:[%s4 + $0x498] sm:$0xff]
  %v589 = vld [vmem:[%s4 + $0x4a0] sm:$0xff]
  %v590 = vld [vmem:[%s4 + $0x4a8] sm:$0xff]
  %v591 = vld [vmem:[%s4 + $0x4b0] sm:$0xff]
  %v592 = vld [vmem:[%s4 + $0x4b8] sm:$0xff]
  %v593 = vld [vmem:[%s4 + $0x4c0] sm:$0xff]
  %v594 = vld [vmem:[%s4 + $0x4c8] sm:$0xff]
  %v595 = vld [vmem:[%s4 + $0x4d0] sm:$0xff]
  %v596 = vld [vmem:[%s4 + $0x4d8] sm:$0xff]
  %v597 = vld [vmem:[%s4 + $0x4e0] sm:$0xff]
  %v598 = vld [vmem:[%s4 + $0x4e8] sm:$0xff]
  %v599 = vld [vmem:[%s4 + $0x4f0] sm:$0xff]
  %v600 = vld [vmem:[%s4 + $0x4f8] sm:$0xff]
  %v601 = vld [vmem:[%s4 + $0x500] sm:$0xff]
  %v602 = vld [vmem:[%s4 + $0x508] sm:$0xff]
  %v603 = vld [vmem:[%s4 + $0x510] sm:$0xff]
  %v604 = vld [vmem:[%s4 + $0x518] sm:$0xff]
  %v605 = vld [vmem:[%s4 + $0x520] sm:$0xff]
  %v606 = vld [vmem:[%s4 + $0x528] sm:$0xff]
  %v607 = vld [vmem:[%s4 + $0x530] sm:$0xff]
  %v608 = vld [vmem:[%s4 + $0x538] sm:$0xff]
  %v609 = vld [vmem:[%s4 + $0x540] sm:$0xff]
  %v610 = vld [vmem:[%s4 + $0x548] sm:$0xff]
  %v611 = vld [vmem:[%s4 + $0x550] sm:$0xff]
  %v612 = vld [vmem:[%s4 + $0x558] sm:$0xff]
  %v613 = vld [vmem:[%s4 + $0x560] sm:$0xff]
  %v614 = vld [vmem:[%s4 + $0x568] sm:$0xff]
  %v615 = vld [vmem:[%s4 + $0x570] sm:$0xff]
  %v616 = vld [vmem:[%s4 + $0x578] sm:$0xff]
  %v617 = vld [vmem:[%s4 + $0x580] sm:$0xff]
  %v618 = vld [vmem:[%s4 + $0x588] sm:$0xff]
  %v619 = vld [vmem:[%s4 + $0x590] sm:$0xff]
  %v620 = vld [vmem:[%s4 + $0x598] sm:$0xff]
  %v621 = vld [vmem:[%s4 + $0x5a0] sm:$0xff]
  %v622 = vld [vmem:[%s4 + $0x5a8] sm:$0xff]
  %v623 = vld [vmem:[%s4 + $0x5b0] sm:$0xff]
  %v624 = vld [vmem:[%s4 + $0x5b8] sm:$0xff]
  %v625 = vld [vmem:[%s4 + $0x5c0] sm:$0xff]
  %v626 = vld [vmem:[%s4 + $0x5c8] sm:$0xff]
  %v627 = vld [vmem:[%s4 + $0x5d0] sm:$0xff]
  %v628 = vld [vmem:[%s4 + $0x5d8] sm:$0xff]
  %v629 = vld [vmem:[%s4 + $0x5e0] sm:$0xff]
  %v630 = vld [vmem:[%s4 + $0x5e8] sm:$0xff]
  %v631 = vld [vmem:[%s4 + $0x5f0] sm:$0xff]
  %v632 = vld [vmem:[%s4 + $0x5f8] sm:$0xff]
  %v633 = vld [vmem:[%s4 + $0x600] sm:$0xff]
  %v634 = vld [vmem:[%s4 + $0x608] sm:$0xff]
  %v635 = vld [vmem:[%s4 + $0x610] sm:$0xff]
  %v636 = vld [vmem:[%s4 + $0x618] sm:$0xff]
  %v637 = vld [vmem:[%s4 + $0x620] sm:$0xff]
  %v638 = vld [vmem:[%s4 + $0x628] sm:$0xff]
  %v639 = vld [vmem:[%s4 + $0x630] sm:$0xff]
  %v640 = vld [vmem:[%s4 + $0x638] sm:$0xff]
  %v641 = vld [vmem:[%s4 + $0x640] sm:$0xff]
  %v642 = vld [vmem:[%s4 + $0x648] sm:$0xff]
  %v643 = vld [vmem:[%s4 + $0x650] sm:$0xff]
  %v644 = vld [vmem:[%s4 + $0x658] sm:$0xff]
  %v645 = vld [vmem:[%s4 + $0x660] sm:$0xff]
  %v646 = vld [vmem:[%s4 + $0x668] sm:$0xff]
  %v647 = vld [vmem:[%s4 + $0x670] sm:$0xff]
  %v648 = vld [vmem:[%s4 + $0x678] sm:$0xff]
  %v649 = vld [vmem:[%s4 + $0x680] sm:$0xff]
  %v650 = vld [vmem:[%s4 + $0x688] sm:$0xff]
  %v651 = vld [vmem:[%s4 + $0x690] sm:$0xff]
  %v652 = vld [vmem:[%s4 + $0x698] sm:$0xff]
  %v653 = vld [vmem:[%s4 + $0x6a0] sm:$0xff]
  %v654 = vld [vmem:[%s4 + $0x6a8] sm:$0xff]
  %v655 = vld [vmem:[%s4 + $0x6b0] sm:$0xff]
  %v656 = vld [vmem:[%s4 + $0x6b8] sm:$0xff]
  %v657 = vld [vmem:[%s4 + $0x6c0] sm:$0xff]
  %v658 = vld [vmem:[%s4 + $0x6c8] sm:$0xff]
  %v659 = vld [vmem:[%s4 + $0x6d0] sm:$0xff]
  %v660 = vld [vmem:[%s4 + $0x6d8] sm:$0xff]
  %v661 = vld [vmem:[%s4 + $0x6e0] sm:$0xff]
  %v662 = vld [vmem:[%s4 + $0x6e8] sm:$0xff]
  %v663 = vld [vmem:[%s4 + $0x6f0] sm:$0xff]
  %v664 = vld [vmem:[%s4 + $0x6f8] sm:$0xff]
  %v665 = vld [vmem:[%s4 + $0x700] sm:$0xff]
  %v666 = vld [vmem:[%s4 + $0x708] sm:$0xff]
  %v667 = vld [vmem:[%s4 + $0x710] sm:$0xff]
  %v668 = vld [vmem:[%s4 + $0x718] sm:$0xff]
  %v669 = vld [vmem:[%s4 + $0x720] sm:$0xff]
  %v670 = vld [vmem:[%s4 + $0x728] sm:$0xff]
  %v671 = vld [vmem:[%s4 + $0x730] sm:$0xff]
  %v672 = vld [vmem:[%s4 + $0x738] sm:$0xff]
  %v673 = vld [vmem:[%s4 + $0x740] sm:$0xff]
  %v674 = vld [vmem:[%s4 + $0x748] sm:$0xff]
  %v675 = vld [vmem:[%s4 + $0x750] sm:$0xff]
  %v676 = vld [vmem:[%s4 + $0x758] sm:$0xff]
  %v677 = vld [vmem:[%s4 + $0x760] sm:$0xff]
  %v678 = vld [vmem:[%s4 + $0x768] sm:$0xff]
  %v679 = vld [vmem:[%s4 + $0x770] sm:$0xff]
  %v680 = vld [vmem:[%s4 + $0x778] sm:$0xff]
  %v681 = vld [vmem:[%s4 + $0x780] sm:$0xff]
  %v682 = vld [vmem:[%s4 + $0x788] sm:$0xff]
  %v683 = vld [vmem:[%s4 + $0x790] sm:$0xff]
  %v684 = vld [vmem:[%s4 + $0x798] sm:$0xff]
  %v685 = vld [vmem:[%s4 + $0x7a0] sm:$0xff]
  %v686 = vld [vmem:[%s4 + $0x7a8] sm:$0xff]
  %v687 = vld [vmem:[%s4 + $0x7b0] sm:$0xff]
  %v688 = vld [vmem:[%s4 + $0x7b8] sm:$0xff]
  %v689 = vld [vmem:[%s4 + $0x7c0] sm:$0xff]
  %v690 = vld [vmem:[%s4 + $0x7c8] sm:$0xff]
  %v691 = vld [vmem:[%s4 + $0x7d0] sm:$0xff]
  %v692 = vld [vmem:[%s4 + $0x7d8] sm:$0xff]
  %v693 = vld [vmem:[%s4 + $0x7e0] sm:$0xff]
  %v694 = vld [vmem:[%s4 + $0x7e8] sm:$0xff]
  %v695 = vld [vmem:[%s4 + $0x7f0] sm:$0xff]
  %v696 = vld [vmem:[%s4 + $0x7f8] sm:$0xff]
  %v698 = vlaneseq
  %v699 = vshrl.u32 %v698, 7
  %v700 = vsub.s32 0, %v699
  %v701 = vrot.slane %v439, %v700
  %v702 = vlaneseq
  %v703 = vshrl.u32 %v702, 7
  %v704 = vsub.s32 1, %v703
  %v705 = vrot.slane %v439, %v704
  %v706 = vlaneseq
  %v707 = vshrl.u32 %v706, 7
  %v708 = vsub.s32 2, %v707
  %v709 = vrot.slane %v439, %v708
  %v710 = vlaneseq
  %v711 = vshrl.u32 %v710, 7
  %v712 = vsub.s32 3, %v711
  %v713 = vrot.slane %v439, %v712
  %v714 = vlaneseq
  %v715 = vshrl.u32 %v714, 7
  %v716 = vsub.s32 4, %v715
  %v717 = vrot.slane %v439, %v716
  %v718 = vlaneseq
  %v719 = vshrl.u32 %v718, 7
  %v720 = vsub.s32 5, %v719
  %v721 = vrot.slane %v439, %v720
  %v722 = vlaneseq
  %v723 = vshrl.u32 %v722, 7
  %v724 = vsub.s32 6, %v723
  %v725 = vrot.slane %v439, %v724
  %v726 = vlaneseq
  %v727 = vshrl.u32 %v726, 7
  %v728 = vsub.s32 7, %v727
  %v729 = vrot.slane %v439, %v728
  %v738 = vmul.f32 %v222, %v701
  %v739 = vmul.f32 %v224, %v705
  %v740 = vmul.f32 %v293, %v709
  %v741 = vmul.f32 %v295, %v713
  %v742 = vmul.f32 %v364, %v717
  %v743 = vmul.f32 %v366, %v721
  %v744 = vmul.f32 %v435, %v725
  %v745 = vmul.f32 %v437, %v729
  %v747 = vlaneseq
  %v748 = vshrl.u32 %v747, 7
  %v749 = vsub.s32 0, %v748
  %v750 = vrot.slane %v440, %v749
  %v751 = vlaneseq
  %v752 = vshrl.u32 %v751, 7
  %v753 = vsub.s32 1, %v752
  %v754 = vrot.slane %v440, %v753
  %v755 = vlaneseq
  %v756 = vshrl.u32 %v755, 7
  %v757 = vsub.s32 2, %v756
  %v758 = vrot.slane %v440, %v757
  %v759 = vlaneseq
  %v760 = vshrl.u32 %v759, 7
  %v761 = vsub.s32 3, %v760
  %v762 = vrot.slane %v440, %v761
  %v763 = vlaneseq
  %v764 = vshrl.u32 %v763, 7
  %v765 = vsub.s32 4, %v764
  %v766 = vrot.slane %v440, %v765
  %v767 = vlaneseq
  %v768 = vshrl.u32 %v767, 7
  %v769 = vsub.s32 5, %v768
  %v770 = vrot.slane %v440, %v769
  %v771 = vlaneseq
  %v772 = vshrl.u32 %v771, 7
  %v773 = vsub.s32 6, %v772
  %v774 = vrot.slane %v440, %v773
  %v775 = vlaneseq
  %v776 = vshrl.u32 %v775, 7
  %v777 = vsub.s32 7, %v776
  %v778 = vrot.slane %v440, %v777
  %v787 = vadd.f32 %v738, %v750
  %v788 = vadd.f32 %v739, %v754
  %v789 = vadd.f32 %v740, %v758
  %v790 = vadd.f32 %v741, %v762
  %v791 = vadd.f32 %v742, %v766
  %v792 = vadd.f32 %v743, %v770
  %v793 = vadd.f32 %v744, %v774
  %v794 = vadd.f32 %v745, %v778
  %v795 = vmax.f32 %v787, 0.0
  %v796 = vmax.f32 %v788, 0.0
  %v797 = vmax.f32 %v789, 0.0
  %v798 = vmax.f32 %v790, 0.0
  %v799 = vmax.f32 %v791, 0.0
  %v800 = vmax.f32 %v792, 0.0
  %v801 = vmax.f32 %v793, 0.0
  %v802 = vmax.f32 %v794, 0.0
  %803 = vmatprep.subr.mxu0 %v472
  %804 = vmatpush1.msra.mxu0 %v471
  %805 = vmatprep.subr.mxu0 %v470
  %806 = vmatpush1.msra.mxu0 %v469
  %807 = vmatprep.subr.mxu0 %v468
  %808 = vmatpush1.msra.mxu0 %v467
  %809 = vmatprep.subr.mxu0 %v466
  %810 = vmatpush1.msra.mxu0 %v465
  %811 = vmatprep.subr.mxu0 %v464
  %812 = vmatpush1.msra.mxu0 %v463
  %813 = vmatprep.subr.mxu0 %v462
  %814 = vmatpush1.msra.mxu0 %v461
  %815 = vmatprep.subr.mxu0 %v460
  %816 = vmatpush1.msra.mxu0 %v459
  %817 = vmatprep.subr.mxu0 %v458
  %818 = vmatpush1.msra.mxu0 %v457
  %819 = vmatprep.subr.mxu0 %v456
  %820 = vmatpush1.msra.mxu0 %v455
  %821 = vmatprep.subr.mxu0 %v454
  %822 = vmatpush1.msra.mxu0 %v453
  %823 = vmatprep.subr.mxu0 %v452
  %824 = vmatpush1.msra.mxu0 %v451
  %825 = vmatprep.subr.mxu0 %v450
  %826 = vmatpush1.msra.mxu0 %v449
  %827 = vmatprep.subr.mxu0 %v448
  %828 = vmatpush1.msra.mxu0 %v447
  %829 = vmatprep.subr.mxu0 %v446
  %830 = vmatpush1.msra.mxu0 %v445
  %831 = vmatprep.subr.mxu0 %v444
  %832 = vmatpush1.msra.mxu0 %v443
  %833 = vmatprep.subr.mxu0 %v442
  %834 = vmatpush1.msra.mxu0 %v441
  %835 = vmatprep.subr.mxu0 %v504
  %836 = vmatpush2.msra.mxu0 %v503
  %837 = vmatprep.subr.mxu0 %v502
  %838 = vmatpush2.msra.mxu0 %v501
  %839 = vmatprep.subr.mxu0 %v500
  %840 = vmatpush2.msra.mxu0 %v499
  %841 = vmatprep.subr.mxu0 %v498
  %842 = vmatpush2.msra.mxu0 %v497
  %843 = vmatprep.subr.mxu0 %v496
  %844 = vmatpush2.msra.mxu0 %v495
  %845 = vmatprep.subr.mxu0 %v494
  %846 = vmatpush2.msra.mxu0 %v493
  %847 = vmatprep.subr.mxu0 %v492
  %848 = vmatpush2.msra.mxu0 %v491
  %849 = vmatprep.subr.mxu0 %v490
  %850 = vmatpush2.msra.mxu0 %v489
  %851 = vmatprep.subr.mxu0 %v488
  %852 = vmatpush2.msra.mxu0 %v487
  %853 = vmatprep.subr.mxu0 %v486
  %854 = vmatpush2.msra.mxu0 %v485
  %855 = vmatprep.subr.mxu0 %v484
  %856 = vmatpush2.msra.mxu0 %v483
  %857 = vmatprep.subr.mxu0 %v482
  %858 = vmatpush2.msra.mxu0 %v481
  %859 = vmatprep.subr.mxu0 %v480
  %860 = vmatpush2.msra.mxu0 %v479
  %861 = vmatprep.subr.mxu0 %v478
  %862 = vmatpush2.msra.mxu0 %v477
  %863 = vmatprep.subr.mxu0 %v476
  %864 = vmatpush2.msra.mxu0 %v475
  %865 = vmatprep.subr.mxu0 %v474
  %866 = vmatpush2.msra.mxu0 %v473
  %867 = vmatprep.mubr.f32.mxu0 %v796
  %868 = vmatmul.mubr.f32.gmra.mxu0 %v795
  %v869 = vpop.f32.mrf.mxu0
  %v870 = vadd.f32 0.0, %v869
  %v871 = vpop.f32.mrf.mxu0
  %v872 = vadd.f32 0.0, %v871
  %873 = vdwg.mxu0
  %874 = vmatprep.subr.mxu0 %v536
  %875 = vmatpush1.msra.mxu0 %v535
  %876 = vmatprep.subr.mxu0 %v534
  %877 = vmatpush1.msra.mxu0 %v533
  %878 = vmatprep.subr.mxu0 %v532
  %879 = vmatpush1.msra.mxu0 %v531
  %880 = vmatprep.subr.mxu0 %v530
  %881 = vmatpush1.msra.mxu0 %v529
  %882 = vmatprep.subr.mxu0 %v528
  %883 = vmatpush1.msra.mxu0 %v527
  %884 = vmatprep.subr.mxu0 %v526
  %885 = vmatpush1.msra.mxu0 %v525
  %886 = vmatprep.subr.mxu0 %v524
  %887 = vmatpush1.msra.mxu0 %v523
  %888 = vmatprep.subr.mxu0 %v522
  %889 = vmatpush1.msra.mxu0 %v521
  %890 = vmatprep.subr.mxu0 %v520
  %891 = vmatpush1.msra.mxu0 %v519
  %892 = vmatprep.subr.mxu0 %v518
  %893 = vmatpush1.msra.mxu0 %v517
  %894 = vmatprep.subr.mxu0 %v516
  %895 = vmatpush1.msra.mxu0 %v515
  %896 = vmatprep.subr.mxu0 %v514
  %897 = vmatpush1.msra.mxu0 %v513
  %898 = vmatprep.subr.mxu0 %v512
  %899 = vmatpush1.msra.mxu0 %v511
  %900 = vmatprep.subr.mxu0 %v510
  %901 = vmatpush1.msra.mxu0 %v509
  %902 = vmatprep.subr.mxu0 %v508
  %903 = vmatpush1.msra.mxu0 %v507
  %904 = vmatprep.subr.mxu0 %v506
  %905 = vmatpush1.msra.mxu0 %v505
  %906 = vmatprep.subr.mxu0 %v568
  %907 = vmatpush2.msra.mxu0 %v567
  %908 = vmatprep.subr.mxu0 %v566
  %909 = vmatpush2.msra.mxu0 %v565
  %910 = vmatprep.subr.mxu0 %v564
  %911 = vmatpush2.msra.mxu0 %v563
  %912 = vmatprep.subr.mxu0 %v562
  %913 = vmatpush2.msra.mxu0 %v561
  %914 = vmatprep.subr.mxu0 %v560
  %915 = vmatpush2.msra.mxu0 %v559
  %916 = vmatprep.subr.mxu0 %v558
  %917 = vmatpush2.msra.mxu0 %v557
  %918 = vmatprep.subr.mxu0 %v556
  %919 = vmatpush2.msra.mxu0 %v555
  %920 = vmatprep.subr.mxu0 %v554
  %921 = vmatpush2.msra.mxu0 %v553
  %922 = vmatprep.subr.mxu0 %v552
  %923 = vmatpush2.msra.mxu0 %v551
  %924 = vmatprep.subr.mxu0 %v550
  %925 = vmatpush2.msra.mxu0 %v549
  %926 = vmatprep.subr.mxu0 %v548
  %927 = vmatpush2.msra.mxu0 %v547
  %928 = vmatprep.subr.mxu0 %v546
  %929 = vmatpush2.msra.mxu0 %v545
  %930 = vmatprep.subr.mxu0 %v544
  %931 = vmatpush2.msra.mxu0 %v543
  %932 = vmatprep.subr.mxu0 %v542
  %933 = vmatpush2.msra.mxu0 %v541
  %934 = vmatprep.subr.mxu0 %v540
  %935 = vmatpush2.msra.mxu0 %v539
  %936 = vmatprep.subr.mxu0 %v538
  %937 = vmatpush2.msra.mxu0 %v537
  %938 = vmatprep.mubr.f32.mxu0 %v798
  %939 = vmatmul.mubr.f32.gmra.mxu0 %v797
  %v940 = vpop.f32.mrf.mxu0
  %v941 = vadd.f32 %v870, %v940
  %v942 = vpop.f32.mrf.mxu0
  %v943 = vadd.f32 %v872, %v942
  %944 = vdwg.mxu0
  %945 = vmatprep.subr.mxu0 %v600
  %946 = vmatpush1.msra.mxu0 %v599
  %947 = vmatprep.subr.mxu0 %v598
  %948 = vmatpush1.msra.mxu0 %v597
  %949 = vmatprep.subr.mxu0 %v596
  %950 = vmatpush1.msra.mxu0 %v595
  %951 = vmatprep.subr.mxu0 %v594
  %952 = vmatpush1.msra.mxu0 %v593
  %953 = vmatprep.subr.mxu0 %v592
  %954 = vmatpush1.msra.mxu0 %v591
  %955 = vmatprep.subr.mxu0 %v590
  %956 = vmatpush1.msra.mxu0 %v589
  %957 = vmatprep.subr.mxu0 %v588
  %958 = vmatpush1.msra.mxu0 %v587
  %959 = vmatprep.subr.mxu0 %v586
  %960 = vmatpush1.msra.mxu0 %v585
  %961 = vmatprep.subr.mxu0 %v584
  %962 = vmatpush1.msra.mxu0 %v583
  %963 = vmatprep.subr.mxu0 %v582
  %964 = vmatpush1.msra.mxu0 %v581
  %965 = vmatprep.subr.mxu0 %v580
  %966 = vmatpush1.msra.mxu0 %v579
  %967 = vmatprep.subr.mxu0 %v578
  %968 = vmatpush1.msra.mxu0 %v577
  %969 = vmatprep.subr.mxu0 %v576
  %970 = vmatpush1.msra.mxu0 %v575
  %971 = vmatprep.subr.mxu0 %v574
  %972 = vmatpush1.msra.mxu0 %v573
  %973 = vmatprep.subr.mxu0 %v572
  %974 = vmatpush1.msra.mxu0 %v571
  %975 = vmatprep.subr.mxu0 %v570
  %976 = vmatpush1.msra.mxu0 %v569
  %977 = vmatprep.subr.mxu0 %v632
  %978 = vmatpush2.msra.mxu0 %v631
  %979 = vmatprep.subr.mxu0 %v630
  %980 = vmatpush2.msra.mxu0 %v629
  %981 = vmatprep.subr.mxu0 %v628
  %982 = vmatpush2.msra.mxu0 %v627
  %983 = vmatprep.subr.mxu0 %v626
  %984 = vmatpush2.msra.mxu0 %v625
  %985 = vmatprep.subr.mxu0 %v624
  %986 = vmatpush2.msra.mxu0 %v623
  %987 = vmatprep.subr.mxu0 %v622
  %988 = vmatpush2.msra.mxu0 %v621
  %989 = vmatprep.subr.mxu0 %v620
  %990 = vmatpush2.msra.mxu0 %v619
  %991 = vmatprep.subr.mxu0 %v618
  %992 = vmatpush2.msra.mxu0 %v617
  %993 = vmatprep.subr.mxu0 %v616
  %994 = vmatpush2.msra.mxu0 %v615
  %995 = vmatprep.subr.mxu0 %v614
  %996 = vmatpush2.msra.mxu0 %v613
  %997 = vmatprep.subr.mxu0 %v612
  %998 = vmatpush2.msra.mxu0 %v611
  %999 = vmatprep.subr.mxu0 %v610
  %1000 = vmatpush2.msra.mxu0 %v609
  %1001 = vmatprep.subr.mxu0 %v608
  %1002 = vmatpush2.msra.mxu0 %v607
  %1003 = vmatprep.subr.mxu0 %v606
  %1004 = vmatpush2.msra.mxu0 %v605
  %1005 = vmatprep.subr.mxu0 %v604
  %1006 = vmatpush2.msra.mxu0 %v603
  %1007 = vmatprep.subr.mxu0 %v602
  %1008 = vmatpush2.msra.mxu0 %v601
  %1009 = vmatprep.mubr.f32.mxu0 %v800
  %1010 = vmatmul.mubr.f32.gmra.mxu0 %v799
  %v1011 = vpop.f32.mrf.mxu0
  %v1012 = vadd.f32 %v941, %v1011
  %v1013 = vpop.f32.mrf.mxu0
  %v1014 = vadd.f32 %v943, %v1013
  %1015 = vdwg.mxu0
  %1016 = vmatprep.subr.mxu0 %v664
  %1017 = vmatpush1.msra.mxu0 %v663
  %1018 = vmatprep.subr.mxu0 %v662
  %1019 = vmatpush1.msra.mxu0 %v661
  %1020 = vmatprep.subr.mxu0 %v660
  %1021 = vmatpush1.msra.mxu0 %v659
  %1022 = vmatprep.subr.mxu0 %v658
  %1023 = vmatpush1.msra.mxu0 %v657
  %1024 = vmatprep.subr.mxu0 %v656
  %1025 = vmatpush1.msra.mxu0 %v655
  %1026 = vmatprep.subr.mxu0 %v654
  %1027 = vmatpush1.msra.mxu0 %v653
  %1028 = vmatprep.subr.mxu0 %v652
  %1029 = vmatpush1.msra.mxu0 %v651
  %1030 = vmatprep.subr.mxu0 %v650
  %1031 = vmatpush1.msra.mxu0 %v649
  %1032 = vmatprep.subr.mxu0 %v648
  %1033 = vmatpush1.msra.mxu0 %v647
  %1034 = vmatprep.subr.mxu0 %v646
  %1035 = vmatpush1.msra.mxu0 %v645
  %1036 = vmatprep.subr.mxu0 %v644
  %1037 = vmatpush1.msra.mxu0 %v643
  %1038 = vmatprep.subr.mxu0 %v642
  %1039 = vmatpush1.msra.mxu0 %v641
  %1040 = vmatprep.subr.mxu0 %v640
  %1041 = vmatpush1.msra.mxu0 %v639
  %1042 = vmatprep.subr.mxu0 %v638
  %1043 = vmatpush1.msra.mxu0 %v637
  %1044 = vmatprep.subr.mxu0 %v636
  %1045 = vmatpush1.msra.mxu0 %v635
  %1046 = vmatprep.subr.mxu0 %v634
  %1047 = vmatpush1.msra.mxu0 %v633
  %1048 = vmatprep.subr.mxu0 %v696
  %1049 = vmatpush2.msra.mxu0 %v695
  %1050 = vmatprep.subr.mxu0 %v694
  %1051 = vmatpush2.msra.mxu0 %v693
  %1052 = vmatprep.subr.mxu0 %v692
  %1053 = vmatpush2.msra.mxu0 %v691
  %1054 = vmatprep.subr.mxu0 %v690
  %1055 = vmatpush2.msra.mxu0 %v689
  %1056 = vmatprep.subr.mxu0 %v688
  %1057 = vmatpush2.msra.mxu0 %v687
  %1058 = vmatprep.subr.mxu0 %v686
  %1059 = vmatpush2.msra.mxu0 %v685
  %1060 = vmatprep.subr.mxu0 %v684
  %1061 = vmatpush2.msra.mxu0 %v683
  %1062 = vmatprep.subr.mxu0 %v682
  %1063 = vmatpush2.msra.mxu0 %v681
  %1064 = vmatprep.subr.mxu0 %v680
  %1065 = vmatpush2.msra.mxu0 %v679
  %1066 = vmatprep.subr.mxu0 %v678
  %1067 = vmatpush2.msra.mxu0 %v677
  %1068 = vmatprep.subr.mxu0 %v676
  %1069 = vmatpush2.msra.mxu0 %v675
  %1070 = vmatprep.subr.mxu0 %v674
  %1071 = vmatpush2.msra.mxu0 %v673
  %1072 = vmatprep.subr.mxu0 %v672
  %1073 = vmatpush2.msra.mxu0 %v671
  %1074 = vmatprep.subr.mxu0 %v670
  %1075 = vmatpush2.msra.mxu0 %v669
  %1076 = vmatprep.subr.mxu0 %v668
  %1077 = vmatpush2.msra.mxu0 %v667
  %1078 = vmatprep.subr.mxu0 %v666
  %1079 = vmatpush2.msra.mxu0 %v665
  %1080 = vmatprep.mubr.f32.mxu0 %v802
  %1081 = vmatmul.mubr.f32.gmra.mxu0 %v801
  %v1082 = vpop.f32.mrf.mxu0
  %v1083 = vadd.f32 %v1012, %v1082
  %v1084 = vpop.f32.mrf.mxu0
  %v1085 = vadd.f32 %v1014, %v1084
  %1086 = vdwg.mxu0
  %v1087 = vld [vmem:[%s5] sm:$0x3]
  %v1089 = vlaneseq
  %v1090 = vshrl.u32 %v1089, 7
  %v1091 = vsub.s32 0, %v1090
  %v1092 = vrot.slane %v1087, %v1091
  %v1093 = vlaneseq
  %v1094 = vshrl.u32 %v1093, 7
  %v1095 = vsub.s32 1, %v1094
  %v1096 = vrot.slane %v1087, %v1095
  %v1099 = vmul.f32 %v1083, %v1092
  %v1100 = vmul.f32 %v1085, %v1096
  %v1101 = vld [vmem:[%s6] sm:$0x3]
  %v1103 = vlaneseq
  %v1104 = vshrl.u32 %v1103, 7
  %v1105 = vsub.s32 0, %v1104
  %v1106 = vrot.slane %v1101, %v1105
  %v1107 = vlaneseq
  %v1108 = vshrl.u32 %v1107, 7
  %v1109 = vsub.s32 1, %v1108
  %v1110 = vrot.slane %v1101, %v1109
  %v1113 = vadd.f32 %v1099, %v1106
  %v1114 = vadd.f32 %v1100, %v1110
  %1115 = vst [vmem:[%s7] sm:$0xff] %v1113
  %1116 = vst [vmem:[%s7 + $0x8] sm:$0xff] %v1114
  // Predicated region
  $region30: #{local_embedding_forward.5} parent=0 // pred_check
    _
  $region31: #{local_embedding_forward.5} parent=0 // pred_check_branch
    %1118 = sbr.rel (0) target = $region33
  $region32: #{local_embedding_forward.5} parent=0 // pred_region
    _
  $region33: #{local_embedding_forward.5} parent=0 // pred_fallthru
    _
  // Predicated region
  $region34: #{local_embedding_forward.5} parent=0 // pred_check
    _
  $region35: #{local_embedding_forward.5} parent=0 // pred_check_branch
    %1120 = sbr.rel (0) target = $region37
  $region36: #{local_embedding_forward.5} parent=0 // pred_region
    _
  $region37: #{local_embedding_forward.5} parent=0 // pred_fallthru
    _

</llo_original>
